<compile_context>
chip_gen: v7x
topology: tpu7x:2x2x1
jax: 0.10.0
libtpu: 0.0.40
codegen_flags: <defaults>
</compile_context>

<pallas_src>
import numpy as np
import jax
import jax.numpy as jnp
from jax import lax
from jax.experimental import pallas as pl
from jax.experimental.pallas import tpu as pltpu

# ---- static module config (matches ProsodyExtractor(n_mel_channels, d_model, kernel_size)) ----
N_MEL = 16       # n_mel_channels
D_MODEL = 8      # d_model
KSIZE = 3        # kernel_size (odd)
BN_EPS = 1e-5
SBLK = 128       # segments per grid step (tuning knob; multiple of 8, 64-256 recommended)


# ----------------------------------- kernel -----------------------------------
def prosody_kernel(blkmax_ref,                               # SMEM scalar prefetch: [NB] int32
                   seg_ref, lens_ref,                        # [1,Tmax*Sblk,M] f32, [1,Sblk,2D] i32
                   w1_ref, b1_ref, w2_ref, b2_ref,           # conv im2col (BN folded)
                   wx_ref, bx_ref, wh_ref, bh_ref,           # GRU (both dirs, gate-interleaved)
                   out_ref,                                  # [1, Sblk, 2D]
                   gx_ref, gxm_ref):                         # VMEM scratch [Tmax*Sblk, 6D] x2
    _, sblk, h2 = out_ref.shape
    d = h2 // 2
    ts = gx_ref.shape[0]
    tmax = ts // sblk
    lmax = blkmax_ref[pl.program_id(0)]                      # max segment length in this block

    # hoisted broadcast masks (JAX does not CSE broadcast_in_dim -> keep out of loops)
    col2 = lax.broadcasted_iota(jnp.int32, (sblk, h2), 1)
    is_fwd_col = col2 < d                                    # forward half of h lives on lanes [:D]
    lane6 = lax.broadcasted_iota(jnp.int32, (sblk, 3 * h2), 1)
    fwd_lane6 = lane6 < d                                    # forward lanes inside each gate pair
    for g in range(1, 3):
        fwd_lane6 = jnp.logical_or(
            fwd_lane6, jnp.logical_and(lane6 >= g * h2, lane6 < g * h2 + d))

    w1 = w1_ref[...]; b1 = b1_ref[...]
    w2 = w2_ref[...]; b2 = b2_ref[...]
    wx = wx_ref[...]; bx = bx_ref[...]
    wh = wh_ref[...]; bh = bh_ref[...]
    lens = lens_ref[0]                                       # [Sblk, 2D] int32 (length on every lane)

    # ---- chunked conv stack + gx projection: skip fully-padded time chunks ----
    # (default MXU precision: single bf16 pass, f32 accumulate -- per perf review)
    chunk_t = 1
    while chunk_t < tmax and (2 * chunk_t) * sblk <= 512:    # ~512 rows per chunk
        chunk_t *= 2
    rows = chunk_t * sblk
    for c in range(tmax // chunk_t):
        @pl.when(c * chunk_t < lmax)
        def _(c=c):
            r0 = c * rows                                    # static offset
            x = seg_ref[0, pl.ds(r0, rows), :]               # [rows, M]
            h1 = jnp.maximum(
                jnp.dot(x, w1, preferred_element_type=jnp.float32) + b1, 0.0)
            x2 = jnp.maximum(
                jnp.dot(h1, w2, preferred_element_type=jnp.float32) + b2, 0.0)
            gx_ref[pl.ds(r0, rows), :] = (
                jnp.dot(x2, wx, preferred_element_type=jnp.float32) + bx)

    # ---- fwd/bwd gx merge hoisted off the recurrent critical path ----
    #   gxm[i] = where(fwd lanes, gx[i], gx[lmax-1-i]),  i in [0, lmax)
    @pl.loop(0, lmax)
    def _(i):
        a0 = pl.multiple_of(i * sblk, sblk)
        b0 = pl.multiple_of((lmax - 1 - i) * sblk, sblk)
        gxm_ref[pl.ds(a0, sblk), :] = jnp.where(
            fwd_lane6, gx_ref[pl.ds(a0, sblk), :], gx_ref[pl.ds(b0, sblk), :])

    # ---- recurrent loop: one aligned load + one small dot + gate math per step ----
    def step(i, h):
        a0 = pl.multiple_of(i * sblk, sblk)
        gx = gxm_ref[pl.ds(a0, sblk), :]                     # [Sblk, 6D]
        # recurrent dot keeps HIGHEST precision: rounding here compounds over timesteps
        gh = jnp.dot(h, wh, precision=lax.Precision.HIGHEST,
                     preferred_element_type=jnp.float32) + bh
        # sigmoid(x) = 0.5*tanh(0.5*x) + 0.5   (single EUP op, no divide)
        r = 0.5 * jnp.tanh(0.5 * (gx[:, :h2] + gh[:, :h2])) + 0.5
        z = 0.5 * jnp.tanh(0.5 * (gx[:, h2:2 * h2] + gh[:, h2:2 * h2])) + 0.5
        n = jnp.tanh(gx[:, 2 * h2:] + r * gh[:, 2 * h2:])
        h_new = (1.0 - z) * n + z * h
        # per-segment, per-direction length masking (padded rows carry garbage -> masked)
        t_here = jnp.where(is_fwd_col, i, lmax - 1 - i)      # [Sblk, 2D]
        return jnp.where(t_here < lens, h_new, h)

    h0 = jnp.zeros((sblk, h2), jnp.float32)
    out_ref[0] = lax.fori_loop(0, lmax, step, h0)            # single [Sblk, 2D] store per block


# ----------------------------- pallas_call wrapper -----------------------------
def run_segments(seg_blocks, lens_rep, blk_max, fp):
    """seg_blocks [NB, Tmax*Sblk, M] f32, lens_rep [NB, Sblk, 2D] i32, blk_max [NB] i32."""
    NB, TS, M = seg_blocks.shape
    _, Sblk, H2 = lens_rep.shape
    D = H2 // 2

    # VMEM budget per grid step: double-buffered seg block + gx/gxm scratch + weights.
    # v7x only has 64 MiB physical VMEM (32 MiB scoped default); v5e/v6e have 128 MiB.
    vmem_need = 2 * TS * M * 4 + 2 * TS * 3 * H2 * 4 + (1 << 20)
    assert vmem_need < (60 << 20), "shrink s_block / Tmax: VMEM budget exceeds v7x capacity"
    vmem_limit = int(max(vmem_need, 32 << 20))

    grid_spec = pltpu.PrefetchScalarGridSpec(
        num_scalar_prefetch=1,
        grid=(NB,),
        in_specs=[
            pl.BlockSpec((1, TS, M), lambda s, bm: (s, 0, 0)),       # segment block
            pl.BlockSpec((1, Sblk, H2), lambda s, bm: (s, 0, 0)),    # per-segment lengths
            pl.BlockSpec((M, M * D), lambda s, bm: (0, 0)),          # conv1 im2col (+BN1)
            pl.BlockSpec((1, M * D), lambda s, bm: (0, 0)),
            pl.BlockSpec((M * D, M), lambda s, bm: (0, 0)),          # conv2 im2col (+BN2 scale)
            pl.BlockSpec((1, M), lambda s, bm: (0, 0)),
            pl.BlockSpec((M, 3 * H2), lambda s, bm: (0, 0)),         # GRU W_ih (both dirs)
            pl.BlockSpec((1, 3 * H2), lambda s, bm: (0, 0)),
            pl.BlockSpec((H2, 3 * H2), lambda s, bm: (0, 0)),        # GRU W_hh (block-diagonal)
            pl.BlockSpec((1, 3 * H2), lambda s, bm: (0, 0)),
        ],
        out_specs=pl.BlockSpec((1, Sblk, H2), lambda s, bm: (s, 0, 0)),
        scratch_shapes=[pltpu.VMEM((TS, 3 * H2), jnp.float32),       # gx  (input projection)
                        pltpu.VMEM((TS, 3 * H2), jnp.float32)],      # gxm (fwd/bwd-merged)
    )
    return pl.pallas_call(
        prosody_kernel,
        out_shape=jax.ShapeDtypeStruct((NB, Sblk, H2), jnp.float32),
        grid_spec=grid_spec,
        compiler_params=pltpu.CompilerParams(
            dimension_semantics=("parallel",),     # independent blocks -> v7x 2-TC sharding
            vmem_limit_bytes=vmem_limit),
    )(blk_max, seg_blocks, lens_rep,
      fp["W1"], fp["b1"], fp["W2"], fp["b2"],
      fp["Wx"], fp["bx"], fp["Wh"], fp["bh"])


# --------------------- parameter folding (host, once per model) ---------------------
def build_folded_params(params):
    w1 = np.asarray(params["w1"], np.float32)                # [K, D]
    w2 = np.asarray(params["w2"], np.float32)                # [D, K]
    scale1 = np.asarray(params["scale1"], np.float32).reshape(-1)
    shift1 = np.asarray(params["shift1"], np.float32).reshape(-1)
    bn2 = np.asarray(params["bn2"], np.float32).reshape(-1)  # [scale, shift]
    wih = np.asarray(params["wih"], np.float32)              # [2, M, 3D]
    whh = np.asarray(params["whh"], np.float32)              # [2, D, 3D]
    bih = np.asarray(params["bih"], np.float32).reshape(2, -1)
    bhh = np.asarray(params["bhh"], np.float32).reshape(2, -1)
    K, D = w1.shape
    M = wih.shape[1]
    pad = (K - 1) // 2
    H2 = 2 * D

    # conv1/conv2 as im2col matmuls with eval-mode BatchNorm folded in
    W1 = np.zeros((M, M * D), np.float32)
    b1 = np.zeros((1, M * D), np.float32)
    W2 = np.zeros((M * D, M), np.float32)
    for m in range(M):
        for k in range(K):
            mp = m + k - pad
            if 0 <= mp < M:
                W1[mp, m * D:(m + 1) * D] = w1[k] * scale1
                W2[mp * D:(mp + 1) * D, m] = w2[:, k] * bn2[0]
        b1[0, m * D:(m + 1) * D] = shift1
    b2 = np.full((1, M), bn2[1], np.float32)

    # GRU weights, both directions, gate-interleaved columns [r_f r_b | z_f z_b | n_f n_b]
    Wx = np.zeros((M, 3 * H2), np.float32)
    bx = np.zeros((1, 3 * H2), np.float32)
    Wh = np.zeros((H2, 3 * H2), np.float32)
    bh = np.zeros((1, 3 * H2), np.float32)
    for g in range(3):
        cf = slice(g * H2, g * H2 + D)
        cb = slice(g * H2 + D, (g + 1) * H2)
        gsl = slice(g * D, (g + 1) * D)
        Wx[:, cf] = wih[0][:, gsl]
        Wx[:, cb] = wih[1][:, gsl]
        bx[0, cf] = bih[0][gsl]
        bx[0, cb] = bih[1][gsl]
        Wh[0:D, cf] = whh[0][:, gsl]
        Wh[D:H2, cb] = whh[1][:, gsl]
        bh[0, cf] = bhh[0][gsl]
        bh[0, cb] = bhh[1][gsl]
    return {k: jnp.asarray(v) for k, v in
            dict(W1=W1, b1=b1, W2=W2, b2=b2, Wx=Wx, bx=bx, Wh=Wh, bh=bh).items()}


# ------------------------------- module forward -------------------------------
def prosody_extractor_forward(mel, mel_len, duration, src_len, params, s_block=SBLK):
    """mel [B, mel_len, M]; returns [B, max(src_len), 2*d_model] (padded with zeros)."""
    mel = jnp.asarray(mel, jnp.float32)
    mel_len = np.asarray(mel_len)
    duration = np.asarray(duration)
    src_len = np.asarray(src_len)
    B, T_mel, M = mel.shape
    D = int(np.asarray(params["w1"]).shape[1])
    H2 = 2 * D
    assert s_block % 8 == 0

    folded = build_folded_params(params)

    # segment metadata (host: tiny integer bookkeeping only -- shapes depend on it,
    # exactly like torch.split; all heavy data movement stays on device below)
    seg_b, seg_j, seg_off, seg_len = [], [], [], []
    for b in range(B):
        off = 0
        for j in range(int(src_len[b])):
            dur = int(duration[b, j])
            seg_b.append(b); seg_j.append(j); seg_off.append(off); seg_len.append(dur)
            off += dur
        assert off == int(mel_len[b]), "durations must sum to mel_len (torch.split contract)"
    S = len(seg_len)
    Sblk = s_block
    S_pad = ((S + Sblk - 1) // Sblk) * Sblk
    NB = S_pad // Sblk                         # for best v7x utilization keep NB >= 2
    # bucket Tmax (>= 8, power of two) to avoid per-batch recompilation
    Tmax = max(8, int(pl.next_power_of_2(max(seg_len + [1]))))

    # length-sort segments (descending) so each block's lmax is tight, then interleave
    # the sorted blocks even/odd so the two megacore halves (v7x) get balanced work.
    order = sorted(range(S), key=lambda s: -seg_len[s])
    blocks = [order[i * Sblk:(i + 1) * Sblk] for i in range(NB)]
    blk_order = list(range(0, NB, 2)) + list(range(1, NB, 2))

    gather = np.zeros((NB, Tmax, Sblk), np.int32)
    valid = np.zeros((NB, Tmax, Sblk, 1), np.float32)
    lens_rep = np.zeros((NB, Sblk, H2), np.int32)
    blk_max = np.zeros((NB,), np.int32)
    seg_slot = np.full((NB, Sblk), -1, np.int64)             # original segment id per slot
    for nb_pos, blk in enumerate(blk_order):
        for sb, s in enumerate(blocks[blk]):
            L = seg_len[s]
            seg_slot[nb_pos, sb] = s
            lens_rep[nb_pos, sb, :] = L
            blk_max[nb_pos] = max(blk_max[nb_pos], L)
            base = seg_b[s] * T_mel + seg_off[s]
            gather[nb_pos, :L, sb] = base + np.arange(L, dtype=np.int32)
            valid[nb_pos, :L, sb, 0] = 1.0

    # device-side segment extraction (gather) + zero padding
    mel_flat = mel.reshape(B * T_mel, M)
    seg_blocks = (jnp.take(mel_flat, jnp.asarray(gather.reshape(-1)), axis=0)
                  .reshape(NB, Tmax, Sblk, M) * jnp.asarray(valid))
    seg_blocks = seg_blocks.reshape(NB, Tmax * Sblk, M)

    emb = run_segments(seg_blocks, jnp.asarray(lens_rep), jnp.asarray(blk_max), folded)
    emb = emb.reshape(NB * Sblk, H2)

    # device-side scatter back to [B, max(src_len), 2D] (undo length-sort permutation)
    slot = seg_slot.reshape(-1)
    keep = np.nonzero(slot >= 0)[0]
    slot_valid = slot[keep]
    max_src = int(src_len.max())
    out = jnp.zeros((B, max_src, H2), jnp.float32)
    out = out.at[np.array(seg_b, np.int32)[slot_valid],
                 np.array(seg_j, np.int32)[slot_valid]].set(emb[keep])
    return out


# ----------------------- pure numpy reference (for validation) -----------------------
def _sigmoid(v):
    return 1.0 / (1.0 + np.exp(-v))


def _conv_stack_ref(x, p):
    T, M = x.shape
    K, D = p["w1"].shape
    pad = (K - 1) // 2
    xp = np.pad(x, ((0, 0), (pad, pad))).astype(np.float32)
    h1 = np.zeros((T, M, D), np.float32)
    for k in range(K):
        h1 += xp[:, k:k + M][:, :, None] * p["w1"][k][None, None, :]
    h1 = np.maximum(h1 * p["scale1"] + p["shift1"], 0.0)
    hp = np.pad(h1, ((0, 0), (pad, pad), (0, 0)))
    o2 = np.zeros((T, M), np.float32)
    for k in range(K):
        o2 += np.einsum("tmc,c->tm", hp[:, k:k + M, :], p["w2"][:, k])
    return np.maximum(o2 * p["bn2"][0, 0] + p["bn2"][0, 1], 0.0)


def _gru_dir_ref(x2, p, d_idx, reverse):
    D = p["whh"].shape[1]
    wih, whh = p["wih"][d_idx], p["whh"][d_idx]
    bih, bhh = p["bih"][d_idx, 0], p["bhh"][d_idx, 0]
    seq = x2[::-1] if reverse else x2
    h = np.zeros(D, np.float32)
    for xt in seq:
        gx = xt @ wih + bih
        gh = h @ whh + bhh
        r = _sigmoid(gx[:D] + gh[:D])
        z = _sigmoid(gx[D:2 * D] + gh[D:2 * D])
        n = np.tanh(gx[2 * D:] + r * gh[2 * D:])
        h = (1.0 - z) * n + z * h
    return h


def ref_forward(mel, mel_len, duration, src_len, p):
    B = mel.shape[0]
    D = p["w1"].shape[1]
    max_src = int(np.max(src_len))
    out = np.zeros((B, max_src, 2 * D), np.float32)
    for b in range(B):
        off = 0
        for j in range(int(src_len[b])):
            d = int(duration[b, j])
            seg = np.asarray(mel[b, off:off + d], np.float32)
            off += d
            x2 = _conv_stack_ref(seg, p)
            out[b, j, :D] = _gru_dir_ref(x2, p, 0, False)
            out[b, j, D:] = _gru_dir_ref(x2, p, 1, True)
    return out


# -------------------------------------- main --------------------------------------
if __name__ == "__main__":
    key = jax.random.PRNGKey(0)
    ks = jax.random.split(key, 8)
    M, D, K = N_MEL, D_MODEL, KSIZE

    # deterministic synthetic parameters (shapes per nn.Module __init__)
    w1 = jax.random.normal(ks[0], (K, D), jnp.float32) * 0.3          # Conv2d(1,D,(1,K)) weight [D,1,1,K]->[K,D]
    w2 = jax.random.normal(ks[1], (D, K), jnp.float32) * 0.3          # Conv2d(D,1,(1,K)) weight [1,D,1,K]->[D,K]
    scale1 = jnp.full((1, D), 1.0 / np.sqrt(1.0 + BN_EPS), jnp.float32)   # BN(D) folded (gamma=1,beta=0,rm=0,rv=1)
    shift1 = jnp.zeros((1, D), jnp.float32)
    bn2 = jnp.array([[1.0 / np.sqrt(1.0 + BN_EPS), 0.0]], jnp.float32)    # BN(1) folded [scale, shift]
    gs = 1.0 / np.sqrt(D)
    wih = jax.random.uniform(ks[2], (2, M, 3 * D), jnp.float32, -gs, gs)  # [dir, M, 3D] = W_ih.T (r,z,n)
    whh = jax.random.uniform(ks[3], (2, D, 3 * D), jnp.float32, -gs, gs)  # [dir, D, 3D] = W_hh.T (r,z,n)
    bih = jax.random.uniform(ks[4], (2, 1, 3 * D), jnp.float32, -gs, gs)
    bhh = jax.random.uniform(ks[5], (2, 1, 3 * D), jnp.float32, -gs, gs)
    params = dict(w1=w1, scale1=scale1, shift1=shift1, w2=w2, bn2=bn2,
                  wih=wih, whh=whh, bih=bih, bhh=bhh)

    # deterministic example inputs
    mel = jax.random.normal(ks[6], (2, 8, M), jnp.float32)             # [B, mel_len, n_mel_channels]
    mel_len = np.array([8, 6], np.int32)
    duration = np.array([[3, 2, 3], [4, 2, 0]], np.int32)              # sums match mel_len
    src_len = np.array([3, 2], np.int32)

    out = prosody_extractor_forward(mel, mel_len, duration, src_len, params)
    out = np.asarray(jax.block_until_ready(out))                       # [B, max_src, 2*d_model]

    ref = ref_forward(np.asarray(mel), mel_len, duration, src_len,
                      {k: np.asarray(v) for k, v in params.items()})
    # conv/gx matmuls now run at default (single-pass bf16, f32 acc) MXU precision per the
    # perf review, so tolerance is looser than a HIGHEST-precision build; the recurrent
    # dot keeps HIGHEST so error does not compound over timesteps.
    np.testing.assert_allclose(out, ref, rtol=1e-2, atol=1e-2)
    print("KERNEL_OK")
</pallas_src>

<mosaic_0001>
module attributes {stable_mosaic.version = 11 : i64} {
  func.func @prosody_kernel(%arg0: i32, %arg1: memref<1xi32, #tpu.memory_space<smem>>, %arg2: memref<1x1024x16xf32, #tpu.memory_space<vmem>>, %arg3: memref<1x128x16xi32, #tpu.memory_space<vmem>>, %arg4: memref<16x128xf32, #tpu.memory_space<vmem>>, %arg5: memref<1x128xf32, #tpu.memory_space<vmem>>, %arg6: memref<128x16xf32, #tpu.memory_space<vmem>>, %arg7: memref<1x16xf32, #tpu.memory_space<vmem>>, %arg8: memref<16x48xf32, #tpu.memory_space<vmem>>, %arg9: memref<1x48xf32, #tpu.memory_space<vmem>>, %arg10: memref<16x48xf32, #tpu.memory_space<vmem>>, %arg11: memref<1x48xf32, #tpu.memory_space<vmem>>, %arg12: memref<1x128x16xf32, #tpu.memory_space<vmem>>, %arg13: memref<1024x48xf32, #tpu.memory_space<vmem>>, %arg14: memref<1024x48xf32, #tpu.memory_space<vmem>>) attributes {dimension_semantics = [#tpu.dimension_semantics<parallel>], iteration_bounds = array<i64: 1>, scalar_prefetch = 1 : i64, scratch_operands = 2 : i64, tpu.core_type = #tpu.core_type<tc>, window_params = [{transform_indices = @transform_0, window_bounds = array<i64: 1, 1024, 16>}, {transform_indices = @transform_1, window_bounds = array<i64: 1, 128, 16>}, {pipeline_mode = #tpu.pipeline_mode<synchronous>, transform_indices = @transform_2, window_bounds = array<i64: 16, 128>}, {pipeline_mode = #tpu.pipeline_mode<synchronous>, transform_indices = @transform_3, window_bounds = array<i64: 1, 128>}, {pipeline_mode = #tpu.pipeline_mode<synchronous>, transform_indices = @transform_4, window_bounds = array<i64: 128, 16>}, {pipeline_mode = #tpu.pipeline_mode<synchronous>, transform_indices = @transform_5, window_bounds = array<i64: 1, 16>}, {pipeline_mode = #tpu.pipeline_mode<synchronous>, transform_indices = @transform_6, window_bounds = array<i64: 16, 48>}, {pipeline_mode = #tpu.pipeline_mode<synchronous>, transform_indices = @transform_7, window_bounds = array<i64: 1, 48>}, {pipeline_mode = #tpu.pipeline_mode<synchronous>, transform_indices = @transform_8, window_bounds = array<i64: 16, 48>}, {pipeline_mode = #tpu.pipeline_mode<synchronous>, transform_indices = @transform_9, window_bounds = array<i64: 1, 48>}, {transform_indices = @transform_10, window_bounds = array<i64: 1, 128, 16>}]} {
    %0 = arith.index_cast %arg0 : i32 to index
    %1 = memref.load %arg1[%0] : memref<1xi32, #tpu.memory_space<smem>>
    %2 = tpu.iota {dimensions = array<i32: 1>} : vector<128x16xi32>
    %c8_i32 = arith.constant 8 : i32
    %3 = vector.broadcast %c8_i32 : i32 to vector<128x16xi32>
    %4 = arith.cmpi slt, %2, %3 : vector<128x16xi32>
    %5 = tpu.iota {dimensions = array<i32: 1>} : vector<128x48xi32>
    %c8_i32_0 = arith.constant 8 : i32
    %6 = vector.broadcast %c8_i32_0 : i32 to vector<128x48xi32>
    %7 = arith.cmpi slt, %5, %6 : vector<128x48xi32>
    %c16_i32 = arith.constant 16 : i32
    %8 = vector.broadcast %c16_i32 : i32 to vector<128x48xi32>
    %9 = arith.cmpi sge, %5, %8 : vector<128x48xi32>
    %c24_i32 = arith.constant 24 : i32
    %10 = vector.broadcast %c24_i32 : i32 to vector<128x48xi32>
    %11 = arith.cmpi slt, %5, %10 : vector<128x48xi32>
    %12 = arith.andi %9, %11 : vector<128x48xi1>
    %13 = arith.ori %7, %12 : vector<128x48xi1>
    %c32_i32 = arith.constant 32 : i32
    %14 = vector.broadcast %c32_i32 : i32 to vector<128x48xi32>
    %15 = arith.cmpi sge, %5, %14 : vector<128x48xi32>
    %c40_i32 = arith.constant 40 : i32
    %16 = vector.broadcast %c40_i32 : i32 to vector<128x48xi32>
    %17 = arith.cmpi slt, %5, %16 : vector<128x48xi32>
    %18 = arith.andi %15, %17 : vector<128x48xi1>
    %19 = arith.ori %13, %18 : vector<128x48xi1>
    %c0 = arith.constant 0 : index
    %c0_1 = arith.constant 0 : index
    %20 = vector.load %arg4[%c0, %c0_1] : memref<16x128xf32, #tpu.memory_space<vmem>>, vector<16x128xf32>
    %c0_2 = arith.constant 0 : index
    %c0_3 = arith.constant 0 : index
    %21 = vector.load %arg5[%c0_2, %c0_3] : memref<1x128xf32, #tpu.memory_space<vmem>>, vector<1x128xf32>
    %c0_4 = arith.constant 0 : index
    %c0_5 = arith.constant 0 : index
    %22 = vector.load %arg6[%c0_4, %c0_5] : memref<128x16xf32, #tpu.memory_space<vmem>>, vector<128x16xf32>
    %c0_6 = arith.constant 0 : index
    %c0_7 = arith.constant 0 : index
    %23 = vector.load %arg7[%c0_6, %c0_7] : memref<1x16xf32, #tpu.memory_space<vmem>>, vector<1x16xf32>
    %c0_8 = arith.constant 0 : index
    %c0_9 = arith.constant 0 : index
    %24 = vector.load %arg8[%c0_8, %c0_9] : memref<16x48xf32, #tpu.memory_space<vmem>>, vector<16x48xf32>
    %c0_10 = arith.constant 0 : index
    %c0_11 = arith.constant 0 : index
    %25 = vector.load %arg9[%c0_10, %c0_11] : memref<1x48xf32, #tpu.memory_space<vmem>>, vector<1x48xf32>
    %c0_12 = arith.constant 0 : index
    %c0_13 = arith.constant 0 : index
    %26 = vector.load %arg10[%c0_12, %c0_13] : memref<16x48xf32, #tpu.memory_space<vmem>>, vector<16x48xf32>
    %c0_14 = arith.constant 0 : index
    %c0_15 = arith.constant 0 : index
    %27 = vector.load %arg11[%c0_14, %c0_15] : memref<1x48xf32, #tpu.memory_space<vmem>>, vector<1x48xf32>
    %c0_16 = arith.constant 0 : index
    %c0_17 = arith.constant 0 : index
    %c0_18 = arith.constant 0 : index
    %28 = vector.load %arg3[%c0_16, %c0_17, %c0_18] : memref<1x128x16xi32, #tpu.memory_space<vmem>>, vector<1x128x16xi32>
    %29 = vector.shape_cast %28 : vector<1x128x16xi32> to vector<128x16xi32>
    %c0_i32 = arith.constant 0 : i32
    %30 = arith.cmpi sgt, %1, %c0_i32 : i32
    %31 = arith.extui %30 : i1 to i32
    %c0_i32_19 = arith.constant 0 : i32
    %32 = arith.cmpi ne, %31, %c0_i32_19 : i32
    scf.if %32 {
      %c0_33 = arith.constant 0 : index
      %c0_34 = arith.constant 0 : index
      %c0_35 = arith.constant 0 : index
      %49 = vector.load %arg2[%c0_33, %c0_34, %c0_35] : memref<1x1024x16xf32, #tpu.memory_space<vmem>>, vector<1x512x16xf32>
      %50 = vector.shape_cast %49 : vector<1x512x16xf32> to vector<512x16xf32>
      %cst_36 = arith.constant dense<0.000000e+00> : vector<512x128xf32>
      %51 = tpu.matmul %50, %20, %cst_36 {dimension_numbers = #tpu.dot_dimension_numbers<[1], [0], [0], [1], [0, 0, 1, 1], [], []>} : vector<512x16xf32>, vector<16x128xf32>, vector<512x128xf32> -> vector<512x128xf32>
      %52 = vector.broadcast %21 : vector<1x128xf32> to vector<512x128xf32>
      %53 = arith.addf %51, %52 : vector<512x128xf32>
      %cst_37 = arith.constant 0.000000e+00 : f32
      %54 = vector.broadcast %cst_37 : f32 to vector<512x128xf32>
      %55 = arith.maximumf %53, %54 : vector<512x128xf32>
      %cst_38 = arith.constant dense<0.000000e+00> : vector<512x16xf32>
      %56 = tpu.matmul %55, %22, %cst_38 {dimension_numbers = #tpu.dot_dimension_numbers<[1], [0], [0], [1], [0, 0, 1, 1], [], []>} : vector<512x128xf32>, vector<128x16xf32>, vector<512x16xf32> -> vector<512x16xf32>
      %57 = vector.broadcast %23 : vector<1x16xf32> to vector<512x16xf32>
      %58 = arith.addf %56, %57 : vector<512x16xf32>
      %cst_39 = arith.constant 0.000000e+00 : f32
      %59 = vector.broadcast %cst_39 : f32 to vector<512x16xf32>
      %60 = arith.maximumf %58, %59 : vector<512x16xf32>
      %cst_40 = arith.constant dense<0.000000e+00> : vector<512x48xf32>
      %61 = tpu.matmul %60, %24, %cst_40 {dimension_numbers = #tpu.dot_dimension_numbers<[1], [0], [0], [1], [0, 0, 1, 1], [], []>} : vector<512x16xf32>, vector<16x48xf32>, vector<512x48xf32> -> vector<512x48xf32>
      %62 = vector.broadcast %25 : vector<1x48xf32> to vector<512x48xf32>
      %63 = arith.addf %61, %62 : vector<512x48xf32>
      %c0_41 = arith.constant 0 : index
      %c0_42 = arith.constant 0 : index
      %64 = vector.load %arg13[%c0_41, %c0_42] : memref<1024x48xf32, #tpu.memory_space<vmem>>, vector<512x48xf32>
      tpu.vector_store %arg13[%c0_41, %c0_42], %63 {strides = array<i32>} : memref<1024x48xf32, #tpu.memory_space<vmem>>, vector<512x48xf32>,
    } else {
    }
    %c4_i32 = arith.constant 4 : i32
    %33 = arith.cmpi sgt, %1, %c4_i32 : i32
    %34 = arith.extui %33 : i1 to i32
    %c0_i32_20 = arith.constant 0 : i32
    %35 = arith.cmpi ne, %34, %c0_i32_20 : i32
    scf.if %35 {
      %c0_33 = arith.constant 0 : index
      %c512 = arith.constant 512 : index
      %c0_34 = arith.constant 0 : index
      %49 = vector.load %arg2[%c0_33, %c512, %c0_34] : memref<1x1024x16xf32, #tpu.memory_space<vmem>>, vector<1x512x16xf32>
      %50 = vector.shape_cast %49 : vector<1x512x16xf32> to vector<512x16xf32>
      %cst_35 = arith.constant dense<0.000000e+00> : vector<512x128xf32>
      %51 = tpu.matmul %50, %20, %cst_35 {dimension_numbers = #tpu.dot_dimension_numbers<[1], [0], [0], [1], [0, 0, 1, 1], [], []>} : vector<512x16xf32>, vector<16x128xf32>, vector<512x128xf32> -> vector<512x128xf32>
      %52 = vector.broadcast %21 : vector<1x128xf32> to vector<512x128xf32>
      %53 = arith.addf %51, %52 : vector<512x128xf32>
      %cst_36 = arith.constant 0.000000e+00 : f32
      %54 = vector.broadcast %cst_36 : f32 to vector<512x128xf32>
      %55 = arith.maximumf %53, %54 : vector<512x128xf32>
      %cst_37 = arith.constant dense<0.000000e+00> : vector<512x16xf32>
      %56 = tpu.matmul %55, %22, %cst_37 {dimension_numbers = #tpu.dot_dimension_numbers<[1], [0], [0], [1], [0, 0, 1, 1], [], []>} : vector<512x128xf32>, vector<128x16xf32>, vector<512x16xf32> -> vector<512x16xf32>
      %57 = vector.broadcast %23 : vector<1x16xf32> to vector<512x16xf32>
      %58 = arith.addf %56, %57 : vector<512x16xf32>
      %cst_38 = arith.constant 0.000000e+00 : f32
      %59 = vector.broadcast %cst_38 : f32 to vector<512x16xf32>
      %60 = arith.maximumf %58, %59 : vector<512x16xf32>
      %cst_39 = arith.constant dense<0.000000e+00> : vector<512x48xf32>
      %61 = tpu.matmul %60, %24, %cst_39 {dimension_numbers = #tpu.dot_dimension_numbers<[1], [0], [0], [1], [0, 0, 1, 1], [], []>} : vector<512x16xf32>, vector<16x48xf32>, vector<512x48xf32> -> vector<512x48xf32>
      %62 = vector.broadcast %25 : vector<1x48xf32> to vector<512x48xf32>
      %63 = arith.addf %61, %62 : vector<512x48xf32>
      %c512_40 = arith.constant 512 : index
      %c0_41 = arith.constant 0 : index
      %64 = vector.load %arg13[%c512_40, %c0_41] : memref<1024x48xf32, #tpu.memory_space<vmem>>, vector<512x48xf32>
      tpu.vector_store %arg13[%c512_40, %c0_41], %63 {strides = array<i32>} : memref<1024x48xf32, #tpu.memory_space<vmem>>, vector<512x48xf32>,
    } else {
    }
    %c0_i32_21 = arith.constant 0 : i32
    %36 = arith.subi %1, %c0_i32_21 : i32
    %c1_i32 = arith.constant 1 : i32
    %c1_i32_22 = arith.constant 1 : i32
    %37 = arith.subi %c1_i32, %c1_i32_22 : i32
    %38 = arith.addi %36, %37 : i32
    %c1_i32_23 = arith.constant 1 : i32
    %39 = arith.divsi %38, %c1_i32_23 : i32
    %c1_i32_24 = arith.constant 1 : i32
    %c0_i32_25 = arith.constant 0 : i32
    %c0_i32_26 = arith.constant 0 : i32
    %40 = arith.subi %39, %c0_i32_26 : i32
    %41 = arith.addi %c0_i32_26, %40 : i32
    %c1_i32_27 = arith.constant 1 : i32
    scf.for %arg15 = %c0_i32_26 to %41 step %c1_i32_27  : i32 {
      %49 = arith.muli %arg15, %c1_i32_24 : i32
      %50 = arith.addi %c0_i32_25, %49 : i32
      %c128_i32 = arith.constant 128 : i32
      %51 = arith.muli %50, %c128_i32 : i32
      %52 = tpu.assume_multiple %51, 128 : i32
      %c1_i32_33 = arith.constant 1 : i32
      %53 = arith.subi %1, %c1_i32_33 : i32
      %54 = arith.subi %53, %50 : i32
      %c128_i32_34 = arith.constant 128 : i32
      %55 = arith.muli %54, %c128_i32_34 : i32
      %56 = tpu.assume_multiple %55, 128 : i32
      %57 = arith.index_cast %52 : i32 to index
      %c0_35 = arith.constant 0 : index
      %58 = vector.load %arg13[%57, %c0_35] : memref<1024x48xf32, #tpu.memory_space<vmem>>, vector<128x48xf32>
      %59 = arith.index_cast %56 : i32 to index
      %c0_36 = arith.constant 0 : index
      %60 = vector.load %arg13[%59, %c0_36] : memref<1024x48xf32, #tpu.memory_space<vmem>>, vector<128x48xf32>
      %61 = arith.select %19, %58, %60 : vector<128x48xi1>, vector<128x48xf32>
      %62 = arith.index_cast %52 : i32 to index
      %c0_37 = arith.constant 0 : index
      %63 = vector.load %arg14[%62, %c0_37] : memref<1024x48xf32, #tpu.memory_space<vmem>>, vector<128x48xf32>
      tpu.vector_store %arg14[%62, %c0_37], %61 {strides = array<i32>} : memref<1024x48xf32, #tpu.memory_space<vmem>>, vector<128x48xf32>,
    }
    %cst = arith.constant 0.000000e+00 : f32
    %42 = vector.broadcast %cst : f32 to vector<128x16xf32>
    %c0_i32_28 = arith.constant 0 : i32
    %43 = arith.subi %1, %c0_i32_28 : i32
    %44 = arith.addi %c0_i32_28, %43 : i32
    %c1_i32_29 = arith.constant 1 : i32
    %45 = scf.for %arg15 = %c0_i32_28 to %44 step %c1_i32_29 iter_args(%arg16 = %42) -> (vector<128x16xf32>)  : i32 {
      %c128_i32 = arith.constant 128 : i32
      %49 = arith.muli %arg15, %c128_i32 : i32
      %50 = tpu.assume_multiple %49, 128 : i32
      %51 = arith.index_cast %50 : i32 to index
      %c0_33 = arith.constant 0 : index
      %52 = vector.load %arg14[%51, %c0_33] : memref<1024x48xf32, #tpu.memory_space<vmem>>, vector<128x48xf32>
      %cst_34 = arith.constant dense<0.000000e+00> : vector<128x48xf32>
      %53 = tpu.matmul %arg16, %26, %cst_34 {dimension_numbers = #tpu.dot_dimension_numbers<[1], [0], [0], [1], [0, 0, 1, 1], [], []>, precision = #tpu.contract_precision<fp32>} : vector<128x16xf32>, vector<16x48xf32>, vector<128x48xf32> -> vector<128x48xf32>
      %54 = vector.broadcast %27 : vector<1x48xf32> to vector<128x48xf32>
      %55 = arith.addf %53, %54 : vector<128x48xf32>
      %56 = vector.extract_strided_slice %52 {offsets = [0, 0], sizes = [128, 16], strides = [1, 1]} : vector<128x48xf32> to vector<128x16xf32>
      %57 = vector.extract_strided_slice %55 {offsets = [0, 0], sizes = [128, 16], strides = [1, 1]} : vector<128x48xf32> to vector<128x16xf32>
      %58 = arith.addf %56, %57 : vector<128x16xf32>
      %cst_35 = arith.constant 5.000000e-01 : f32
      %59 = vector.broadcast %cst_35 : f32 to vector<128x16xf32>
      %60 = arith.mulf %59, %58 : vector<128x16xf32>
      %61 = math.tanh %60 : vector<128x16xf32>
      %cst_36 = arith.constant 5.000000e-01 : f32
      %62 = vector.broadcast %cst_36 : f32 to vector<128x16xf32>
      %63 = arith.mulf %62, %61 : vector<128x16xf32>
      %cst_37 = arith.constant 5.000000e-01 : f32
      %64 = vector.broadcast %cst_37 : f32 to vector<128x16xf32>
      %65 = arith.addf %63, %64 : vector<128x16xf32>
      %66 = vector.extract_strided_slice %52 {offsets = [0, 16], sizes = [128, 16], strides = [1, 1]} : vector<128x48xf32> to vector<128x16xf32>
      %67 = vector.extract_strided_slice %55 {offsets = [0, 16], sizes = [128, 16], strides = [1, 1]} : vector<128x48xf32> to vector<128x16xf32>
      %68 = arith.addf %66, %67 : vector<128x16xf32>
      %cst_38 = arith.constant 5.000000e-01 : f32
      %69 = vector.broadcast %cst_38 : f32 to vector<128x16xf32>
      %70 = arith.mulf %69, %68 : vector<128x16xf32>
      %71 = math.tanh %70 : vector<128x16xf32>
      %cst_39 = arith.constant 5.000000e-01 : f32
      %72 = vector.broadcast %cst_39 : f32 to vector<128x16xf32>
      %73 = arith.mulf %72, %71 : vector<128x16xf32>
      %cst_40 = arith.constant 5.000000e-01 : f32
      %74 = vector.broadcast %cst_40 : f32 to vector<128x16xf32>
      %75 = arith.addf %73, %74 : vector<128x16xf32>
      %76 = vector.extract_strided_slice %52 {offsets = [0, 32], sizes = [128, 16], strides = [1, 1]} : vector<128x48xf32> to vector<128x16xf32>
      %77 = vector.extract_strided_slice %55 {offsets = [0, 32], sizes = [128, 16], strides = [1, 1]} : vector<128x48xf32> to vector<128x16xf32>
      %78 = arith.mulf %65, %77 : vector<128x16xf32>
      %79 = arith.addf %76, %78 : vector<128x16xf32>
      %80 = math.tanh %79 : vector<128x16xf32>
      %cst_41 = arith.constant 1.000000e+00 : f32
      %81 = vector.broadcast %cst_41 : f32 to vector<128x16xf32>
      %82 = arith.subf %81, %75 : vector<128x16xf32>
      %83 = arith.mulf %82, %80 : vector<128x16xf32>
      %84 = arith.mulf %75, %arg16 : vector<128x16xf32>
      %85 = arith.addf %83, %84 : vector<128x16xf32>
      %c1_i32_42 = arith.constant 1 : i32
      %86 = arith.subi %1, %c1_i32_42 : i32
      %87 = arith.subi %86, %arg15 : i32
      %88 = vector.broadcast %arg15 : i32 to vector<128x16xi32>
      %89 = vector.broadcast %87 : i32 to vector<128x16xi32>
      %90 = arith.select %4, %88, %89 : vector<128x16xi1>, vector<128x16xi32>
      %91 = arith.cmpi slt, %90, %29 : vector<128x16xi32>
      %92 = arith.select %91, %85, %arg16 : vector<128x16xi1>, vector<128x16xf32>
      scf.yield %92 : vector<128x16xf32>
    }
    %c0_30 = arith.constant 0 : index
    %c0_31 = arith.constant 0 : index
    %c0_32 = arith.constant 0 : index
    %46 = vector.load %arg12[%c0_30, %c0_31, %c0_32] : memref<1x128x16xf32, #tpu.memory_space<vmem>>, vector<1x128x16xf32>
    %47 = vector.shape_cast %46 : vector<1x128x16xf32> to vector<128x16xf32>
    %48 = vector.shape_cast %45 : vector<128x16xf32> to vector<1x128x16xf32>
    tpu.vector_store %arg12[%c0_30, %c0_31, %c0_32], %48 {strides = array<i32>} : memref<1x128x16xf32, #tpu.memory_space<vmem>>, vector<1x128x16xf32>,
    return
  }
  func.func @transform_0(%arg0: i32, %arg1: memref<1xi32, #tpu.memory_space<smem>>) -> (i32, i32, i32) {
    %c0_i32 = arith.constant 0 : i32
    %c0_i32_0 = arith.constant 0 : i32
    %c0_i32_1 = arith.constant 0 : i32
    return %arg0, %c0_i32, %c0_i32_0 : i32, i32, i32
  }
  func.func @transform_1(%arg0: i32, %arg1: memref<1xi32, #tpu.memory_space<smem>>) -> (i32, i32, i32) {
    %c0_i32 = arith.constant 0 : i32
    %c0_i32_0 = arith.constant 0 : i32
    %c0_i32_1 = arith.constant 0 : i32
    return %arg0, %c0_i32, %c0_i32_0 : i32, i32, i32
  }
  func.func @transform_2(%arg0: i32, %arg1: memref<1xi32, #tpu.memory_space<smem>>) -> (i32, i32) {
    %c0_i32 = arith.constant 0 : i32
    %c0_i32_0 = arith.constant 0 : i32
    %c0_i32_1 = arith.constant 0 : i32
    return %c0_i32, %c0_i32_0 : i32, i32
  }
  func.func @transform_3(%arg0: i32, %arg1: memref<1xi32, #tpu.memory_space<smem>>) -> (i32, i32) {
    %c0_i32 = arith.constant 0 : i32
    %c0_i32_0 = arith.constant 0 : i32
    %c0_i32_1 = arith.constant 0 : i32
    return %c0_i32, %c0_i32_0 : i32, i32
  }
  func.func @transform_4(%arg0: i32, %arg1: memref<1xi32, #tpu.memory_space<smem>>) -> (i32, i32) {
    %c0_i32 = arith.constant 0 : i32
    %c0_i32_0 = arith.constant 0 : i32
    %c0_i32_1 = arith.constant 0 : i32
    return %c0_i32, %c0_i32_0 : i32, i32
  }
  func.func @transform_5(%arg0: i32, %arg1: memref<1xi32, #tpu.memory_space<smem>>) -> (i32, i32) {
    %c0_i32 = arith.constant 0 : i32
    %c0_i32_0 = arith.constant 0 : i32
    %c0_i32_1 = arith.constant 0 : i32
    return %c0_i32, %c0_i32_0 : i32, i32
  }
  func.func @transform_6(%arg0: i32, %arg1: memref<1xi32, #tpu.memory_space<smem>>) -> (i32, i32) {
    %c0_i32 = arith.constant 0 : i32
    %c0_i32_0 = arith.constant 0 : i32
    %c0_i32_1 = arith.constant 0 : i32
    return %c0_i32, %c0_i32_0 : i32, i32
  }
  func.func @transform_7(%arg0: i32, %arg1: memref<1xi32, #tpu.memory_space<smem>>) -> (i32, i32) {
    %c0_i32 = arith.constant 0 : i32
    %c0_i32_0 = arith.constant 0 : i32
    %c0_i32_1 = arith.constant 0 : i32
    return %c0_i32, %c0_i32_0 : i32, i32
  }
  func.func @transform_8(%arg0: i32, %arg1: memref<1xi32, #tpu.memory_space<smem>>) -> (i32, i32) {
    %c0_i32 = arith.constant 0 : i32
    %c0_i32_0 = arith.constant 0 : i32
    %c0_i32_1 = arith.constant 0 : i32
    return %c0_i32, %c0_i32_0 : i32, i32
  }
  func.func @transform_9(%arg0: i32, %arg1: memref<1xi32, #tpu.memory_space<smem>>) -> (i32, i32) {
    %c0_i32 = arith.constant 0 : i32
    %c0_i32_0 = arith.constant 0 : i32
    %c0_i32_1 = arith.constant 0 : i32
    return %c0_i32, %c0_i32_0 : i32, i32
  }
  func.func @transform_10(%arg0: i32, %arg1: memref<1xi32, #tpu.memory_space<smem>>) -> (i32, i32, i32) {
    %c0_i32 = arith.constant 0 : i32
    %c0_i32_0 = arith.constant 0 : i32
    %c0_i32_1 = arith.constant 0 : i32
    return %arg0, %c0_i32, %c0_i32_0 : i32, i32, i32
  }
}

</mosaic_0001>

<llo_original>
// kernel: tpu_custom_call.1
$region0: #{tpu_custom_call.1}
  #allocation0 [shape = 'u32[]', space=smem, size = 0x4, offset = 0x4, fixed_abs, tag = 'smem constant byte address 0x4 - core index']
  #allocation1 [shape = 'u32[144,128]{1,0:T(1,128)}', space=vmem, size = 0x12000, scoped, tag = 'internal scratch']
  #allocation2 [shape = 'f32[1024,48]{1,0:T(8,128)}', space=vmem, size = 0x80000, scoped, tag = 'scratch operand']
  #allocation3 [shape = 'f32[1024,48]{1,0:T(8,128)}', space=vmem, size = 0x80000, scoped, tag = 'scratch operand']
  #allocation4 [shape = 's32[1]{0}', space=sflag, size = 0x4, scoped, tag = 'scoped memory for tpu_custom_call.1']
  #allocation5 [shape = 's32[1]{0:T(128)S(6)}', space=smem, size = 0x200, scoped, tag = 'prefetched SMEM operand 0']
  %s0 = inlined_call_operand.<no memory space> [shape: s32[1], index: 0, kind: input, shape index: {}]
  %s1 = inlined_call_operand.vmem [shape: f32[1,1024,16], index: 1, kind: input, shape index: {}]
  %s2 = inlined_call_operand.vmem [shape: s32[1,128,16], index: 2, kind: input, shape index: {}]
  %s3 = inlined_call_operand.vmem [shape: f32[16,128], index: 3, kind: input, shape index: {}]
  %s4 = inlined_call_operand.vmem [shape: f32[1,128], index: 4, kind: input, shape index: {}]
  %s5 = inlined_call_operand.vmem [shape: f32[128,16], index: 5, kind: input, shape index: {}]
  %s6 = inlined_call_operand.vmem [shape: f32[1,16], index: 6, kind: input, shape index: {}]
  %s7 = inlined_call_operand.vmem [shape: f32[16,48], index: 7, kind: input, shape index: {}]
  %s8 = inlined_call_operand.vmem [shape: f32[1,48], index: 8, kind: input, shape index: {}]
  %s9 = inlined_call_operand.vmem [shape: f32[16,48], index: 9, kind: input, shape index: {}]
  %s10 = inlined_call_operand.vmem [shape: f32[1,48], index: 10, kind: input, shape index: {}]
  %s11 = inlined_call_operand.vmem [shape: f32[1,128,16], index: 11, kind: output, shape index: {}]
  %s12 = sld [smem:[#allocation0]]
  $region72: #{tpu_custom_call.1} parent=0
    _
  %s14 = ssub.s32 1, %s12
  %s15 = scalar_select 0, %s14, %s12
  %16 = sst [smem:[#allocation5]] %s0
  // Predicated region
  $region2: #{tpu_custom_call.1} parent=0 // pred_check
    _
  $region3: #{tpu_custom_call.1} parent=0 // pred_check_branch
    %18 = sbr.rel (0) target = $region5
  $region4: #{tpu_custom_call.1} parent=0 // pred_region
    _
  $region5: #{tpu_custom_call.1} parent=0 // pred_fallthru
    _
  // Predicated region
  $region6: #{tpu_custom_call.1} parent=0 // pred_check
    _
  $region7: #{tpu_custom_call.1} parent=0 // pred_check_branch
    %20 = sbr.rel (0) target = $region9
  $region8: #{tpu_custom_call.1} parent=0 // pred_region
    _
  $region9: #{tpu_custom_call.1} parent=0 // pred_fallthru
    _
  // Predicated region
  $region10: #{tpu_custom_call.1} parent=0 // pred_check
    _
  $region11: #{tpu_custom_call.1} parent=0 // pred_check_branch
    %22 = sbr.rel (0) target = $region13
  $region12: #{tpu_custom_call.1} parent=0 // pred_region
    _
  $region13: #{tpu_custom_call.1} parent=0 // pred_fallthru
    _
  // Predicated region
  $region14: #{tpu_custom_call.1} parent=0 // pred_check
    _
  $region15: #{tpu_custom_call.1} parent=0 // pred_check_branch
    %24 = sbr.rel (0) target = $region17
  $region16: #{tpu_custom_call.1} parent=0 // pred_region
    _
  $region17: #{tpu_custom_call.1} parent=0 // pred_fallthru
    _
  // Predicated region
  $region18: #{tpu_custom_call.1} parent=0 // pred_check
    _
  $region19: #{tpu_custom_call.1} parent=0 // pred_check_branch
    %26 = sbr.rel (0) target = $region21
  $region20: #{tpu_custom_call.1} parent=0 // pred_region
    _
  $region21: #{tpu_custom_call.1} parent=0 // pred_fallthru
    _
  // Predicated region
  $region22: #{tpu_custom_call.1} parent=0 // pred_check
    _
  $region23: #{tpu_custom_call.1} parent=0 // pred_check_branch
    %28 = sbr.rel (0) target = $region25
  $region24: #{tpu_custom_call.1} parent=0 // pred_region
    _
  $region25: #{tpu_custom_call.1} parent=0 // pred_fallthru
    _
  // Predicated region
  $region26: #{tpu_custom_call.1} parent=0 // pred_check
    _
  $region27: #{tpu_custom_call.1} parent=0 // pred_check_branch
    %30 = sbr.rel (0) target = $region29
  $region28: #{tpu_custom_call.1} parent=0 // pred_region
    _
  $region29: #{tpu_custom_call.1} parent=0 // pred_fallthru
    _
  // Predicated region
  $region30: #{tpu_custom_call.1} parent=0 // pred_check
    _
  $region31: #{tpu_custom_call.1} parent=0 // pred_check_branch
    %32 = sbr.rel (0) target = $region33
  $region32: #{tpu_custom_call.1} parent=0 // pred_region
    _
  $region33: #{tpu_custom_call.1} parent=0 // pred_fallthru
    _
  // Predicated region
  $region34: #{tpu_custom_call.1} parent=0 // pred_check
    _
  $region35: #{tpu_custom_call.1} parent=0 // pred_check_branch
    %34 = sbr.rel (0) target = $region37
  $region36: #{tpu_custom_call.1} parent=0 // pred_region
    _
  $region37: #{tpu_custom_call.1} parent=0 // pred_fallthru
    _
  // Predicated region
  $region38: #{tpu_custom_call.1} parent=0 // pred_check
    _
  $region39: #{tpu_custom_call.1} parent=0 // pred_check_branch
    %36 = sbr.rel (0) target = $region41
  $region40: #{tpu_custom_call.1} parent=0 // pred_region
    _
  $region41: #{tpu_custom_call.1} parent=0 // pred_fallthru
    _
  %s37 = sld [smem:[#allocation5]]
  %v38 = vlaneseq
  %v39 = vand.u32 %v38, 127
  %vm40 = vcmp.lt.s32.totalorder %v39, 8
  %vm41 = vcmp.ge.s32.totalorder %v39, 16
  %vm42 = vcmp.lt.s32.totalorder %v39, 24
  %vm43 = vmand %vm41, %vm42
  %vm44 = vmor %vm40, %vm43
  %vm45 = vcmp.ge.s32.totalorder %v39, 32
  %vm46 = vcmp.lt.s32.totalorder %v39, 40
  %vm47 = vmand %vm45, %vm46
  %vm48 = vmor %vm44, %vm47
  %v49 = vld [vmem:[%s3] sm:$0xff]
  %v50 = vld [vmem:[%s3 + $0x8] sm:$0xff]
  %v51 = vld [vmem:[%s4] sm:$0x1]
  %v52 = vld [vmem:[%s5] sm:$0xff]
  %v53 = vld [vmem:[%s5 + $0x8] sm:$0xff]
  %v54 = vld [vmem:[%s5 + $0x10] sm:$0xff]
  %v55 = vld [vmem:[%s5 + $0x18] sm:$0xff]
  %v56 = vld [vmem:[%s5 + $0x20] sm:$0xff]
  %v57 = vld [vmem:[%s5 + $0x28] sm:$0xff]
  %v58 = vld [vmem:[%s5 + $0x30] sm:$0xff]
  %v59 = vld [vmem:[%s5 + $0x38] sm:$0xff]
  %v60 = vld [vmem:[%s5 + $0x40] sm:$0xff]
  %v61 = vld [vmem:[%s5 + $0x48] sm:$0xff]
  %v62 = vld [vmem:[%s5 + $0x50] sm:$0xff]
  %v63 = vld [vmem:[%s5 + $0x58] sm:$0xff]
  %v64 = vld [vmem:[%s5 + $0x60] sm:$0xff]
  %v65 = vld [vmem:[%s5 + $0x68] sm:$0xff]
  %v66 = vld [vmem:[%s5 + $0x70] sm:$0xff]
  %v67 = vld [vmem:[%s5 + $0x78] sm:$0xff]
  %v68 = vld [vmem:[%s6] sm:$0x1]
  %v69 = vld [vmem:[%s7] sm:$0xff]
  %v70 = vld [vmem:[%s7 + $0x8] sm:$0xff]
  %v71 = vld [vmem:[%s8] sm:$0x1]
  %v72 = vld [vmem:[%s9] sm:$0xff]
  %v73 = vld [vmem:[%s9 + $0x8] sm:$0xff]
  %v74 = vld [vmem:[%s10] sm:$0x1]
  %v75 = vld [vmem:[%s2] sm:$0xff]
  %v76 = vld [vmem:[%s2 + $0x8] sm:$0xff]
  %v77 = vld [vmem:[%s2 + $0x10] sm:$0xff]
  %v78 = vld [vmem:[%s2 + $0x18] sm:$0xff]
  %v79 = vld [vmem:[%s2 + $0x20] sm:$0xff]
  %v80 = vld [vmem:[%s2 + $0x28] sm:$0xff]
  %v81 = vld [vmem:[%s2 + $0x30] sm:$0xff]
  %v82 = vld [vmem:[%s2 + $0x38] sm:$0xff]
  %v83 = vld [vmem:[%s2 + $0x40] sm:$0xff]
  %v84 = vld [vmem:[%s2 + $0x48] sm:$0xff]
  %v85 = vld [vmem:[%s2 + $0x50] sm:$0xff]
  %v86 = vld [vmem:[%s2 + $0x58] sm:$0xff]
  %v87 = vld [vmem:[%s2 + $0x60] sm:$0xff]
  %v88 = vld [vmem:[%s2 + $0x68] sm:$0xff]
  %v89 = vld [vmem:[%s2 + $0x70] sm:$0xff]
  %v90 = vld [vmem:[%s2 + $0x78] sm:$0xff]
  %p91 = scmp.gt.s32.totalorder %s37, 0
  // Predicated region
  $region42: #{tpu_custom_call.1} parent=0 // pred_check
    %p92 = pneg %p91
  $region43: #{tpu_custom_call.1} parent=0 // pred_check_branch
    %94 = sbr.rel (%p92) target = $region45
  $region44: #{tpu_custom_call.1} parent=0 // pred_region
    %v95 = vld [vmem:[%s1] sm:$0xff]
    %v96 = vld [vmem:[%s1 + $0x8] sm:$0xff]
    %v97 = vld [vmem:[%s1 + $0x10] sm:$0xff]
    %v98 = vld [vmem:[%s1 + $0x18] sm:$0xff]
    %v99 = vld [vmem:[%s1 + $0x20] sm:$0xff]
    %v100 = vld [vmem:[%s1 + $0x28] sm:$0xff]
    %v101 = vld [vmem:[%s1 + $0x30] sm:$0xff]
    %v102 = vld [vmem:[%s1 + $0x38] sm:$0xff]
    %v103 = vld [vmem:[%s1 + $0x40] sm:$0xff]
    %v104 = vld [vmem:[%s1 + $0x48] sm:$0xff]
    %v105 = vld [vmem:[%s1 + $0x50] sm:$0xff]
    %v106 = vld [vmem:[%s1 + $0x58] sm:$0xff]
    %v107 = vld [vmem:[%s1 + $0x60] sm:$0xff]
    %v108 = vld [vmem:[%s1 + $0x68] sm:$0xff]
    %v109 = vld [vmem:[%s1 + $0x70] sm:$0xff]
    %v110 = vld [vmem:[%s1 + $0x78] sm:$0xff]
    %v111 = vld [vmem:[%s1 + $0x80] sm:$0xff]
    %v112 = vld [vmem:[%s1 + $0x88] sm:$0xff]
    %v113 = vld [vmem:[%s1 + $0x90] sm:$0xff]
    %v114 = vld [vmem:[%s1 + $0x98] sm:$0xff]
    %v115 = vld [vmem:[%s1 + $0xa0] sm:$0xff]
    %v116 = vld [vmem:[%s1 + $0xa8] sm:$0xff]
    %v117 = vld [vmem:[%s1 + $0xb0] sm:$0xff]
    %v118 = vld [vmem:[%s1 + $0xb8] sm:$0xff]
    %v119 = vld [vmem:[%s1 + $0xc0] sm:$0xff]
    %v120 = vld [vmem:[%s1 + $0xc8] sm:$0xff]
    %v121 = vld [vmem:[%s1 + $0xd0] sm:$0xff]
    %v122 = vld [vmem:[%s1 + $0xd8] sm:$0xff]
    %v123 = vld [vmem:[%s1 + $0xe0] sm:$0xff]
    %v124 = vld [vmem:[%s1 + $0xe8] sm:$0xff]
    %v125 = vld [vmem:[%s1 + $0xf0] sm:$0xff]
    %v126 = vld [vmem:[%s1 + $0xf8] sm:$0xff]
    %v127 = vld [vmem:[%s1 + $0x100] sm:$0xff]
    %v128 = vld [vmem:[%s1 + $0x108] sm:$0xff]
    %v129 = vld [vmem:[%s1 + $0x110] sm:$0xff]
    %v130 = vld [vmem:[%s1 + $0x118] sm:$0xff]
    %v131 = vld [vmem:[%s1 + $0x120] sm:$0xff]
    %v132 = vld [vmem:[%s1 + $0x128] sm:$0xff]
    %v133 = vld [vmem:[%s1 + $0x130] sm:$0xff]
    %v134 = vld [vmem:[%s1 + $0x138] sm:$0xff]
    %v135 = vld [vmem:[%s1 + $0x140] sm:$0xff]
    %v136 = vld [vmem:[%s1 + $0x148] sm:$0xff]
    %v137 = vld [vmem:[%s1 + $0x150] sm:$0xff]
    %v138 = vld [vmem:[%s1 + $0x158] sm:$0xff]
    %v139 = vld [vmem:[%s1 + $0x160] sm:$0xff]
    %v140 = vld [vmem:[%s1 + $0x168] sm:$0xff]
    %v141 = vld [vmem:[%s1 + $0x170] sm:$0xff]
    %v142 = vld [vmem:[%s1 + $0x178] sm:$0xff]
    %v143 = vld [vmem:[%s1 + $0x180] sm:$0xff]
    %v144 = vld [vmem:[%s1 + $0x188] sm:$0xff]
    %v145 = vld [vmem:[%s1 + $0x190] sm:$0xff]
    %v146 = vld [vmem:[%s1 + $0x198] sm:$0xff]
    %v147 = vld [vmem:[%s1 + $0x1a0] sm:$0xff]
    %v148 = vld [vmem:[%s1 + $0x1a8] sm:$0xff]
    %v149 = vld [vmem:[%s1 + $0x1b0] sm:$0xff]
    %v150 = vld [vmem:[%s1 + $0x1b8] sm:$0xff]
    %v151 = vld [vmem:[%s1 + $0x1c0] sm:$0xff]
    %v152 = vld [vmem:[%s1 + $0x1c8] sm:$0xff]
    %v153 = vld [vmem:[%s1 + $0x1d0] sm:$0xff]
    %v154 = vld [vmem:[%s1 + $0x1d8] sm:$0xff]
    %v155 = vld [vmem:[%s1 + $0x1e0] sm:$0xff]
    %v156 = vld [vmem:[%s1 + $0x1e8] sm:$0xff]
    %v157 = vld [vmem:[%s1 + $0x1f0] sm:$0xff]
    %v158 = vld [vmem:[%s1 + $0x1f8] sm:$0xff]
    %v160 = vlaneseq
    %v161 = vshrl.u32 %v160, 7
    %v162 = vsub.s32 0, %v161
    %v163 = vrot.slane %v51, %v162
    %vm165 = vcmask 130048
    %v167 = vsel %vm165, %v95, 0
    %v170 = vsel %vm165, %v96, 0
    %v173 = vsel %vm165, %v97, 0
    %v176 = vsel %vm165, %v98, 0
    %v179 = vsel %vm165, %v99, 0
    %v182 = vsel %vm165, %v100, 0
    %v185 = vsel %vm165, %v101, 0
    %v188 = vsel %vm165, %v102, 0
    %v191 = vsel %vm165, %v103, 0
    %v194 = vsel %vm165, %v104, 0
    %v197 = vsel %vm165, %v105, 0
    %v200 = vsel %vm165, %v106, 0
    %v203 = vsel %vm165, %v107, 0
    %v206 = vsel %vm165, %v108, 0
    %v209 = vsel %vm165, %v109, 0
    %v212 = vsel %vm165, %v110, 0
    %v215 = vsel %vm165, %v111, 0
    %v218 = vsel %vm165, %v112, 0
    %v221 = vsel %vm165, %v113, 0
    %v224 = vsel %vm165, %v114, 0
    %v227 = vsel %vm165, %v115, 0
    %v230 = vsel %vm165, %v116, 0
    %v233 = vsel %vm165, %v117, 0
    %v236 = vsel %vm165, %v118, 0
    %v239 = vsel %vm165, %v119, 0
    %v242 = vsel %vm165, %v120, 0
    %v245 = vsel %vm165, %v121, 0
    %v248 = vsel %vm165, %v122, 0
    %v251 = vsel %vm165, %v123, 0
    %v254 = vsel %vm165, %v124, 0
    %v257 = vsel %vm165, %v125, 0
    %v260 = vsel %vm165, %v126, 0
    %v263 = vsel %vm165, %v127, 0
    %v266 = vsel %vm165, %v128, 0
    %v269 = vsel %vm165, %v129, 0
    %v272 = vsel %vm165, %v130, 0
    %v275 = vsel %vm165, %v131, 0
    %v278 = vsel %vm165, %v132, 0
    %v281 = vsel %vm165, %v133, 0
    %v284 = vsel %vm165, %v134, 0
    %v287 = vsel %vm165, %v135, 0
    %v290 = vsel %vm165, %v136, 0
    %v293 = vsel %vm165, %v137, 0
    %v296 = vsel %vm165, %v138, 0
    %v299 = vsel %vm165, %v139, 0
    %v302 = vsel %vm165, %v140, 0
    %v305 = vsel %vm165, %v141, 0
    %v308 = vsel %vm165, %v142, 0
    %v311 = vsel %vm165, %v143, 0
    %v314 = vsel %vm165, %v144, 0
    %v317 = vsel %vm165, %v145, 0
    %v320 = vsel %vm165, %v146, 0
    %v323 = vsel %vm165, %v147, 0
    %v326 = vsel %vm165, %v148, 0
    %v329 = vsel %vm165, %v149, 0
    %v332 = vsel %vm165, %v150, 0
    %v335 = vsel %vm165, %v151, 0
    %v338 = vsel %vm165, %v152, 0
    %v341 = vsel %vm165, %v153, 0
    %v344 = vsel %vm165, %v154, 0
    %v347 = vsel %vm165, %v155, 0
    %v350 = vsel %vm165, %v156, 0
    %v353 = vsel %vm165, %v157, 0
    %v356 = vsel %vm165, %v158, 0
    %358 = vmatprep.subr.mxu0 0.0
    %359 = vmatpush1.msra.mxu0 %v49
    %360 = vmatprep.subr.mxu0 0.0
    %361 = vmatpush1.msra.mxu0 %v50
    %362 = vmatprep.subr.mxu0 0.0
    %363 = vmatpush1.msra.mxu0 0.0
    %364 = vmatprep.subr.mxu0 0.0
    %365 = vmatpush1.msra.mxu0 0.0
    %366 = vmatprep.subr.mxu0 0.0
    %367 = vmatpush1.msra.mxu0 0.0
    %368 = vmatprep.subr.mxu0 0.0
    %369 = vmatpush1.msra.mxu0 0.0
    %370 = vmatprep.subr.mxu0 0.0
    %371 = vmatpush1.msra.mxu0 0.0
    %372 = vmatprep.subr.mxu0 0.0
    %373 = vmatpush1.msra.mxu0 0.0
    %374 = vmatprep.subr.mxu0 0.0
    %375 = vmatpush1.msra.mxu0 0.0
    %376 = vmatprep.subr.mxu0 0.0
    %377 = vmatpush1.msra.mxu0 0.0
    %378 = vmatprep.subr.mxu0 0.0
    %379 = vmatpush1.msra.mxu0 0.0
    %380 = vmatprep.subr.mxu0 0.0
    %381 = vmatpush1.msra.mxu0 0.0
    %382 = vmatprep.subr.mxu0 0.0
    %383 = vmatpush1.msra.mxu0 0.0
    %384 = vmatprep.subr.mxu0 0.0
    %385 = vmatpush1.msra.mxu0 0.0
    %386 = vmatprep.subr.mxu0 0.0
    %387 = vmatpush1.msra.mxu0 0.0
    %388 = vmatprep.subr.mxu0 0.0
    %389 = vmatpush1.msra.mxu0 0.0
    %390 = vmatprep.subr.mxu0 0.0
    %391 = vmatpush1.msra.mxu0 0.0
    %392 = vmatprep.subr.mxu0 0.0
    %393 = vmatpush1.msra.mxu0 0.0
    %394 = vmatprep.subr.mxu0 0.0
    %395 = vmatpush1.msra.mxu0 0.0
    %396 = vmatprep.subr.mxu0 0.0
    %397 = vmatpush1.msra.mxu0 0.0
    %398 = vmatprep.subr.mxu0 0.0
    %399 = vmatpush1.msra.mxu0 0.0
    %400 = vmatprep.subr.mxu0 0.0
    %401 = vmatpush1.msra.mxu0 0.0
    %402 = vmatprep.subr.mxu0 0.0
    %403 = vmatpush1.msra.mxu0 0.0
    %404 = vmatprep.subr.mxu0 0.0
    %405 = vmatpush1.msra.mxu0 0.0
    %406 = vmatprep.subr.mxu0 0.0
    %407 = vmatpush1.msra.mxu0 0.0
    %408 = vmatprep.subr.mxu0 0.0
    %409 = vmatpush1.msra.mxu0 0.0
    %410 = vmatprep.subr.mxu0 0.0
    %411 = vmatpush1.msra.mxu0 0.0
    %412 = vmatprep.subr.mxu0 0.0
    %413 = vmatpush1.msra.mxu0 0.0
    %414 = vmatprep.subr.mxu0 0.0
    %415 = vmatpush1.msra.mxu0 0.0
    %416 = vmatprep.subr.mxu0 0.0
    %417 = vmatpush1.msra.mxu0 0.0
    %418 = vmatprep.subr.mxu0 0.0
    %419 = vmatpush1.msra.mxu0 0.0
    %420 = vmatprep.subr.mxu0 0.0
    %421 = vmatpush1.msra.mxu0 0.0
    %422 = vmatprep.mubr.f32.mxu0 0.0
    %423 = vmatmul.mubr.f32.gmra.mrb[0].mxu0 %v167
    %v424 = vpop.f32.mrb[0].mxu0
    %v425 = vadd.f32 %v163, %v424
    %v426 = vpop.f32.mrb[0].mxu0
    %427 = vmatprep.mubr.f32.mxu0 0.0
    %428 = vmatmul.mubr.f32.gmra.mrb[0].mxu0 %v170
    %v429 = vpop.f32.mrb[0].mxu0
    %v430 = vadd.f32 %v163, %v429
    %v431 = vpop.f32.mrb[0].mxu0
    %432 = vmatprep.mubr.f32.mxu0 0.0
    %433 = vmatmul.mubr.f32.gmra.mrb[0].mxu0 %v173
    %v434 = vpop.f32.mrb[0].mxu0
    %v435 = vadd.f32 %v163, %v434
    %v436 = vpop.f32.mrb[0].mxu0
    %437 = vmatprep.mubr.f32.mxu0 0.0
    %438 = vmatmul.mubr.f32.gmra.mrb[0].mxu0 %v176
    %v439 = vpop.f32.mrb[0].mxu0
    %v440 = vadd.f32 %v163, %v439
    %v441 = vpop.f32.mrb[0].mxu0
    %442 = vmatprep.mubr.f32.mxu0 0.0
    %443 = vmatmul.mubr.f32.gmra.mrb[0].mxu0 %v179
    %v444 = vpop.f32.mrb[0].mxu0
    %v445 = vadd.f32 %v163, %v444
    %v446 = vpop.f32.mrb[0].mxu0
    %447 = vmatprep.mubr.f32.mxu0 0.0
    %448 = vmatmul.mubr.f32.gmra.mrb[0].mxu0 %v182
    %v449 = vpop.f32.mrb[0].mxu0
    %v450 = vadd.f32 %v163, %v449
    %v451 = vpop.f32.mrb[0].mxu0
    %452 = vmatprep.mubr.f32.mxu0 0.0
    %453 = vmatmul.mubr.f32.gmra.mrb[0].mxu0 %v185
    %v454 = vpop.f32.mrb[0].mxu0
    %v455 = vadd.f32 %v163, %v454
    %v456 = vpop.f32.mrb[0].mxu0
    %457 = vmatprep.mubr.f32.mxu0 0.0
    %458 = vmatmul.mubr.f32.gmra.mrb[0].mxu0 %v188
    %v459 = vpop.f32.mrb[0].mxu0
    %v460 = vadd.f32 %v163, %v459
    %v461 = vpop.f32.mrb[0].mxu0
    %462 = vmatprep.mubr.f32.mxu0 0.0
    %463 = vmatmul.mubr.f32.gmra.mrb[0].mxu0 %v191
    %v464 = vpop.f32.mrb[0].mxu0
    %v465 = vadd.f32 %v163, %v464
    %v466 = vpop.f32.mrb[0].mxu0
    %467 = vmatprep.mubr.f32.mxu0 0.0
    %468 = vmatmul.mubr.f32.gmra.mrb[0].mxu0 %v194
    %v469 = vpop.f32.mrb[0].mxu0
    %v470 = vadd.f32 %v163, %v469
    %v471 = vpop.f32.mrb[0].mxu0
    %472 = vmatprep.mubr.f32.mxu0 0.0
    %473 = vmatmul.mubr.f32.gmra.mrb[0].mxu0 %v197
    %v474 = vpop.f32.mrb[0].mxu0
    %v475 = vadd.f32 %v163, %v474
    %v476 = vpop.f32.mrb[0].mxu0
    %477 = vmatprep.mubr.f32.mxu0 0.0
    %478 = vmatmul.mubr.f32.gmra.mrb[0].mxu0 %v200
    %v479 = vpop.f32.mrb[0].mxu0
    %v480 = vadd.f32 %v163, %v479
    %v481 = vpop.f32.mrb[0].mxu0
    %482 = vmatprep.mubr.f32.mxu0 0.0
    %483 = vmatmul.mubr.f32.gmra.mrb[0].mxu0 %v203
    %v484 = vpop.f32.mrb[0].mxu0
    %v485 = vadd.f32 %v163, %v484
    %v486 = vpop.f32.mrb[0].mxu0
    %487 = vmatprep.mubr.f32.mxu0 0.0
    %488 = vmatmul.mubr.f32.gmra.mrb[0].mxu0 %v206
    %v489 = vpop.f32.mrb[0].mxu0
    %v490 = vadd.f32 %v163, %v489
    %v491 = vpop.f32.mrb[0].mxu0
    %492 = vmatprep.mubr.f32.mxu0 0.0
    %493 = vmatmul.mubr.f32.gmra.mrb[0].mxu0 %v209
    %v494 = vpop.f32.mrb[0].mxu0
    %v495 = vadd.f32 %v163, %v494
    %v496 = vpop.f32.mrb[0].mxu0
    %497 = vmatprep.mubr.f32.mxu0 0.0
    %498 = vmatmul.mubr.f32.gmra.mrb[0].mxu0 %v212
    %v499 = vpop.f32.mrb[0].mxu0
    %v500 = vadd.f32 %v163, %v499
    %v501 = vpop.f32.mrb[0].mxu0
    %502 = vmatprep.mubr.f32.mxu0 0.0
    %503 = vmatmul.mubr.f32.gmra.mrb[0].mxu0 %v215
    %v504 = vpop.f32.mrb[0].mxu0
    %v505 = vadd.f32 %v163, %v504
    %v506 = vpop.f32.mrb[0].mxu0
    %507 = vmatprep.mubr.f32.mxu0 0.0
    %508 = vmatmul.mubr.f32.gmra.mrb[0].mxu0 %v218
    %v509 = vpop.f32.mrb[0].mxu0
    %v510 = vadd.f32 %v163, %v509
    %v511 = vpop.f32.mrb[0].mxu0
    %512 = vmatprep.mubr.f32.mxu0 0.0
    %513 = vmatmul.mubr.f32.gmra.mrb[0].mxu0 %v221
    %v514 = vpop.f32.mrb[0].mxu0
    %v515 = vadd.f32 %v163, %v514
    %v516 = vpop.f32.mrb[0].mxu0
    %517 = vmatprep.mubr.f32.mxu0 0.0
    %518 = vmatmul.mubr.f32.gmra.mrb[0].mxu0 %v224
    %v519 = vpop.f32.mrb[0].mxu0
    %v520 = vadd.f32 %v163, %v519
    %v521 = vpop.f32.mrb[0].mxu0
    %522 = vmatprep.mubr.f32.mxu0 0.0
    %523 = vmatmul.mubr.f32.gmra.mrb[0].mxu0 %v227
    %v524 = vpop.f32.mrb[0].mxu0
    %v525 = vadd.f32 %v163, %v524
    %v526 = vpop.f32.mrb[0].mxu0
    %527 = vmatprep.mubr.f32.mxu0 0.0
    %528 = vmatmul.mubr.f32.gmra.mrb[0].mxu0 %v230
    %v529 = vpop.f32.mrb[0].mxu0
    %v530 = vadd.f32 %v163, %v529
    %v531 = vpop.f32.mrb[0].mxu0
    %532 = vmatprep.mubr.f32.mxu0 0.0
    %533 = vmatmul.mubr.f32.gmra.mrb[0].mxu0 %v233
    %v534 = vpop.f32.mrb[0].mxu0
    %v535 = vadd.f32 %v163, %v534
    %v536 = vpop.f32.mrb[0].mxu0
    %537 = vmatprep.mubr.f32.mxu0 0.0
    %538 = vmatmul.mubr.f32.gmra.mrb[0].mxu0 %v236
    %v539 = vpop.f32.mrb[0].mxu0
    %v540 = vadd.f32 %v163, %v539
    %v541 = vpop.f32.mrb[0].mxu0
    %542 = vmatprep.mubr.f32.mxu0 0.0
    %543 = vmatmul.mubr.f32.gmra.mrb[0].mxu0 %v239
    %v544 = vpop.f32.mrb[0].mxu0
    %v545 = vadd.f32 %v163, %v544
    %v546 = vpop.f32.mrb[0].mxu0
    %547 = vmatprep.mubr.f32.mxu0 0.0
    %548 = vmatmul.mubr.f32.gmra.mrb[0].mxu0 %v242
    %v549 = vpop.f32.mrb[0].mxu0
    %v550 = vadd.f32 %v163, %v549
    %v551 = vpop.f32.mrb[0].mxu0
    %552 = vmatprep.mubr.f32.mxu0 0.0
    %553 = vmatmul.mubr.f32.gmra.mrb[0].mxu0 %v245
    %v554 = vpop.f32.mrb[0].mxu0
    %v555 = vadd.f32 %v163, %v554
    %v556 = vpop.f32.mrb[0].mxu0
    %557 = vmatprep.mubr.f32.mxu0 0.0
    %558 = vmatmul.mubr.f32.gmra.mrb[0].mxu0 %v248
    %v559 = vpop.f32.mrb[0].mxu0
    %v560 = vadd.f32 %v163, %v559
    %v561 = vpop.f32.mrb[0].mxu0
    %562 = vmatprep.mubr.f32.mxu0 0.0
    %563 = vmatmul.mubr.f32.gmra.mrb[0].mxu0 %v251
    %v564 = vpop.f32.mrb[0].mxu0
    %v565 = vadd.f32 %v163, %v564
    %v566 = vpop.f32.mrb[0].mxu0
    %567 = vmatprep.mubr.f32.mxu0 0.0
    %568 = vmatmul.mubr.f32.gmra.mrb[0].mxu0 %v254
    %v569 = vpop.f32.mrb[0].mxu0
    %v570 = vadd.f32 %v163, %v569
    %v571 = vpop.f32.mrb[0].mxu0
    %572 = vmatprep.mubr.f32.mxu0 0.0
    %573 = vmatmul.mubr.f32.gmra.mrb[0].mxu0 %v257
    %v574 = vpop.f32.mrb[0].mxu0
    %v575 = vadd.f32 %v163, %v574
    %v576 = vpop.f32.mrb[0].mxu0
    %577 = vmatprep.mubr.f32.mxu0 0.0
    %578 = vmatmul.mubr.f32.gmra.mrb[0].mxu0 %v260
    %v579 = vpop.f32.mrb[0].mxu0
    %v580 = vadd.f32 %v163, %v579
    %v581 = vpop.f32.mrb[0].mxu0
    %582 = vmatprep.mubr.f32.mxu0 0.0
    %583 = vmatmul.mubr.f32.gmra.mrb[0].mxu0 %v263
    %v584 = vpop.f32.mrb[0].mxu0
    %v585 = vadd.f32 %v163, %v584
    %v586 = vpop.f32.mrb[0].mxu0
    %587 = vmatprep.mubr.f32.mxu0 0.0
    %588 = vmatmul.mubr.f32.gmra.mrb[0].mxu0 %v266
    %v589 = vpop.f32.mrb[0].mxu0
    %v590 = vadd.f32 %v163, %v589
    %v591 = vpop.f32.mrb[0].mxu0
    %592 = vmatprep.mubr.f32.mxu0 0.0
    %593 = vmatmul.mubr.f32.gmra.mrb[0].mxu0 %v269
    %v594 = vpop.f32.mrb[0].mxu0
    %v595 = vadd.f32 %v163, %v594
    %v596 = vpop.f32.mrb[0].mxu0
    %597 = vmatprep.mubr.f32.mxu0 0.0
    %598 = vmatmul.mubr.f32.gmra.mrb[0].mxu0 %v272
    %v599 = vpop.f32.mrb[0].mxu0
    %v600 = vadd.f32 %v163, %v599
    %v601 = vpop.f32.mrb[0].mxu0
    %602 = vmatprep.mubr.f32.mxu0 0.0
    %603 = vmatmul.mubr.f32.gmra.mrb[0].mxu0 %v275
    %v604 = vpop.f32.mrb[0].mxu0
    %v605 = vadd.f32 %v163, %v604
    %v606 = vpop.f32.mrb[0].mxu0
    %607 = vmatprep.mubr.f32.mxu0 0.0
    %608 = vmatmul.mubr.f32.gmra.mrb[0].mxu0 %v278
    %v609 = vpop.f32.mrb[0].mxu0
    %v610 = vadd.f32 %v163, %v609
    %v611 = vpop.f32.mrb[0].mxu0
    %612 = vmatprep.mubr.f32.mxu0 0.0
    %613 = vmatmul.mubr.f32.gmra.mrb[0].mxu0 %v281
    %v614 = vpop.f32.mrb[0].mxu0
    %v615 = vadd.f32 %v163, %v614
    %v616 = vpop.f32.mrb[0].mxu0
    %617 = vmatprep.mubr.f32.mxu0 0.0
    %618 = vmatmul.mubr.f32.gmra.mrb[0].mxu0 %v284
    %v619 = vpop.f32.mrb[0].mxu0
    %v620 = vadd.f32 %v163, %v619
    %v621 = vpop.f32.mrb[0].mxu0
    %622 = vmatprep.mubr.f32.mxu0 0.0
    %623 = vmatmul.mubr.f32.gmra.mrb[0].mxu0 %v287
    %v624 = vpop.f32.mrb[0].mxu0
    %v625 = vadd.f32 %v163, %v624
    %v626 = vpop.f32.mrb[0].mxu0
    %627 = vmatprep.mubr.f32.mxu0 0.0
    %628 = vmatmul.mubr.f32.gmra.mrb[0].mxu0 %v290
    %v629 = vpop.f32.mrb[0].mxu0
    %v630 = vadd.f32 %v163, %v629
    %v631 = vpop.f32.mrb[0].mxu0
    %632 = vmatprep.mubr.f32.mxu0 0.0
    %633 = vmatmul.mubr.f32.gmra.mrb[0].mxu0 %v293
    %v634 = vpop.f32.mrb[0].mxu0
    %v635 = vadd.f32 %v163, %v634
    %v636 = vpop.f32.mrb[0].mxu0
    %637 = vmatprep.mubr.f32.mxu0 0.0
    %638 = vmatmul.mubr.f32.gmra.mrb[0].mxu0 %v296
    %v639 = vpop.f32.mrb[0].mxu0
    %v640 = vadd.f32 %v163, %v639
    %v641 = vpop.f32.mrb[0].mxu0
    %642 = vmatprep.mubr.f32.mxu0 0.0
    %643 = vmatmul.mubr.f32.gmra.mrb[0].mxu0 %v299
    %v644 = vpop.f32.mrb[0].mxu0
    %v645 = vadd.f32 %v163, %v644
    %v646 = vpop.f32.mrb[0].mxu0
    %647 = vmatprep.mubr.f32.mxu0 0.0
    %648 = vmatmul.mubr.f32.gmra.mrb[0].mxu0 %v302
    %v649 = vpop.f32.mrb[0].mxu0
    %v650 = vadd.f32 %v163, %v649
    %v651 = vpop.f32.mrb[0].mxu0
    %652 = vmatprep.mubr.f32.mxu0 0.0
    %653 = vmatmul.mubr.f32.gmra.mrb[0].mxu0 %v305
    %v654 = vpop.f32.mrb[0].mxu0
    %v655 = vadd.f32 %v163, %v654
    %v656 = vpop.f32.mrb[0].mxu0
    %657 = vmatprep.mubr.f32.mxu0 0.0
    %658 = vmatmul.mubr.f32.gmra.mrb[0].mxu0 %v308
    %v659 = vpop.f32.mrb[0].mxu0
    %v660 = vadd.f32 %v163, %v659
    %v661 = vpop.f32.mrb[0].mxu0
    %662 = vmatprep.mubr.f32.mxu0 0.0
    %663 = vmatmul.mubr.f32.gmra.mrb[0].mxu0 %v311
    %v664 = vpop.f32.mrb[0].mxu0
    %v665 = vadd.f32 %v163, %v664
    %v666 = vpop.f32.mrb[0].mxu0
    %667 = vmatprep.mubr.f32.mxu0 0.0
    %668 = vmatmul.mubr.f32.gmra.mrb[0].mxu0 %v314
    %v669 = vpop.f32.mrb[0].mxu0
    %v670 = vadd.f32 %v163, %v669
    %v671 = vpop.f32.mrb[0].mxu0
    %672 = vmatprep.mubr.f32.mxu0 0.0
    %673 = vmatmul.mubr.f32.gmra.mrb[0].mxu0 %v317
    %v674 = vpop.f32.mrb[0].mxu0
    %v675 = vadd.f32 %v163, %v674
    %v676 = vpop.f32.mrb[0].mxu0
    %677 = vmatprep.mubr.f32.mxu0 0.0
    %678 = vmatmul.mubr.f32.gmra.mrb[0].mxu0 %v320
    %v679 = vpop.f32.mrb[0].mxu0
    %v680 = vadd.f32 %v163, %v679
    %v681 = vpop.f32.mrb[0].mxu0
    %682 = vmatprep.mubr.f32.mxu0 0.0
    %683 = vmatmul.mubr.f32.gmra.mrb[0].mxu0 %v323
    %v684 = vpop.f32.mrb[0].mxu0
    %v685 = vadd.f32 %v163, %v684
    %v686 = vpop.f32.mrb[0].mxu0
    %687 = vmatprep.mubr.f32.mxu0 0.0
    %688 = vmatmul.mubr.f32.gmra.mrb[0].mxu0 %v326
    %v689 = vpop.f32.mrb[0].mxu0
    %v690 = vadd.f32 %v163, %v689
    %v691 = vpop.f32.mrb[0].mxu0
    %692 = vmatprep.mubr.f32.mxu0 0.0
    %693 = vmatmul.mubr.f32.gmra.mrb[0].mxu0 %v329
    %v694 = vpop.f32.mrb[0].mxu0
    %v695 = vadd.f32 %v163, %v694
    %v696 = vpop.f32.mrb[0].mxu0
    %697 = vmatprep.mubr.f32.mxu0 0.0
    %698 = vmatmul.mubr.f32.gmra.mrb[0].mxu0 %v332
    %v699 = vpop.f32.mrb[0].mxu0
    %v700 = vadd.f32 %v163, %v699
    %v701 = vpop.f32.mrb[0].mxu0
    %702 = vmatprep.mubr.f32.mxu0 0.0
    %703 = vmatmul.mubr.f32.gmra.mrb[0].mxu0 %v335
    %v704 = vpop.f32.mrb[0].mxu0
    %v705 = vadd.f32 %v163, %v704
    %v706 = vpop.f32.mrb[0].mxu0
    %707 = vmatprep.mubr.f32.mxu0 0.0
    %708 = vmatmul.mubr.f32.gmra.mrb[0].mxu0 %v338
    %v709 = vpop.f32.mrb[0].mxu0
    %v710 = vadd.f32 %v163, %v709
    %v711 = vpop.f32.mrb[0].mxu0
    %712 = vmatprep.mubr.f32.mxu0 0.0
    %713 = vmatmul.mubr.f32.gmra.mrb[0].mxu0 %v341
    %v714 = vpop.f32.mrb[0].mxu0
    %v715 = vadd.f32 %v163, %v714
    %v716 = vpop.f32.mrb[0].mxu0
    %717 = vmatprep.mubr.f32.mxu0 0.0
    %718 = vmatmul.mubr.f32.gmra.mrb[0].mxu0 %v344
    %v719 = vpop.f32.mrb[0].mxu0
    %v720 = vadd.f32 %v163, %v719
    %v721 = vpop.f32.mrb[0].mxu0
    %722 = vmatprep.mubr.f32.mxu0 0.0
    %723 = vmatmul.mubr.f32.gmra.mrb[0].mxu0 %v347
    %v724 = vpop.f32.mrb[0].mxu0
    %v725 = vadd.f32 %v163, %v724
    %v726 = vpop.f32.mrb[0].mxu0
    %727 = vmatprep.mubr.f32.mxu0 0.0
    %728 = vmatmul.mubr.f32.gmra.mrb[0].mxu0 %v350
    %v729 = vpop.f32.mrb[0].mxu0
    %v730 = vadd.f32 %v163, %v729
    %v731 = vpop.f32.mrb[0].mxu0
    %732 = vmatprep.mubr.f32.mxu0 0.0
    %733 = vmatmul.mubr.f32.gmra.mrb[0].mxu0 %v353
    %v734 = vpop.f32.mrb[0].mxu0
    %v735 = vadd.f32 %v163, %v734
    %v736 = vpop.f32.mrb[0].mxu0
    %737 = vmatprep.mubr.f32.mxu0 0.0
    %738 = vmatmul.mubr.f32.gmra.mrb[0].mxu0 %v356
    %v739 = vpop.f32.mrb[0].mxu0
    %v740 = vadd.f32 %v163, %v739
    %v741 = vpop.f32.mrb[0].mxu0
    %742 = vdwg.mxu0
    %v743 = vmax.f32 %v425, 0.0
    %v744 = vmax.f32 %v430, 0.0
    %v745 = vmax.f32 %v435, 0.0
    %v746 = vmax.f32 %v440, 0.0
    %v747 = vmax.f32 %v445, 0.0
    %v748 = vmax.f32 %v450, 0.0
    %v749 = vmax.f32 %v455, 0.0
    %v750 = vmax.f32 %v460, 0.0
    %v751 = vmax.f32 %v465, 0.0
    %v752 = vmax.f32 %v470, 0.0
    %v753 = vmax.f32 %v475, 0.0
    %v754 = vmax.f32 %v480, 0.0
    %v755 = vmax.f32 %v485, 0.0
    %v756 = vmax.f32 %v490, 0.0
    %v757 = vmax.f32 %v495, 0.0
    %v758 = vmax.f32 %v500, 0.0
    %v759 = vmax.f32 %v505, 0.0
    %v760 = vmax.f32 %v510, 0.0
    %v761 = vmax.f32 %v515, 0.0
    %v762 = vmax.f32 %v520, 0.0
    %v763 = vmax.f32 %v525, 0.0
    %v764 = vmax.f32 %v530, 0.0
    %v765 = vmax.f32 %v535, 0.0
    %v766 = vmax.f32 %v540, 0.0
    %v767 = vmax.f32 %v545, 0.0
    %v768 = vmax.f32 %v550, 0.0
    %v769 = vmax.f32 %v555, 0.0
    %v770 = vmax.f32 %v560, 0.0
    %v771 = vmax.f32 %v565, 0.0
    %v772 = vmax.f32 %v570, 0.0
    %v773 = vmax.f32 %v575, 0.0
    %v774 = vmax.f32 %v580, 0.0
    %v775 = vmax.f32 %v585, 0.0
    %v776 = vmax.f32 %v590, 0.0
    %v777 = vmax.f32 %v595, 0.0
    %v778 = vmax.f32 %v600, 0.0
    %v779 = vmax.f32 %v605, 0.0
    %v780 = vmax.f32 %v610, 0.0
    %v781 = vmax.f32 %v615, 0.0
    %v782 = vmax.f32 %v620, 0.0
    %v783 = vmax.f32 %v625, 0.0
    %v784 = vmax.f32 %v630, 0.0
    %v785 = vmax.f32 %v635, 0.0
    %v786 = vmax.f32 %v640, 0.0
    %v787 = vmax.f32 %v645, 0.0
    %v788 = vmax.f32 %v650, 0.0
    %v789 = vmax.f32 %v655, 0.0
    %v790 = vmax.f32 %v660, 0.0
    %v791 = vmax.f32 %v665, 0.0
    %v792 = vmax.f32 %v670, 0.0
    %v793 = vmax.f32 %v675, 0.0
    %v794 = vmax.f32 %v680, 0.0
    %v795 = vmax.f32 %v685, 0.0
    %v796 = vmax.f32 %v690, 0.0
    %v797 = vmax.f32 %v695, 0.0
    %v798 = vmax.f32 %v700, 0.0
    %v799 = vmax.f32 %v705, 0.0
    %v800 = vmax.f32 %v710, 0.0
    %v801 = vmax.f32 %v715, 0.0
    %v802 = vmax.f32 %v720, 0.0
    %v803 = vmax.f32 %v725, 0.0
    %v804 = vmax.f32 %v730, 0.0
    %v805 = vmax.f32 %v735, 0.0
    %v806 = vmax.f32 %v740, 0.0
    %v808 = vlaneseq
    %v809 = vshrl.u32 %v808, 7
    %v810 = vsub.s32 0, %v809
    %v811 = vrot.slane %v68, %v810
    %813 = vmatprep.subr.mxu0 0.0
    %814 = vmatpush1.msra.mxu0 %v52
    %815 = vmatprep.subr.mxu0 0.0
    %816 = vmatpush1.msra.mxu0 %v53
    %817 = vmatprep.subr.mxu0 0.0
    %818 = vmatpush1.msra.mxu0 %v54
    %819 = vmatprep.subr.mxu0 0.0
    %820 = vmatpush1.msra.mxu0 %v55
    %821 = vmatprep.subr.mxu0 0.0
    %822 = vmatpush1.msra.mxu0 %v56
    %823 = vmatprep.subr.mxu0 0.0
    %824 = vmatpush1.msra.mxu0 %v57
    %825 = vmatprep.subr.mxu0 0.0
    %826 = vmatpush1.msra.mxu0 %v58
    %827 = vmatprep.subr.mxu0 0.0
    %828 = vmatpush1.msra.mxu0 %v59
    %829 = vmatprep.subr.mxu0 0.0
    %830 = vmatpush1.msra.mxu0 %v60
    %831 = vmatprep.subr.mxu0 0.0
    %832 = vmatpush1.msra.mxu0 %v61
    %833 = vmatprep.subr.mxu0 0.0
    %834 = vmatpush1.msra.mxu0 %v62
    %835 = vmatprep.subr.mxu0 0.0
    %836 = vmatpush1.msra.mxu0 %v63
    %837 = vmatprep.subr.mxu0 0.0
    %838 = vmatpush1.msra.mxu0 %v64
    %839 = vmatprep.subr.mxu0 0.0
    %840 = vmatpush1.msra.mxu0 %v65
    %841 = vmatprep.subr.mxu0 0.0
    %842 = vmatpush1.msra.mxu0 %v66
    %843 = vmatprep.subr.mxu0 0.0
    %844 = vmatpush1.msra.mxu0 %v67
    %845 = vmatprep.subr.mxu0 0.0
    %846 = vmatpush1.msra.mxu0 0.0
    %847 = vmatprep.subr.mxu0 0.0
    %848 = vmatpush1.msra.mxu0 0.0
    %849 = vmatprep.subr.mxu0 0.0
    %850 = vmatpush1.msra.mxu0 0.0
    %851 = vmatprep.subr.mxu0 0.0
    %852 = vmatpush1.msra.mxu0 0.0
    %853 = vmatprep.subr.mxu0 0.0
    %854 = vmatpush1.msra.mxu0 0.0
    %855 = vmatprep.subr.mxu0 0.0
    %856 = vmatpush1.msra.mxu0 0.0
    %857 = vmatprep.subr.mxu0 0.0
    %858 = vmatpush1.msra.mxu0 0.0
    %859 = vmatprep.subr.mxu0 0.0
    %860 = vmatpush1.msra.mxu0 0.0
    %861 = vmatprep.subr.mxu0 0.0
    %862 = vmatpush1.msra.mxu0 0.0
    %863 = vmatprep.subr.mxu0 0.0
    %864 = vmatpush1.msra.mxu0 0.0
    %865 = vmatprep.subr.mxu0 0.0
    %866 = vmatpush1.msra.mxu0 0.0
    %867 = vmatprep.subr.mxu0 0.0
    %868 = vmatpush1.msra.mxu0 0.0
    %869 = vmatprep.subr.mxu0 0.0
    %870 = vmatpush1.msra.mxu0 0.0
    %871 = vmatprep.subr.mxu0 0.0
    %872 = vmatpush1.msra.mxu0 0.0
    %873 = vmatprep.subr.mxu0 0.0
    %874 = vmatpush1.msra.mxu0 0.0
    %875 = vmatprep.subr.mxu0 0.0
    %876 = vmatpush1.msra.mxu0 0.0
    %877 = vmatprep.mubr.f32.mxu0 0.0
    %878 = vmatmul.mubr.f32.gmra.mrb[0].mxu0 %v743
    %v879 = vpop.f32.mrb[0].mxu0
    %v880 = vadd.f32 %v811, %v879
    %v881 = vpop.f32.mrb[0].mxu0
    %882 = vmatprep.mubr.f32.mxu0 0.0
    %883 = vmatmul.mubr.f32.gmra.mrb[0].mxu0 %v744
    %v884 = vpop.f32.mrb[0].mxu0
    %v885 = vadd.f32 %v811, %v884
    %v886 = vpop.f32.mrb[0].mxu0
    %887 = vmatprep.mubr.f32.mxu0 0.0
    %888 = vmatmul.mubr.f32.gmra.mrb[0].mxu0 %v745
    %v889 = vpop.f32.mrb[0].mxu0
    %v890 = vadd.f32 %v811, %v889
    %v891 = vpop.f32.mrb[0].mxu0
    %892 = vmatprep.mubr.f32.mxu0 0.0
    %893 = vmatmul.mubr.f32.gmra.mrb[0].mxu0 %v746
    %v894 = vpop.f32.mrb[0].mxu0
    %v895 = vadd.f32 %v811, %v894
    %v896 = vpop.f32.mrb[0].mxu0
    %897 = vmatprep.mubr.f32.mxu0 0.0
    %898 = vmatmul.mubr.f32.gmra.mrb[0].mxu0 %v747
    %v899 = vpop.f32.mrb[0].mxu0
    %v900 = vadd.f32 %v811, %v899
    %v901 = vpop.f32.mrb[0].mxu0
    %902 = vmatprep.mubr.f32.mxu0 0.0
    %903 = vmatmul.mubr.f32.gmra.mrb[0].mxu0 %v748
    %v904 = vpop.f32.mrb[0].mxu0
    %v905 = vadd.f32 %v811, %v904
    %v906 = vpop.f32.mrb[0].mxu0
    %907 = vmatprep.mubr.f32.mxu0 0.0
    %908 = vmatmul.mubr.f32.gmra.mrb[0].mxu0 %v749
    %v909 = vpop.f32.mrb[0].mxu0
    %v910 = vadd.f32 %v811, %v909
    %v911 = vpop.f32.mrb[0].mxu0
    %912 = vmatprep.mubr.f32.mxu0 0.0
    %913 = vmatmul.mubr.f32.gmra.mrb[0].mxu0 %v750
    %v914 = vpop.f32.mrb[0].mxu0
    %v915 = vadd.f32 %v811, %v914
    %v916 = vpop.f32.mrb[0].mxu0
    %917 = vmatprep.mubr.f32.mxu0 0.0
    %918 = vmatmul.mubr.f32.gmra.mrb[0].mxu0 %v751
    %v919 = vpop.f32.mrb[0].mxu0
    %v920 = vadd.f32 %v811, %v919
    %v921 = vpop.f32.mrb[0].mxu0
    %922 = vmatprep.mubr.f32.mxu0 0.0
    %923 = vmatmul.mubr.f32.gmra.mrb[0].mxu0 %v752
    %v924 = vpop.f32.mrb[0].mxu0
    %v925 = vadd.f32 %v811, %v924
    %v926 = vpop.f32.mrb[0].mxu0
    %927 = vmatprep.mubr.f32.mxu0 0.0
    %928 = vmatmul.mubr.f32.gmra.mrb[0].mxu0 %v753
    %v929 = vpop.f32.mrb[0].mxu0
    %v930 = vadd.f32 %v811, %v929
    %v931 = vpop.f32.mrb[0].mxu0
    %932 = vmatprep.mubr.f32.mxu0 0.0
    %933 = vmatmul.mubr.f32.gmra.mrb[0].mxu0 %v754
    %v934 = vpop.f32.mrb[0].mxu0
    %v935 = vadd.f32 %v811, %v934
    %v936 = vpop.f32.mrb[0].mxu0
    %937 = vmatprep.mubr.f32.mxu0 0.0
    %938 = vmatmul.mubr.f32.gmra.mrb[0].mxu0 %v755
    %v939 = vpop.f32.mrb[0].mxu0
    %v940 = vadd.f32 %v811, %v939
    %v941 = vpop.f32.mrb[0].mxu0
    %942 = vmatprep.mubr.f32.mxu0 0.0
    %943 = vmatmul.mubr.f32.gmra.mrb[0].mxu0 %v756
    %v944 = vpop.f32.mrb[0].mxu0
    %v945 = vadd.f32 %v811, %v944
    %v946 = vpop.f32.mrb[0].mxu0
    %947 = vmatprep.mubr.f32.mxu0 0.0
    %948 = vmatmul.mubr.f32.gmra.mrb[0].mxu0 %v757
    %v949 = vpop.f32.mrb[0].mxu0
    %v950 = vadd.f32 %v811, %v949
    %v951 = vpop.f32.mrb[0].mxu0
    %952 = vmatprep.mubr.f32.mxu0 0.0
    %953 = vmatmul.mubr.f32.gmra.mrb[0].mxu0 %v758
    %v954 = vpop.f32.mrb[0].mxu0
    %v955 = vadd.f32 %v811, %v954
    %v956 = vpop.f32.mrb[0].mxu0
    %957 = vmatprep.mubr.f32.mxu0 0.0
    %958 = vmatmul.mubr.f32.gmra.mrb[0].mxu0 %v759
    %v959 = vpop.f32.mrb[0].mxu0
    %v960 = vadd.f32 %v811, %v959
    %v961 = vpop.f32.mrb[0].mxu0
    %962 = vmatprep.mubr.f32.mxu0 0.0
    %963 = vmatmul.mubr.f32.gmra.mrb[0].mxu0 %v760
    %v964 = vpop.f32.mrb[0].mxu0
    %v965 = vadd.f32 %v811, %v964
    %v966 = vpop.f32.mrb[0].mxu0
    %967 = vmatprep.mubr.f32.mxu0 0.0
    %968 = vmatmul.mubr.f32.gmra.mrb[0].mxu0 %v761
    %v969 = vpop.f32.mrb[0].mxu0
    %v970 = vadd.f32 %v811, %v969
    %v971 = vpop.f32.mrb[0].mxu0
    %972 = vmatprep.mubr.f32.mxu0 0.0
    %973 = vmatmul.mubr.f32.gmra.mrb[0].mxu0 %v762
    %v974 = vpop.f32.mrb[0].mxu0
    %v975 = vadd.f32 %v811, %v974
    %v976 = vpop.f32.mrb[0].mxu0
    %977 = vmatprep.mubr.f32.mxu0 0.0
    %978 = vmatmul.mubr.f32.gmra.mrb[0].mxu0 %v763
    %v979 = vpop.f32.mrb[0].mxu0
    %v980 = vadd.f32 %v811, %v979
    %v981 = vpop.f32.mrb[0].mxu0
    %982 = vmatprep.mubr.f32.mxu0 0.0
    %983 = vmatmul.mubr.f32.gmra.mrb[0].mxu0 %v764
    %v984 = vpop.f32.mrb[0].mxu0
    %v985 = vadd.f32 %v811, %v984
    %v986 = vpop.f32.mrb[0].mxu0
    %987 = vmatprep.mubr.f32.mxu0 0.0
    %988 = vmatmul.mubr.f32.gmra.mrb[0].mxu0 %v765
    %v989 = vpop.f32.mrb[0].mxu0
    %v990 = vadd.f32 %v811, %v989
    %v991 = vpop.f32.mrb[0].mxu0
    %992 = vmatprep.mubr.f32.mxu0 0.0
    %993 = vmatmul.mubr.f32.gmra.mrb[0].mxu0 %v766
    %v994 = vpop.f32.mrb[0].mxu0
    %v995 = vadd.f32 %v811, %v994
    %v996 = vpop.f32.mrb[0].mxu0
    %997 = vmatprep.mubr.f32.mxu0 0.0
    %998 = vmatmul.mubr.f32.gmra.mrb[0].mxu0 %v767
    %v999 = vpop.f32.mrb[0].mxu0
    %v1000 = vadd.f32 %v811, %v999
    %v1001 = vpop.f32.mrb[0].mxu0
    %1002 = vmatprep.mubr.f32.mxu0 0.0
    %1003 = vmatmul.mubr.f32.gmra.mrb[0].mxu0 %v768
    %v1004 = vpop.f32.mrb[0].mxu0
    %v1005 = vadd.f32 %v811, %v1004
    %v1006 = vpop.f32.mrb[0].mxu0
    %1007 = vmatprep.mubr.f32.mxu0 0.0
    %1008 = vmatmul.mubr.f32.gmra.mrb[0].mxu0 %v769
    %v1009 = vpop.f32.mrb[0].mxu0
    %v1010 = vadd.f32 %v811, %v1009
    %v1011 = vpop.f32.mrb[0].mxu0
    %1012 = vmatprep.mubr.f32.mxu0 0.0
    %1013 = vmatmul.mubr.f32.gmra.mrb[0].mxu0 %v770
    %v1014 = vpop.f32.mrb[0].mxu0
    %v1015 = vadd.f32 %v811, %v1014
    %v1016 = vpop.f32.mrb[0].mxu0
    %1017 = vmatprep.mubr.f32.mxu0 0.0
    %1018 = vmatmul.mubr.f32.gmra.mrb[0].mxu0 %v771
    %v1019 = vpop.f32.mrb[0].mxu0
    %v1020 = vadd.f32 %v811, %v1019
    %v1021 = vpop.f32.mrb[0].mxu0
    %1022 = vmatprep.mubr.f32.mxu0 0.0
    %1023 = vmatmul.mubr.f32.gmra.mrb[0].mxu0 %v772
    %v1024 = vpop.f32.mrb[0].mxu0
    %v1025 = vadd.f32 %v811, %v1024
    %v1026 = vpop.f32.mrb[0].mxu0
    %1027 = vmatprep.mubr.f32.mxu0 0.0
    %1028 = vmatmul.mubr.f32.gmra.mrb[0].mxu0 %v773
    %v1029 = vpop.f32.mrb[0].mxu0
    %v1030 = vadd.f32 %v811, %v1029
    %v1031 = vpop.f32.mrb[0].mxu0
    %1032 = vmatprep.mubr.f32.mxu0 0.0
    %1033 = vmatmul.mubr.f32.gmra.mrb[0].mxu0 %v774
    %v1034 = vpop.f32.mrb[0].mxu0
    %v1035 = vadd.f32 %v811, %v1034
    %v1036 = vpop.f32.mrb[0].mxu0
    %1037 = vmatprep.mubr.f32.mxu0 0.0
    %1038 = vmatmul.mubr.f32.gmra.mrb[0].mxu0 %v775
    %v1039 = vpop.f32.mrb[0].mxu0
    %v1040 = vadd.f32 %v811, %v1039
    %v1041 = vpop.f32.mrb[0].mxu0
    %1042 = vmatprep.mubr.f32.mxu0 0.0
    %1043 = vmatmul.mubr.f32.gmra.mrb[0].mxu0 %v776
    %v1044 = vpop.f32.mrb[0].mxu0
    %v1045 = vadd.f32 %v811, %v1044
    %v1046 = vpop.f32.mrb[0].mxu0
    %1047 = vmatprep.mubr.f32.mxu0 0.0
    %1048 = vmatmul.mubr.f32.gmra.mrb[0].mxu0 %v777
    %v1049 = vpop.f32.mrb[0].mxu0
    %v1050 = vadd.f32 %v811, %v1049
    %v1051 = vpop.f32.mrb[0].mxu0
    %1052 = vmatprep.mubr.f32.mxu0 0.0
    %1053 = vmatmul.mubr.f32.gmra.mrb[0].mxu0 %v778
    %v1054 = vpop.f32.mrb[0].mxu0
    %v1055 = vadd.f32 %v811, %v1054
    %v1056 = vpop.f32.mrb[0].mxu0
    %1057 = vmatprep.mubr.f32.mxu0 0.0
    %1058 = vmatmul.mubr.f32.gmra.mrb[0].mxu0 %v779
    %v1059 = vpop.f32.mrb[0].mxu0
    %v1060 = vadd.f32 %v811, %v1059
    %v1061 = vpop.f32.mrb[0].mxu0
    %1062 = vmatprep.mubr.f32.mxu0 0.0
    %1063 = vmatmul.mubr.f32.gmra.mrb[0].mxu0 %v780
    %v1064 = vpop.f32.mrb[0].mxu0
    %v1065 = vadd.f32 %v811, %v1064
    %v1066 = vpop.f32.mrb[0].mxu0
    %1067 = vmatprep.mubr.f32.mxu0 0.0
    %1068 = vmatmul.mubr.f32.gmra.mrb[0].mxu0 %v781
    %v1069 = vpop.f32.mrb[0].mxu0
    %v1070 = vadd.f32 %v811, %v1069
    %v1071 = vpop.f32.mrb[0].mxu0
    %1072 = vmatprep.mubr.f32.mxu0 0.0
    %1073 = vmatmul.mubr.f32.gmra.mrb[0].mxu0 %v782
    %v1074 = vpop.f32.mrb[0].mxu0
    %v1075 = vadd.f32 %v811, %v1074
    %v1076 = vpop.f32.mrb[0].mxu0
    %1077 = vmatprep.mubr.f32.mxu0 0.0
    %1078 = vmatmul.mubr.f32.gmra.mrb[0].mxu0 %v783
    %v1079 = vpop.f32.mrb[0].mxu0
    %v1080 = vadd.f32 %v811, %v1079
    %v1081 = vpop.f32.mrb[0].mxu0
    %1082 = vmatprep.mubr.f32.mxu0 0.0
    %1083 = vmatmul.mubr.f32.gmra.mrb[0].mxu0 %v784
    %v1084 = vpop.f32.mrb[0].mxu0
    %v1085 = vadd.f32 %v811, %v1084
    %v1086 = vpop.f32.mrb[0].mxu0
    %1087 = vmatprep.mubr.f32.mxu0 0.0
    %1088 = vmatmul.mubr.f32.gmra.mrb[0].mxu0 %v785
    %v1089 = vpop.f32.mrb[0].mxu0
    %v1090 = vadd.f32 %v811, %v1089
    %v1091 = vpop.f32.mrb[0].mxu0
    %1092 = vmatprep.mubr.f32.mxu0 0.0
    %1093 = vmatmul.mubr.f32.gmra.mrb[0].mxu0 %v786
    %v1094 = vpop.f32.mrb[0].mxu0
    %v1095 = vadd.f32 %v811, %v1094
    %v1096 = vpop.f32.mrb[0].mxu0
    %1097 = vmatprep.mubr.f32.mxu0 0.0
    %1098 = vmatmul.mubr.f32.gmra.mrb[0].mxu0 %v787
    %v1099 = vpop.f32.mrb[0].mxu0
    %v1100 = vadd.f32 %v811, %v1099
    %v1101 = vpop.f32.mrb[0].mxu0
    %1102 = vmatprep.mubr.f32.mxu0 0.0
    %1103 = vmatmul.mubr.f32.gmra.mrb[0].mxu0 %v788
    %v1104 = vpop.f32.mrb[0].mxu0
    %v1105 = vadd.f32 %v811, %v1104
    %v1106 = vpop.f32.mrb[0].mxu0
    %1107 = vmatprep.mubr.f32.mxu0 0.0
    %1108 = vmatmul.mubr.f32.gmra.mrb[0].mxu0 %v789
    %v1109 = vpop.f32.mrb[0].mxu0
    %v1110 = vadd.f32 %v811, %v1109
    %v1111 = vpop.f32.mrb[0].mxu0
    %1112 = vmatprep.mubr.f32.mxu0 0.0
    %1113 = vmatmul.mubr.f32.gmra.mrb[0].mxu0 %v790
    %v1114 = vpop.f32.mrb[0].mxu0
    %v1115 = vadd.f32 %v811, %v1114
    %v1116 = vpop.f32.mrb[0].mxu0
    %1117 = vmatprep.mubr.f32.mxu0 0.0
    %1118 = vmatmul.mubr.f32.gmra.mrb[0].mxu0 %v791
    %v1119 = vpop.f32.mrb[0].mxu0
    %v1120 = vadd.f32 %v811, %v1119
    %v1121 = vpop.f32.mrb[0].mxu0
    %1122 = vmatprep.mubr.f32.mxu0 0.0
    %1123 = vmatmul.mubr.f32.gmra.mrb[0].mxu0 %v792
    %v1124 = vpop.f32.mrb[0].mxu0
    %v1125 = vadd.f32 %v811, %v1124
    %v1126 = vpop.f32.mrb[0].mxu0
    %1127 = vmatprep.mubr.f32.mxu0 0.0
    %1128 = vmatmul.mubr.f32.gmra.mrb[0].mxu0 %v793
    %v1129 = vpop.f32.mrb[0].mxu0
    %v1130 = vadd.f32 %v811, %v1129
    %v1131 = vpop.f32.mrb[0].mxu0
    %1132 = vmatprep.mubr.f32.mxu0 0.0
    %1133 = vmatmul.mubr.f32.gmra.mrb[0].mxu0 %v794
    %v1134 = vpop.f32.mrb[0].mxu0
    %v1135 = vadd.f32 %v811, %v1134
    %v1136 = vpop.f32.mrb[0].mxu0
    %1137 = vmatprep.mubr.f32.mxu0 0.0
    %1138 = vmatmul.mubr.f32.gmra.mrb[0].mxu0 %v795
    %v1139 = vpop.f32.mrb[0].mxu0
    %v1140 = vadd.f32 %v811, %v1139
    %v1141 = vpop.f32.mrb[0].mxu0
    %1142 = vmatprep.mubr.f32.mxu0 0.0
    %1143 = vmatmul.mubr.f32.gmra.mrb[0].mxu0 %v796
    %v1144 = vpop.f32.mrb[0].mxu0
    %v1145 = vadd.f32 %v811, %v1144
    %v1146 = vpop.f32.mrb[0].mxu0
    %1147 = vmatprep.mubr.f32.mxu0 0.0
    %1148 = vmatmul.mubr.f32.gmra.mrb[0].mxu0 %v797
    %v1149 = vpop.f32.mrb[0].mxu0
    %v1150 = vadd.f32 %v811, %v1149
    %v1151 = vpop.f32.mrb[0].mxu0
    %1152 = vmatprep.mubr.f32.mxu0 0.0
    %1153 = vmatmul.mubr.f32.gmra.mrb[0].mxu0 %v798
    %v1154 = vpop.f32.mrb[0].mxu0
    %v1155 = vadd.f32 %v811, %v1154
    %v1156 = vpop.f32.mrb[0].mxu0
    %1157 = vmatprep.mubr.f32.mxu0 0.0
    %1158 = vmatmul.mubr.f32.gmra.mrb[0].mxu0 %v799
    %v1159 = vpop.f32.mrb[0].mxu0
    %v1160 = vadd.f32 %v811, %v1159
    %v1161 = vpop.f32.mrb[0].mxu0
    %1162 = vmatprep.mubr.f32.mxu0 0.0
    %1163 = vmatmul.mubr.f32.gmra.mrb[0].mxu0 %v800
    %v1164 = vpop.f32.mrb[0].mxu0
    %v1165 = vadd.f32 %v811, %v1164
    %v1166 = vpop.f32.mrb[0].mxu0
    %1167 = vmatprep.mubr.f32.mxu0 0.0
    %1168 = vmatmul.mubr.f32.gmra.mrb[0].mxu0 %v801
    %v1169 = vpop.f32.mrb[0].mxu0
    %v1170 = vadd.f32 %v811, %v1169
    %v1171 = vpop.f32.mrb[0].mxu0
    %1172 = vmatprep.mubr.f32.mxu0 0.0
    %1173 = vmatmul.mubr.f32.gmra.mrb[0].mxu0 %v802
    %v1174 = vpop.f32.mrb[0].mxu0
    %v1175 = vadd.f32 %v811, %v1174
    %v1176 = vpop.f32.mrb[0].mxu0
    %1177 = vmatprep.mubr.f32.mxu0 0.0
    %1178 = vmatmul.mubr.f32.gmra.mrb[0].mxu0 %v803
    %v1179 = vpop.f32.mrb[0].mxu0
    %v1180 = vadd.f32 %v811, %v1179
    %v1181 = vpop.f32.mrb[0].mxu0
    %1182 = vmatprep.mubr.f32.mxu0 0.0
    %1183 = vmatmul.mubr.f32.gmra.mrb[0].mxu0 %v804
    %v1184 = vpop.f32.mrb[0].mxu0
    %v1185 = vadd.f32 %v811, %v1184
    %v1186 = vpop.f32.mrb[0].mxu0
    %1187 = vmatprep.mubr.f32.mxu0 0.0
    %1188 = vmatmul.mubr.f32.gmra.mrb[0].mxu0 %v805
    %v1189 = vpop.f32.mrb[0].mxu0
    %v1190 = vadd.f32 %v811, %v1189
    %v1191 = vpop.f32.mrb[0].mxu0
    %1192 = vmatprep.mubr.f32.mxu0 0.0
    %1193 = vmatmul.mubr.f32.gmra.mrb[0].mxu0 %v806
    %v1194 = vpop.f32.mrb[0].mxu0
    %v1195 = vadd.f32 %v811, %v1194
    %v1196 = vpop.f32.mrb[0].mxu0
    %1197 = vdwg.mxu0
    %v1198 = vmax.f32 %v880, 0.0
    %v1199 = vmax.f32 %v885, 0.0
    %v1200 = vmax.f32 %v890, 0.0
    %v1201 = vmax.f32 %v895, 0.0
    %v1202 = vmax.f32 %v900, 0.0
    %v1203 = vmax.f32 %v905, 0.0
    %v1204 = vmax.f32 %v910, 0.0
    %v1205 = vmax.f32 %v915, 0.0
    %v1206 = vmax.f32 %v920, 0.0
    %v1207 = vmax.f32 %v925, 0.0
    %v1208 = vmax.f32 %v930, 0.0
    %v1209 = vmax.f32 %v935, 0.0
    %v1210 = vmax.f32 %v940, 0.0
    %v1211 = vmax.f32 %v945, 0.0
    %v1212 = vmax.f32 %v950, 0.0
    %v1213 = vmax.f32 %v955, 0.0
    %v1214 = vmax.f32 %v960, 0.0
    %v1215 = vmax.f32 %v965, 0.0
    %v1216 = vmax.f32 %v970, 0.0
    %v1217 = vmax.f32 %v975, 0.0
    %v1218 = vmax.f32 %v980, 0.0
    %v1219 = vmax.f32 %v985, 0.0
    %v1220 = vmax.f32 %v990, 0.0
    %v1221 = vmax.f32 %v995, 0.0
    %v1222 = vmax.f32 %v1000, 0.0
    %v1223 = vmax.f32 %v1005, 0.0
    %v1224 = vmax.f32 %v1010, 0.0
    %v1225 = vmax.f32 %v1015, 0.0
    %v1226 = vmax.f32 %v1020, 0.0
    %v1227 = vmax.f32 %v1025, 0.0
    %v1228 = vmax.f32 %v1030, 0.0
    %v1229 = vmax.f32 %v1035, 0.0
    %v1230 = vmax.f32 %v1040, 0.0
    %v1231 = vmax.f32 %v1045, 0.0
    %v1232 = vmax.f32 %v1050, 0.0
    %v1233 = vmax.f32 %v1055, 0.0
    %v1234 = vmax.f32 %v1060, 0.0
    %v1235 = vmax.f32 %v1065, 0.0
    %v1236 = vmax.f32 %v1070, 0.0
    %v1237 = vmax.f32 %v1075, 0.0
    %v1238 = vmax.f32 %v1080, 0.0
    %v1239 = vmax.f32 %v1085, 0.0
    %v1240 = vmax.f32 %v1090, 0.0
    %v1241 = vmax.f32 %v1095, 0.0
    %v1242 = vmax.f32 %v1100, 0.0
    %v1243 = vmax.f32 %v1105, 0.0
    %v1244 = vmax.f32 %v1110, 0.0
    %v1245 = vmax.f32 %v1115, 0.0
    %v1246 = vmax.f32 %v1120, 0.0
    %v1247 = vmax.f32 %v1125, 0.0
    %v1248 = vmax.f32 %v1130, 0.0
    %v1249 = vmax.f32 %v1135, 0.0
    %v1250 = vmax.f32 %v1140, 0.0
    %v1251 = vmax.f32 %v1145, 0.0
    %v1252 = vmax.f32 %v1150, 0.0
    %v1253 = vmax.f32 %v1155, 0.0
    %v1254 = vmax.f32 %v1160, 0.0
    %v1255 = vmax.f32 %v1165, 0.0
    %v1256 = vmax.f32 %v1170, 0.0
    %v1257 = vmax.f32 %v1175, 0.0
    %v1258 = vmax.f32 %v1180, 0.0
    %v1259 = vmax.f32 %v1185, 0.0
    %v1260 = vmax.f32 %v1190, 0.0
    %v1261 = vmax.f32 %v1195, 0.0
    %v1263 = vlaneseq
    %v1264 = vshrl.u32 %v1263, 7
    %v1265 = vsub.s32 0, %v1264
    %v1266 = vrot.slane %v71, %v1265
    %v1269 = vsel %vm165, %v1198, 0
    %v1272 = vsel %vm165, %v1199, 0
    %v1275 = vsel %vm165, %v1200, 0
    %v1278 = vsel %vm165, %v1201, 0
    %v1281 = vsel %vm165, %v1202, 0
    %v1284 = vsel %vm165, %v1203, 0
    %v1287 = vsel %vm165, %v1204, 0
    %v1290 = vsel %vm165, %v1205, 0
    %v1293 = vsel %vm165, %v1206, 0
    %v1296 = vsel %vm165, %v1207, 0
    %v1299 = vsel %vm165, %v1208, 0
    %v1302 = vsel %vm165, %v1209, 0
    %v1305 = vsel %vm165, %v1210, 0
    %v1308 = vsel %vm165, %v1211, 0
    %v1311 = vsel %vm165, %v1212, 0
    %v1314 = vsel %vm165, %v1213, 0
    %v1317 = vsel %vm165, %v1214, 0
    %v1320 = vsel %vm165, %v1215, 0
    %v1323 = vsel %vm165, %v1216, 0
    %v1326 = vsel %vm165, %v1217, 0
    %v1329 = vsel %vm165, %v1218, 0
    %v1332 = vsel %vm165, %v1219, 0
    %v1335 = vsel %vm165, %v1220, 0
    %v1338 = vsel %vm165, %v1221, 0
    %v1341 = vsel %vm165, %v1222, 0
    %v1344 = vsel %vm165, %v1223, 0
    %v1347 = vsel %vm165, %v1224, 0
    %v1350 = vsel %vm165, %v1225, 0
    %v1353 = vsel %vm165, %v1226, 0
    %v1356 = vsel %vm165, %v1227, 0
    %v1359 = vsel %vm165, %v1228, 0
    %v1362 = vsel %vm165, %v1229, 0
    %v1365 = vsel %vm165, %v1230, 0
    %v1368 = vsel %vm165, %v1231, 0
    %v1371 = vsel %vm165, %v1232, 0
    %v1374 = vsel %vm165, %v1233, 0
    %v1377 = vsel %vm165, %v1234, 0
    %v1380 = vsel %vm165, %v1235, 0
    %v1383 = vsel %vm165, %v1236, 0
    %v1386 = vsel %vm165, %v1237, 0
    %v1389 = vsel %vm165, %v1238, 0
    %v1392 = vsel %vm165, %v1239, 0
    %v1395 = vsel %vm165, %v1240, 0
    %v1398 = vsel %vm165, %v1241, 0
    %v1401 = vsel %vm165, %v1242, 0
    %v1404 = vsel %vm165, %v1243, 0
    %v1407 = vsel %vm165, %v1244, 0
    %v1410 = vsel %vm165, %v1245, 0
    %v1413 = vsel %vm165, %v1246, 0
    %v1416 = vsel %vm165, %v1247, 0
    %v1419 = vsel %vm165, %v1248, 0
    %v1422 = vsel %vm165, %v1249, 0
    %v1425 = vsel %vm165, %v1250, 0
    %v1428 = vsel %vm165, %v1251, 0
    %v1431 = vsel %vm165, %v1252, 0
    %v1434 = vsel %vm165, %v1253, 0
    %v1437 = vsel %vm165, %v1254, 0
    %v1440 = vsel %vm165, %v1255, 0
    %v1443 = vsel %vm165, %v1256, 0
    %v1446 = vsel %vm165, %v1257, 0
    %v1449 = vsel %vm165, %v1258, 0
    %v1452 = vsel %vm165, %v1259, 0
    %v1455 = vsel %vm165, %v1260, 0
    %v1458 = vsel %vm165, %v1261, 0
    %1460 = vmatprep.subr.mxu0 0.0
    %1461 = vmatpush1.msra.mxu0 %v69
    %1462 = vmatprep.subr.mxu0 0.0
    %1463 = vmatpush1.msra.mxu0 %v70
    %1464 = vmatprep.subr.mxu0 0.0
    %1465 = vmatpush1.msra.mxu0 0.0
    %1466 = vmatprep.subr.mxu0 0.0
    %1467 = vmatpush1.msra.mxu0 0.0
    %1468 = vmatprep.subr.mxu0 0.0
    %1469 = vmatpush1.msra.mxu0 0.0
    %1470 = vmatprep.subr.mxu0 0.0
    %1471 = vmatpush1.msra.mxu0 0.0
    %1472 = vmatprep.subr.mxu0 0.0
    %1473 = vmatpush1.msra.mxu0 0.0
    %1474 = vmatprep.subr.mxu0 0.0
    %1475 = vmatpush1.msra.mxu0 0.0
    %1476 = vmatprep.subr.mxu0 0.0
    %1477 = vmatpush1.msra.mxu0 0.0
    %1478 = vmatprep.subr.mxu0 0.0
    %1479 = vmatpush1.msra.mxu0 0.0
    %1480 = vmatprep.subr.mxu0 0.0
    %1481 = vmatpush1.msra.mxu0 0.0
    %1482 = vmatprep.subr.mxu0 0.0
    %1483 = vmatpush1.msra.mxu0 0.0
    %1484 = vmatprep.subr.mxu0 0.0
    %1485 = vmatpush1.msra.mxu0 0.0
    %1486 = vmatprep.subr.mxu0 0.0
    %1487 = vmatpush1.msra.mxu0 0.0
    %1488 = vmatprep.subr.mxu0 0.0
    %1489 = vmatpush1.msra.mxu0 0.0
    %1490 = vmatprep.subr.mxu0 0.0
    %1491 = vmatpush1.msra.mxu0 0.0
    %1492 = vmatprep.subr.mxu0 0.0
    %1493 = vmatpush1.msra.mxu0 0.0
    %1494 = vmatprep.subr.mxu0 0.0
    %1495 = vmatpush1.msra.mxu0 0.0
    %1496 = vmatprep.subr.mxu0 0.0
    %1497 = vmatpush1.msra.mxu0 0.0
    %1498 = vmatprep.subr.mxu0 0.0
    %1499 = vmatpush1.msra.mxu0 0.0
    %1500 = vmatprep.subr.mxu0 0.0
    %1501 = vmatpush1.msra.mxu0 0.0
    %1502 = vmatprep.subr.mxu0 0.0
    %1503 = vmatpush1.msra.mxu0 0.0
    %1504 = vmatprep.subr.mxu0 0.0
    %1505 = vmatpush1.msra.mxu0 0.0
    %1506 = vmatprep.subr.mxu0 0.0
    %1507 = vmatpush1.msra.mxu0 0.0
    %1508 = vmatprep.subr.mxu0 0.0
    %1509 = vmatpush1.msra.mxu0 0.0
    %1510 = vmatprep.subr.mxu0 0.0
    %1511 = vmatpush1.msra.mxu0 0.0
    %1512 = vmatprep.subr.mxu0 0.0
    %1513 = vmatpush1.msra.mxu0 0.0
    %1514 = vmatprep.subr.mxu0 0.0
    %1515 = vmatpush1.msra.mxu0 0.0
    %1516 = vmatprep.subr.mxu0 0.0
    %1517 = vmatpush1.msra.mxu0 0.0
    %1518 = vmatprep.subr.mxu0 0.0
    %1519 = vmatpush1.msra.mxu0 0.0
    %1520 = vmatprep.subr.mxu0 0.0
    %1521 = vmatpush1.msra.mxu0 0.0
    %1522 = vmatprep.subr.mxu0 0.0
    %1523 = vmatpush1.msra.mxu0 0.0
    %1524 = vmatprep.mubr.f32.mxu0 0.0
    %1525 = vmatmul.mubr.f32.gmra.mrb[0].mxu0 %v1269
    %v1526 = vpop.f32.mrb[0].mxu0
    %v1527 = vadd.f32 %v1266, %v1526
    %v1528 = vpop.f32.mrb[0].mxu0
    %1529 = vmatprep.mubr.f32.mxu0 0.0
    %1530 = vmatmul.mubr.f32.gmra.mrb[0].mxu0 %v1272
    %v1531 = vpop.f32.mrb[0].mxu0
    %v1532 = vadd.f32 %v1266, %v1531
    %v1533 = vpop.f32.mrb[0].mxu0
    %1534 = vmatprep.mubr.f32.mxu0 0.0
    %1535 = vmatmul.mubr.f32.gmra.mrb[0].mxu0 %v1275
    %v1536 = vpop.f32.mrb[0].mxu0
    %v1537 = vadd.f32 %v1266, %v1536
    %v1538 = vpop.f32.mrb[0].mxu0
    %1539 = vmatprep.mubr.f32.mxu0 0.0
    %1540 = vmatmul.mubr.f32.gmra.mrb[0].mxu0 %v1278
    %v1541 = vpop.f32.mrb[0].mxu0
    %v1542 = vadd.f32 %v1266, %v1541
    %v1543 = vpop.f32.mrb[0].mxu0
    %1544 = vmatprep.mubr.f32.mxu0 0.0
    %1545 = vmatmul.mubr.f32.gmra.mrb[0].mxu0 %v1281
    %v1546 = vpop.f32.mrb[0].mxu0
    %v1547 = vadd.f32 %v1266, %v1546
    %v1548 = vpop.f32.mrb[0].mxu0
    %1549 = vmatprep.mubr.f32.mxu0 0.0
    %1550 = vmatmul.mubr.f32.gmra.mrb[0].mxu0 %v1284
    %v1551 = vpop.f32.mrb[0].mxu0
    %v1552 = vadd.f32 %v1266, %v1551
    %v1553 = vpop.f32.mrb[0].mxu0
    %1554 = vmatprep.mubr.f32.mxu0 0.0
    %1555 = vmatmul.mubr.f32.gmra.mrb[0].mxu0 %v1287
    %v1556 = vpop.f32.mrb[0].mxu0
    %v1557 = vadd.f32 %v1266, %v1556
    %v1558 = vpop.f32.mrb[0].mxu0
    %1559 = vmatprep.mubr.f32.mxu0 0.0
    %1560 = vmatmul.mubr.f32.gmra.mrb[0].mxu0 %v1290
    %v1561 = vpop.f32.mrb[0].mxu0
    %v1562 = vadd.f32 %v1266, %v1561
    %v1563 = vpop.f32.mrb[0].mxu0
    %1564 = vmatprep.mubr.f32.mxu0 0.0
    %1565 = vmatmul.mubr.f32.gmra.mrb[0].mxu0 %v1293
    %v1566 = vpop.f32.mrb[0].mxu0
    %v1567 = vadd.f32 %v1266, %v1566
    %v1568 = vpop.f32.mrb[0].mxu0
    %1569 = vmatprep.mubr.f32.mxu0 0.0
    %1570 = vmatmul.mubr.f32.gmra.mrb[0].mxu0 %v1296
    %v1571 = vpop.f32.mrb[0].mxu0
    %v1572 = vadd.f32 %v1266, %v1571
    %v1573 = vpop.f32.mrb[0].mxu0
    %1574 = vmatprep.mubr.f32.mxu0 0.0
    %1575 = vmatmul.mubr.f32.gmra.mrb[0].mxu0 %v1299
    %v1576 = vpop.f32.mrb[0].mxu0
    %v1577 = vadd.f32 %v1266, %v1576
    %v1578 = vpop.f32.mrb[0].mxu0
    %1579 = vmatprep.mubr.f32.mxu0 0.0
    %1580 = vmatmul.mubr.f32.gmra.mrb[0].mxu0 %v1302
    %v1581 = vpop.f32.mrb[0].mxu0
    %v1582 = vadd.f32 %v1266, %v1581
    %v1583 = vpop.f32.mrb[0].mxu0
    %1584 = vmatprep.mubr.f32.mxu0 0.0
    %1585 = vmatmul.mubr.f32.gmra.mrb[0].mxu0 %v1305
    %v1586 = vpop.f32.mrb[0].mxu0
    %v1587 = vadd.f32 %v1266, %v1586
    %v1588 = vpop.f32.mrb[0].mxu0
    %1589 = vmatprep.mubr.f32.mxu0 0.0
    %1590 = vmatmul.mubr.f32.gmra.mrb[0].mxu0 %v1308
    %v1591 = vpop.f32.mrb[0].mxu0
    %v1592 = vadd.f32 %v1266, %v1591
    %v1593 = vpop.f32.mrb[0].mxu0
    %1594 = vmatprep.mubr.f32.mxu0 0.0
    %1595 = vmatmul.mubr.f32.gmra.mrb[0].mxu0 %v1311
    %v1596 = vpop.f32.mrb[0].mxu0
    %v1597 = vadd.f32 %v1266, %v1596
    %v1598 = vpop.f32.mrb[0].mxu0
    %1599 = vmatprep.mubr.f32.mxu0 0.0
    %1600 = vmatmul.mubr.f32.gmra.mrb[0].mxu0 %v1314
    %v1601 = vpop.f32.mrb[0].mxu0
    %v1602 = vadd.f32 %v1266, %v1601
    %v1603 = vpop.f32.mrb[0].mxu0
    %1604 = vmatprep.mubr.f32.mxu0 0.0
    %1605 = vmatmul.mubr.f32.gmra.mrb[0].mxu0 %v1317
    %v1606 = vpop.f32.mrb[0].mxu0
    %v1607 = vadd.f32 %v1266, %v1606
    %v1608 = vpop.f32.mrb[0].mxu0
    %1609 = vmatprep.mubr.f32.mxu0 0.0
    %1610 = vmatmul.mubr.f32.gmra.mrb[0].mxu0 %v1320
    %v1611 = vpop.f32.mrb[0].mxu0
    %v1612 = vadd.f32 %v1266, %v1611
    %v1613 = vpop.f32.mrb[0].mxu0
    %1614 = vmatprep.mubr.f32.mxu0 0.0
    %1615 = vmatmul.mubr.f32.gmra.mrb[0].mxu0 %v1323
    %v1616 = vpop.f32.mrb[0].mxu0
    %v1617 = vadd.f32 %v1266, %v1616
    %v1618 = vpop.f32.mrb[0].mxu0
    %1619 = vmatprep.mubr.f32.mxu0 0.0
    %1620 = vmatmul.mubr.f32.gmra.mrb[0].mxu0 %v1326
    %v1621 = vpop.f32.mrb[0].mxu0
    %v1622 = vadd.f32 %v1266, %v1621
    %v1623 = vpop.f32.mrb[0].mxu0
    %1624 = vmatprep.mubr.f32.mxu0 0.0
    %1625 = vmatmul.mubr.f32.gmra.mrb[0].mxu0 %v1329
    %v1626 = vpop.f32.mrb[0].mxu0
    %v1627 = vadd.f32 %v1266, %v1626
    %v1628 = vpop.f32.mrb[0].mxu0
    %1629 = vmatprep.mubr.f32.mxu0 0.0
    %1630 = vmatmul.mubr.f32.gmra.mrb[0].mxu0 %v1332
    %v1631 = vpop.f32.mrb[0].mxu0
    %v1632 = vadd.f32 %v1266, %v1631
    %v1633 = vpop.f32.mrb[0].mxu0
    %1634 = vmatprep.mubr.f32.mxu0 0.0
    %1635 = vmatmul.mubr.f32.gmra.mrb[0].mxu0 %v1335
    %v1636 = vpop.f32.mrb[0].mxu0
    %v1637 = vadd.f32 %v1266, %v1636
    %v1638 = vpop.f32.mrb[0].mxu0
    %1639 = vmatprep.mubr.f32.mxu0 0.0
    %1640 = vmatmul.mubr.f32.gmra.mrb[0].mxu0 %v1338
    %v1641 = vpop.f32.mrb[0].mxu0
    %v1642 = vadd.f32 %v1266, %v1641
    %v1643 = vpop.f32.mrb[0].mxu0
    %1644 = vmatprep.mubr.f32.mxu0 0.0
    %1645 = vmatmul.mubr.f32.gmra.mrb[0].mxu0 %v1341
    %v1646 = vpop.f32.mrb[0].mxu0
    %v1647 = vadd.f32 %v1266, %v1646
    %v1648 = vpop.f32.mrb[0].mxu0
    %1649 = vmatprep.mubr.f32.mxu0 0.0
    %1650 = vmatmul.mubr.f32.gmra.mrb[0].mxu0 %v1344
    %v1651 = vpop.f32.mrb[0].mxu0
    %v1652 = vadd.f32 %v1266, %v1651
    %v1653 = vpop.f32.mrb[0].mxu0
    %1654 = vmatprep.mubr.f32.mxu0 0.0
    %1655 = vmatmul.mubr.f32.gmra.mrb[0].mxu0 %v1347
    %v1656 = vpop.f32.mrb[0].mxu0
    %v1657 = vadd.f32 %v1266, %v1656
    %v1658 = vpop.f32.mrb[0].mxu0
    %1659 = vmatprep.mubr.f32.mxu0 0.0
    %1660 = vmatmul.mubr.f32.gmra.mrb[0].mxu0 %v1350
    %v1661 = vpop.f32.mrb[0].mxu0
    %v1662 = vadd.f32 %v1266, %v1661
    %v1663 = vpop.f32.mrb[0].mxu0
    %1664 = vmatprep.mubr.f32.mxu0 0.0
    %1665 = vmatmul.mubr.f32.gmra.mrb[0].mxu0 %v1353
    %v1666 = vpop.f32.mrb[0].mxu0
    %v1667 = vadd.f32 %v1266, %v1666
    %v1668 = vpop.f32.mrb[0].mxu0
    %1669 = vmatprep.mubr.f32.mxu0 0.0
    %1670 = vmatmul.mubr.f32.gmra.mrb[0].mxu0 %v1356
    %v1671 = vpop.f32.mrb[0].mxu0
    %v1672 = vadd.f32 %v1266, %v1671
    %v1673 = vpop.f32.mrb[0].mxu0
    %1674 = vmatprep.mubr.f32.mxu0 0.0
    %1675 = vmatmul.mubr.f32.gmra.mrb[0].mxu0 %v1359
    %v1676 = vpop.f32.mrb[0].mxu0
    %v1677 = vadd.f32 %v1266, %v1676
    %v1678 = vpop.f32.mrb[0].mxu0
    %1679 = vmatprep.mubr.f32.mxu0 0.0
    %1680 = vmatmul.mubr.f32.gmra.mrb[0].mxu0 %v1362
    %v1681 = vpop.f32.mrb[0].mxu0
    %v1682 = vadd.f32 %v1266, %v1681
    %v1683 = vpop.f32.mrb[0].mxu0
    %1684 = vmatprep.mubr.f32.mxu0 0.0
    %1685 = vmatmul.mubr.f32.gmra.mrb[0].mxu0 %v1365
    %v1686 = vpop.f32.mrb[0].mxu0
    %v1687 = vadd.f32 %v1266, %v1686
    %v1688 = vpop.f32.mrb[0].mxu0
    %1689 = vmatprep.mubr.f32.mxu0 0.0
    %1690 = vmatmul.mubr.f32.gmra.mrb[0].mxu0 %v1368
    %v1691 = vpop.f32.mrb[0].mxu0
    %v1692 = vadd.f32 %v1266, %v1691
    %v1693 = vpop.f32.mrb[0].mxu0
    %1694 = vmatprep.mubr.f32.mxu0 0.0
    %1695 = vmatmul.mubr.f32.gmra.mrb[0].mxu0 %v1371
    %v1696 = vpop.f32.mrb[0].mxu0
    %v1697 = vadd.f32 %v1266, %v1696
    %v1698 = vpop.f32.mrb[0].mxu0
    %1699 = vmatprep.mubr.f32.mxu0 0.0
    %1700 = vmatmul.mubr.f32.gmra.mrb[0].mxu0 %v1374
    %v1701 = vpop.f32.mrb[0].mxu0
    %v1702 = vadd.f32 %v1266, %v1701
    %v1703 = vpop.f32.mrb[0].mxu0
    %1704 = vmatprep.mubr.f32.mxu0 0.0
    %1705 = vmatmul.mubr.f32.gmra.mrb[0].mxu0 %v1377
    %v1706 = vpop.f32.mrb[0].mxu0
    %v1707 = vadd.f32 %v1266, %v1706
    %v1708 = vpop.f32.mrb[0].mxu0
    %1709 = vmatprep.mubr.f32.mxu0 0.0
    %1710 = vmatmul.mubr.f32.gmra.mrb[0].mxu0 %v1380
    %v1711 = vpop.f32.mrb[0].mxu0
    %v1712 = vadd.f32 %v1266, %v1711
    %v1713 = vpop.f32.mrb[0].mxu0
    %1714 = vmatprep.mubr.f32.mxu0 0.0
    %1715 = vmatmul.mubr.f32.gmra.mrb[0].mxu0 %v1383
    %v1716 = vpop.f32.mrb[0].mxu0
    %v1717 = vadd.f32 %v1266, %v1716
    %v1718 = vpop.f32.mrb[0].mxu0
    %1719 = vmatprep.mubr.f32.mxu0 0.0
    %1720 = vmatmul.mubr.f32.gmra.mrb[0].mxu0 %v1386
    %v1721 = vpop.f32.mrb[0].mxu0
    %v1722 = vadd.f32 %v1266, %v1721
    %v1723 = vpop.f32.mrb[0].mxu0
    %1724 = vmatprep.mubr.f32.mxu0 0.0
    %1725 = vmatmul.mubr.f32.gmra.mrb[0].mxu0 %v1389
    %v1726 = vpop.f32.mrb[0].mxu0
    %v1727 = vadd.f32 %v1266, %v1726
    %v1728 = vpop.f32.mrb[0].mxu0
    %1729 = vmatprep.mubr.f32.mxu0 0.0
    %1730 = vmatmul.mubr.f32.gmra.mrb[0].mxu0 %v1392
    %v1731 = vpop.f32.mrb[0].mxu0
    %v1732 = vadd.f32 %v1266, %v1731
    %v1733 = vpop.f32.mrb[0].mxu0
    %1734 = vmatprep.mubr.f32.mxu0 0.0
    %1735 = vmatmul.mubr.f32.gmra.mrb[0].mxu0 %v1395
    %v1736 = vpop.f32.mrb[0].mxu0
    %v1737 = vadd.f32 %v1266, %v1736
    %v1738 = vpop.f32.mrb[0].mxu0
    %1739 = vmatprep.mubr.f32.mxu0 0.0
    %1740 = vmatmul.mubr.f32.gmra.mrb[0].mxu0 %v1398
    %v1741 = vpop.f32.mrb[0].mxu0
    %v1742 = vadd.f32 %v1266, %v1741
    %v1743 = vpop.f32.mrb[0].mxu0
    %1744 = vmatprep.mubr.f32.mxu0 0.0
    %1745 = vmatmul.mubr.f32.gmra.mrb[0].mxu0 %v1401
    %v1746 = vpop.f32.mrb[0].mxu0
    %v1747 = vadd.f32 %v1266, %v1746
    %v1748 = vpop.f32.mrb[0].mxu0
    %1749 = vmatprep.mubr.f32.mxu0 0.0
    %1750 = vmatmul.mubr.f32.gmra.mrb[0].mxu0 %v1404
    %v1751 = vpop.f32.mrb[0].mxu0
    %v1752 = vadd.f32 %v1266, %v1751
    %v1753 = vpop.f32.mrb[0].mxu0
    %1754 = vmatprep.mubr.f32.mxu0 0.0
    %1755 = vmatmul.mubr.f32.gmra.mrb[0].mxu0 %v1407
    %v1756 = vpop.f32.mrb[0].mxu0
    %v1757 = vadd.f32 %v1266, %v1756
    %v1758 = vpop.f32.mrb[0].mxu0
    %1759 = vmatprep.mubr.f32.mxu0 0.0
    %1760 = vmatmul.mubr.f32.gmra.mrb[0].mxu0 %v1410
    %v1761 = vpop.f32.mrb[0].mxu0
    %v1762 = vadd.f32 %v1266, %v1761
    %v1763 = vpop.f32.mrb[0].mxu0
    %1764 = vmatprep.mubr.f32.mxu0 0.0
    %1765 = vmatmul.mubr.f32.gmra.mrb[0].mxu0 %v1413
    %v1766 = vpop.f32.mrb[0].mxu0
    %v1767 = vadd.f32 %v1266, %v1766
    %v1768 = vpop.f32.mrb[0].mxu0
    %1769 = vmatprep.mubr.f32.mxu0 0.0
    %1770 = vmatmul.mubr.f32.gmra.mrb[0].mxu0 %v1416
    %v1771 = vpop.f32.mrb[0].mxu0
    %v1772 = vadd.f32 %v1266, %v1771
    %v1773 = vpop.f32.mrb[0].mxu0
    %1774 = vmatprep.mubr.f32.mxu0 0.0
    %1775 = vmatmul.mubr.f32.gmra.mrb[0].mxu0 %v1419
    %v1776 = vpop.f32.mrb[0].mxu0
    %v1777 = vadd.f32 %v1266, %v1776
    %v1778 = vpop.f32.mrb[0].mxu0
    %1779 = vmatprep.mubr.f32.mxu0 0.0
    %1780 = vmatmul.mubr.f32.gmra.mrb[0].mxu0 %v1422
    %v1781 = vpop.f32.mrb[0].mxu0
    %v1782 = vadd.f32 %v1266, %v1781
    %v1783 = vpop.f32.mrb[0].mxu0
    %1784 = vmatprep.mubr.f32.mxu0 0.0
    %1785 = vmatmul.mubr.f32.gmra.mrb[0].mxu0 %v1425
    %v1786 = vpop.f32.mrb[0].mxu0
    %v1787 = vadd.f32 %v1266, %v1786
    %v1788 = vpop.f32.mrb[0].mxu0
    %1789 = vmatprep.mubr.f32.mxu0 0.0
    %1790 = vmatmul.mubr.f32.gmra.mrb[0].mxu0 %v1428
    %v1791 = vpop.f32.mrb[0].mxu0
    %v1792 = vadd.f32 %v1266, %v1791
    %v1793 = vpop.f32.mrb[0].mxu0
    %1794 = vmatprep.mubr.f32.mxu0 0.0
    %1795 = vmatmul.mubr.f32.gmra.mrb[0].mxu0 %v1431
    %v1796 = vpop.f32.mrb[0].mxu0
    %v1797 = vadd.f32 %v1266, %v1796
    %v1798 = vpop.f32.mrb[0].mxu0
    %1799 = vmatprep.mubr.f32.mxu0 0.0
    %1800 = vmatmul.mubr.f32.gmra.mrb[0].mxu0 %v1434
    %v1801 = vpop.f32.mrb[0].mxu0
    %v1802 = vadd.f32 %v1266, %v1801
    %v1803 = vpop.f32.mrb[0].mxu0
    %1804 = vmatprep.mubr.f32.mxu0 0.0
    %1805 = vmatmul.mubr.f32.gmra.mrb[0].mxu0 %v1437
    %v1806 = vpop.f32.mrb[0].mxu0
    %v1807 = vadd.f32 %v1266, %v1806
    %v1808 = vpop.f32.mrb[0].mxu0
    %1809 = vmatprep.mubr.f32.mxu0 0.0
    %1810 = vmatmul.mubr.f32.gmra.mrb[0].mxu0 %v1440
    %v1811 = vpop.f32.mrb[0].mxu0
    %v1812 = vadd.f32 %v1266, %v1811
    %v1813 = vpop.f32.mrb[0].mxu0
    %1814 = vmatprep.mubr.f32.mxu0 0.0
    %1815 = vmatmul.mubr.f32.gmra.mrb[0].mxu0 %v1443
    %v1816 = vpop.f32.mrb[0].mxu0
    %v1817 = vadd.f32 %v1266, %v1816
    %v1818 = vpop.f32.mrb[0].mxu0
    %1819 = vmatprep.mubr.f32.mxu0 0.0
    %1820 = vmatmul.mubr.f32.gmra.mrb[0].mxu0 %v1446
    %v1821 = vpop.f32.mrb[0].mxu0
    %v1822 = vadd.f32 %v1266, %v1821
    %v1823 = vpop.f32.mrb[0].mxu0
    %1824 = vmatprep.mubr.f32.mxu0 0.0
    %1825 = vmatmul.mubr.f32.gmra.mrb[0].mxu0 %v1449
    %v1826 = vpop.f32.mrb[0].mxu0
    %v1827 = vadd.f32 %v1266, %v1826
    %v1828 = vpop.f32.mrb[0].mxu0
    %1829 = vmatprep.mubr.f32.mxu0 0.0
    %1830 = vmatmul.mubr.f32.gmra.mrb[0].mxu0 %v1452
    %v1831 = vpop.f32.mrb[0].mxu0
    %v1832 = vadd.f32 %v1266, %v1831
    %v1833 = vpop.f32.mrb[0].mxu0
    %1834 = vmatprep.mubr.f32.mxu0 0.0
    %1835 = vmatmul.mubr.f32.gmra.mrb[0].mxu0 %v1455
    %v1836 = vpop.f32.mrb[0].mxu0
    %v1837 = vadd.f32 %v1266, %v1836
    %v1838 = vpop.f32.mrb[0].mxu0
    %1839 = vmatprep.mubr.f32.mxu0 0.0
    %1840 = vmatmul.mubr.f32.gmra.mrb[0].mxu0 %v1458
    %v1841 = vpop.f32.mrb[0].mxu0
    %v1842 = vadd.f32 %v1266, %v1841
    %v1843 = vpop.f32.mrb[0].mxu0
    %1844 = vdwg.mxu0
    %vm1845 = vcmask 392192
    %1846 = vst.msk [vmem:[#allocation2] sm:$0xff] %vm1845, %v1527
    %1847 = vst.msk [vmem:[#allocation2 + $0x8] sm:$0xff] %vm1845, %v1532
    %1848 = vst.msk [vmem:[#allocation2 + $0x10] sm:$0xff] %vm1845, %v1537
    %1849 = vst.msk [vmem:[#allocation2 + $0x18] sm:$0xff] %vm1845, %v1542
    %1850 = vst.msk [vmem:[#allocation2 + $0x20] sm:$0xff] %vm1845, %v1547
    %1851 = vst.msk [vmem:[#allocation2 + $0x28] sm:$0xff] %vm1845, %v1552
    %1852 = vst.msk [vmem:[#allocation2 + $0x30] sm:$0xff] %vm1845, %v1557
    %1853 = vst.msk [vmem:[#allocation2 + $0x38] sm:$0xff] %vm1845, %v1562
    %1854 = vst.msk [vmem:[#allocation2 + $0x40] sm:$0xff] %vm1845, %v1567
    %1855 = vst.msk [vmem:[#allocation2 + $0x48] sm:$0xff] %vm1845, %v1572
    %1856 = vst.msk [vmem:[#allocation2 + $0x50] sm:$0xff] %vm1845, %v1577
    %1857 = vst.msk [vmem:[#allocation2 + $0x58] sm:$0xff] %vm1845, %v1582
    %1858 = vst.msk [vmem:[#allocation2 + $0x60] sm:$0xff] %vm1845, %v1587
    %1859 = vst.msk [vmem:[#allocation2 + $0x68] sm:$0xff] %vm1845, %v1592
    %1860 = vst.msk [vmem:[#allocation2 + $0x70] sm:$0xff] %vm1845, %v1597
    %1861 = vst.msk [vmem:[#allocation2 + $0x78] sm:$0xff] %vm1845, %v1602
    %1862 = vst.msk [vmem:[#allocation2 + $0x80] sm:$0xff] %vm1845, %v1607
    %1863 = vst.msk [vmem:[#allocation2 + $0x88] sm:$0xff] %vm1845, %v1612
    %1864 = vst.msk [vmem:[#allocation2 + $0x90] sm:$0xff] %vm1845, %v1617
    %1865 = vst.msk [vmem:[#allocation2 + $0x98] sm:$0xff] %vm1845, %v1622
    %1866 = vst.msk [vmem:[#allocation2 + $0xa0] sm:$0xff] %vm1845, %v1627
    %1867 = vst.msk [vmem:[#allocation2 + $0xa8] sm:$0xff] %vm1845, %v1632
    %1868 = vst.msk [vmem:[#allocation2 + $0xb0] sm:$0xff] %vm1845, %v1637
    %1869 = vst.msk [vmem:[#allocation2 + $0xb8] sm:$0xff] %vm1845, %v1642
    %1870 = vst.msk [vmem:[#allocation2 + $0xc0] sm:$0xff] %vm1845, %v1647
    %1871 = vst.msk [vmem:[#allocation2 + $0xc8] sm:$0xff] %vm1845, %v1652
    %1872 = vst.msk [vmem:[#allocation2 + $0xd0] sm:$0xff] %vm1845, %v1657
    %1873 = vst.msk [vmem:[#allocation2 + $0xd8] sm:$0xff] %vm1845, %v1662
    %1874 = vst.msk [vmem:[#allocation2 + $0xe0] sm:$0xff] %vm1845, %v1667
    %1875 = vst.msk [vmem:[#allocation2 + $0xe8] sm:$0xff] %vm1845, %v1672
    %1876 = vst.msk [vmem:[#allocation2 + $0xf0] sm:$0xff] %vm1845, %v1677
    %1877 = vst.msk [vmem:[#allocation2 + $0xf8] sm:$0xff] %vm1845, %v1682
    %1878 = vst.msk [vmem:[#allocation2 + $0x100] sm:$0xff] %vm1845, %v1687
    %1879 = vst.msk [vmem:[#allocation2 + $0x108] sm:$0xff] %vm1845, %v1692
    %1880 = vst.msk [vmem:[#allocation2 + $0x110] sm:$0xff] %vm1845, %v1697
    %1881 = vst.msk [vmem:[#allocation2 + $0x118] sm:$0xff] %vm1845, %v1702
    %1882 = vst.msk [vmem:[#allocation2 + $0x120] sm:$0xff] %vm1845, %v1707
    %1883 = vst.msk [vmem:[#allocation2 + $0x128] sm:$0xff] %vm1845, %v1712
    %1884 = vst.msk [vmem:[#allocation2 + $0x130] sm:$0xff] %vm1845, %v1717
    %1885 = vst.msk [vmem:[#allocation2 + $0x138] sm:$0xff] %vm1845, %v1722
    %1886 = vst.msk [vmem:[#allocation2 + $0x140] sm:$0xff] %vm1845, %v1727
    %1887 = vst.msk [vmem:[#allocation2 + $0x148] sm:$0xff] %vm1845, %v1732
    %1888 = vst.msk [vmem:[#allocation2 + $0x150] sm:$0xff] %vm1845, %v1737
    %1889 = vst.msk [vmem:[#allocation2 + $0x158] sm:$0xff] %vm1845, %v1742
    %1890 = vst.msk [vmem:[#allocation2 + $0x160] sm:$0xff] %vm1845, %v1747
    %1891 = vst.msk [vmem:[#allocation2 + $0x168] sm:$0xff] %vm1845, %v1752
    %1892 = vst.msk [vmem:[#allocation2 + $0x170] sm:$0xff] %vm1845, %v1757
    %1893 = vst.msk [vmem:[#allocation2 + $0x178] sm:$0xff] %vm1845, %v1762
    %1894 = vst.msk [vmem:[#allocation2 + $0x180] sm:$0xff] %vm1845, %v1767
    %1895 = vst.msk [vmem:[#allocation2 + $0x188] sm:$0xff] %vm1845, %v1772
    %1896 = vst.msk [vmem:[#allocation2 + $0x190] sm:$0xff] %vm1845, %v1777
    %1897 = vst.msk [vmem:[#allocation2 + $0x198] sm:$0xff] %vm1845, %v1782
    %1898 = vst.msk [vmem:[#allocation2 + $0x1a0] sm:$0xff] %vm1845, %v1787
    %1899 = vst.msk [vmem:[#allocation2 + $0x1a8] sm:$0xff] %vm1845, %v1792
    %1900 = vst.msk [vmem:[#allocation2 + $0x1b0] sm:$0xff] %vm1845, %v1797
    %1901 = vst.msk [vmem:[#allocation2 + $0x1b8] sm:$0xff] %vm1845, %v1802
    %1902 = vst.msk [vmem:[#allocation2 + $0x1c0] sm:$0xff] %vm1845, %v1807
    %1903 = vst.msk [vmem:[#allocation2 + $0x1c8] sm:$0xff] %vm1845, %v1812
    %1904 = vst.msk [vmem:[#allocation2 + $0x1d0] sm:$0xff] %vm1845, %v1817
    %1905 = vst.msk [vmem:[#allocation2 + $0x1d8] sm:$0xff] %vm1845, %v1822
    %1906 = vst.msk [vmem:[#allocation2 + $0x1e0] sm:$0xff] %vm1845, %v1827
    %1907 = vst.msk [vmem:[#allocation2 + $0x1e8] sm:$0xff] %vm1845, %v1832
    %1908 = vst.msk [vmem:[#allocation2 + $0x1f0] sm:$0xff] %vm1845, %v1837
    %1909 = vst.msk [vmem:[#allocation2 + $0x1f8] sm:$0xff] %vm1845, %v1842
  $region45: #{tpu_custom_call.1} parent=0 // pred_fallthru
    _
  %p1910 = scmp.gt.s32.totalorder %s37, 4
  // Predicated region
  $region46: #{tpu_custom_call.1} parent=0 // pred_check
    %p1911 = pneg %p1910
  $region47: #{tpu_custom_call.1} parent=0 // pred_check_branch
    %1913 = sbr.rel (%p1911) target = $region49
  $region48: #{tpu_custom_call.1} parent=0 // pred_region
    %v1914 = vld [vmem:[%s1 + $0x200] sm:$0xff]
    %v1915 = vld [vmem:[%s1 + $0x208] sm:$0xff]
    %v1916 = vld [vmem:[%s1 + $0x210] sm:$0xff]
    %v1917 = vld [vmem:[%s1 + $0x218] sm:$0xff]
    %v1918 = vld [vmem:[%s1 + $0x220] sm:$0xff]
    %v1919 = vld [vmem:[%s1 + $0x228] sm:$0xff]
    %v1920 = vld [vmem:[%s1 + $0x230] sm:$0xff]
    %v1921 = vld [vmem:[%s1 + $0x238] sm:$0xff]
    %v1922 = vld [vmem:[%s1 + $0x240] sm:$0xff]
    %v1923 = vld [vmem:[%s1 + $0x248] sm:$0xff]
    %v1924 = vld [vmem:[%s1 + $0x250] sm:$0xff]
    %v1925 = vld [vmem:[%s1 + $0x258] sm:$0xff]
    %v1926 = vld [vmem:[%s1 + $0x260] sm:$0xff]
    %v1927 = vld [vmem:[%s1 + $0x268] sm:$0xff]
    %v1928 = vld [vmem:[%s1 + $0x270] sm:$0xff]
    %v1929 = vld [vmem:[%s1 + $0x278] sm:$0xff]
    %v1930 = vld [vmem:[%s1 + $0x280] sm:$0xff]
    %v1931 = vld [vmem:[%s1 + $0x288] sm:$0xff]
    %v1932 = vld [vmem:[%s1 + $0x290] sm:$0xff]
    %v1933 = vld [vmem:[%s1 + $0x298] sm:$0xff]
    %v1934 = vld [vmem:[%s1 + $0x2a0] sm:$0xff]
    %v1935 = vld [vmem:[%s1 + $0x2a8] sm:$0xff]
    %v1936 = vld [vmem:[%s1 + $0x2b0] sm:$0xff]
    %v1937 = vld [vmem:[%s1 + $0x2b8] sm:$0xff]
    %v1938 = vld [vmem:[%s1 + $0x2c0] sm:$0xff]
    %v1939 = vld [vmem:[%s1 + $0x2c8] sm:$0xff]
    %v1940 = vld [vmem:[%s1 + $0x2d0] sm:$0xff]
    %v1941 = vld [vmem:[%s1 + $0x2d8] sm:$0xff]
    %v1942 = vld [vmem:[%s1 + $0x2e0] sm:$0xff]
    %v1943 = vld [vmem:[%s1 + $0x2e8] sm:$0xff]
    %v1944 = vld [vmem:[%s1 + $0x2f0] sm:$0xff]
    %v1945 = vld [vmem:[%s1 + $0x2f8] sm:$0xff]
    %v1946 = vld [vmem:[%s1 + $0x300] sm:$0xff]
    %v1947 = vld [vmem:[%s1 + $0x308] sm:$0xff]
    %v1948 = vld [vmem:[%s1 + $0x310] sm:$0xff]
    %v1949 = vld [vmem:[%s1 + $0x318] sm:$0xff]
    %v1950 = vld [vmem:[%s1 + $0x320] sm:$0xff]
    %v1951 = vld [vmem:[%s1 + $0x328] sm:$0xff]
    %v1952 = vld [vmem:[%s1 + $0x330] sm:$0xff]
    %v1953 = vld [vmem:[%s1 + $0x338] sm:$0xff]
    %v1954 = vld [vmem:[%s1 + $0x340] sm:$0xff]
    %v1955 = vld [vmem:[%s1 + $0x348] sm:$0xff]
    %v1956 = vld [vmem:[%s1 + $0x350] sm:$0xff]
    %v1957 = vld [vmem:[%s1 + $0x358] sm:$0xff]
    %v1958 = vld [vmem:[%s1 + $0x360] sm:$0xff]
    %v1959 = vld [vmem:[%s1 + $0x368] sm:$0xff]
    %v1960 = vld [vmem:[%s1 + $0x370] sm:$0xff]
    %v1961 = vld [vmem:[%s1 + $0x378] sm:$0xff]
    %v1962 = vld [vmem:[%s1 + $0x380] sm:$0xff]
    %v1963 = vld [vmem:[%s1 + $0x388] sm:$0xff]
    %v1964 = vld [vmem:[%s1 + $0x390] sm:$0xff]
    %v1965 = vld [vmem:[%s1 + $0x398] sm:$0xff]
    %v1966 = vld [vmem:[%s1 + $0x3a0] sm:$0xff]
    %v1967 = vld [vmem:[%s1 + $0x3a8] sm:$0xff]
    %v1968 = vld [vmem:[%s1 + $0x3b0] sm:$0xff]
    %v1969 = vld [vmem:[%s1 + $0x3b8] sm:$0xff]
    %v1970 = vld [vmem:[%s1 + $0x3c0] sm:$0xff]
    %v1971 = vld [vmem:[%s1 + $0x3c8] sm:$0xff]
    %v1972 = vld [vmem:[%s1 + $0x3d0] sm:$0xff]
    %v1973 = vld [vmem:[%s1 + $0x3d8] sm:$0xff]
    %v1974 = vld [vmem:[%s1 + $0x3e0] sm:$0xff]
    %v1975 = vld [vmem:[%s1 + $0x3e8] sm:$0xff]
    %v1976 = vld [vmem:[%s1 + $0x3f0] sm:$0xff]
    %v1977 = vld [vmem:[%s1 + $0x3f8] sm:$0xff]
    %v1979 = vlaneseq
    %v1980 = vshrl.u32 %v1979, 7
    %v1981 = vsub.s32 0, %v1980
    %v1982 = vrot.slane %v51, %v1981
    %vm1984 = vcmask 130048
    %v1986 = vsel %vm1984, %v1914, 0
    %v1989 = vsel %vm1984, %v1915, 0
    %v1992 = vsel %vm1984, %v1916, 0
    %v1995 = vsel %vm1984, %v1917, 0
    %v1998 = vsel %vm1984, %v1918, 0
    %v2001 = vsel %vm1984, %v1919, 0
    %v2004 = vsel %vm1984, %v1920, 0
    %v2007 = vsel %vm1984, %v1921, 0
    %v2010 = vsel %vm1984, %v1922, 0
    %v2013 = vsel %vm1984, %v1923, 0
    %v2016 = vsel %vm1984, %v1924, 0
    %v2019 = vsel %vm1984, %v1925, 0
    %v2022 = vsel %vm1984, %v1926, 0
    %v2025 = vsel %vm1984, %v1927, 0
    %v2028 = vsel %vm1984, %v1928, 0
    %v2031 = vsel %vm1984, %v1929, 0
    %v2034 = vsel %vm1984, %v1930, 0
    %v2037 = vsel %vm1984, %v1931, 0
    %v2040 = vsel %vm1984, %v1932, 0
    %v2043 = vsel %vm1984, %v1933, 0
    %v2046 = vsel %vm1984, %v1934, 0
    %v2049 = vsel %vm1984, %v1935, 0
    %v2052 = vsel %vm1984, %v1936, 0
    %v2055 = vsel %vm1984, %v1937, 0
    %v2058 = vsel %vm1984, %v1938, 0
    %v2061 = vsel %vm1984, %v1939, 0
    %v2064 = vsel %vm1984, %v1940, 0
    %v2067 = vsel %vm1984, %v1941, 0
    %v2070 = vsel %vm1984, %v1942, 0
    %v2073 = vsel %vm1984, %v1943, 0
    %v2076 = vsel %vm1984, %v1944, 0
    %v2079 = vsel %vm1984, %v1945, 0
    %v2082 = vsel %vm1984, %v1946, 0
    %v2085 = vsel %vm1984, %v1947, 0
    %v2088 = vsel %vm1984, %v1948, 0
    %v2091 = vsel %vm1984, %v1949, 0
    %v2094 = vsel %vm1984, %v1950, 0
    %v2097 = vsel %vm1984, %v1951, 0
    %v2100 = vsel %vm1984, %v1952, 0
    %v2103 = vsel %vm1984, %v1953, 0
    %v2106 = vsel %vm1984, %v1954, 0
    %v2109 = vsel %vm1984, %v1955, 0
    %v2112 = vsel %vm1984, %v1956, 0
    %v2115 = vsel %vm1984, %v1957, 0
    %v2118 = vsel %vm1984, %v1958, 0
    %v2121 = vsel %vm1984, %v1959, 0
    %v2124 = vsel %vm1984, %v1960, 0
    %v2127 = vsel %vm1984, %v1961, 0
    %v2130 = vsel %vm1984, %v1962, 0
    %v2133 = vsel %vm1984, %v1963, 0
    %v2136 = vsel %vm1984, %v1964, 0
    %v2139 = vsel %vm1984, %v1965, 0
    %v2142 = vsel %vm1984, %v1966, 0
    %v2145 = vsel %vm1984, %v1967, 0
    %v2148 = vsel %vm1984, %v1968, 0
    %v2151 = vsel %vm1984, %v1969, 0
    %v2154 = vsel %vm1984, %v1970, 0
    %v2157 = vsel %vm1984, %v1971, 0
    %v2160 = vsel %vm1984, %v1972, 0
    %v2163 = vsel %vm1984, %v1973, 0
    %v2166 = vsel %vm1984, %v1974, 0
    %v2169 = vsel %vm1984, %v1975, 0
    %v2172 = vsel %vm1984, %v1976, 0
    %v2175 = vsel %vm1984, %v1977, 0
    %2177 = vmatprep.subr.mxu0 0.0
    %2178 = vmatpush1.msra.mxu0 %v49
    %2179 = vmatprep.subr.mxu0 0.0
    %2180 = vmatpush1.msra.mxu0 %v50
    %2181 = vmatprep.subr.mxu0 0.0
    %2182 = vmatpush1.msra.mxu0 0.0
    %2183 = vmatprep.subr.mxu0 0.0
    %2184 = vmatpush1.msra.mxu0 0.0
    %2185 = vmatprep.subr.mxu0 0.0
    %2186 = vmatpush1.msra.mxu0 0.0
    %2187 = vmatprep.subr.mxu0 0.0
    %2188 = vmatpush1.msra.mxu0 0.0
    %2189 = vmatprep.subr.mxu0 0.0
    %2190 = vmatpush1.msra.mxu0 0.0
    %2191 = vmatprep.subr.mxu0 0.0
    %2192 = vmatpush1.msra.mxu0 0.0
    %2193 = vmatprep.subr.mxu0 0.0
    %2194 = vmatpush1.msra.mxu0 0.0
    %2195 = vmatprep.subr.mxu0 0.0
    %2196 = vmatpush1.msra.mxu0 0.0
    %2197 = vmatprep.subr.mxu0 0.0
    %2198 = vmatpush1.msra.mxu0 0.0
    %2199 = vmatprep.subr.mxu0 0.0
    %2200 = vmatpush1.msra.mxu0 0.0
    %2201 = vmatprep.subr.mxu0 0.0
    %2202 = vmatpush1.msra.mxu0 0.0
    %2203 = vmatprep.subr.mxu0 0.0
    %2204 = vmatpush1.msra.mxu0 0.0
    %2205 = vmatprep.subr.mxu0 0.0
    %2206 = vmatpush1.msra.mxu0 0.0
    %2207 = vmatprep.subr.mxu0 0.0
    %2208 = vmatpush1.msra.mxu0 0.0
    %2209 = vmatprep.subr.mxu0 0.0
    %2210 = vmatpush1.msra.mxu0 0.0
    %2211 = vmatprep.subr.mxu0 0.0
    %2212 = vmatpush1.msra.mxu0 0.0
    %2213 = vmatprep.subr.mxu0 0.0
    %2214 = vmatpush1.msra.mxu0 0.0
    %2215 = vmatprep.subr.mxu0 0.0
    %2216 = vmatpush1.msra.mxu0 0.0
    %2217 = vmatprep.subr.mxu0 0.0
    %2218 = vmatpush1.msra.mxu0 0.0
    %2219 = vmatprep.subr.mxu0 0.0
    %2220 = vmatpush1.msra.mxu0 0.0
    %2221 = vmatprep.subr.mxu0 0.0
    %2222 = vmatpush1.msra.mxu0 0.0
    %2223 = vmatprep.subr.mxu0 0.0
    %2224 = vmatpush1.msra.mxu0 0.0
    %2225 = vmatprep.subr.mxu0 0.0
    %2226 = vmatpush1.msra.mxu0 0.0
    %2227 = vmatprep.subr.mxu0 0.0
    %2228 = vmatpush1.msra.mxu0 0.0
    %2229 = vmatprep.subr.mxu0 0.0
    %2230 = vmatpush1.msra.mxu0 0.0
    %2231 = vmatprep.subr.mxu0 0.0
    %2232 = vmatpush1.msra.mxu0 0.0
    %2233 = vmatprep.subr.mxu0 0.0
    %2234 = vmatpush1.msra.mxu0 0.0
    %2235 = vmatprep.subr.mxu0 0.0
    %2236 = vmatpush1.msra.mxu0 0.0
    %2237 = vmatprep.subr.mxu0 0.0
    %2238 = vmatpush1.msra.mxu0 0.0
    %2239 = vmatprep.subr.mxu0 0.0
    %2240 = vmatpush1.msra.mxu0 0.0
    %2241 = vmatprep.mubr.f32.mxu0 0.0
    %2242 = vmatmul.mubr.f32.gmra.mrb[0].mxu0 %v1986
    %v2243 = vpop.f32.mrb[0].mxu0
    %v2244 = vadd.f32 %v1982, %v2243
    %v2245 = vpop.f32.mrb[0].mxu0
    %2246 = vmatprep.mubr.f32.mxu0 0.0
    %2247 = vmatmul.mubr.f32.gmra.mrb[0].mxu0 %v1989
    %v2248 = vpop.f32.mrb[0].mxu0
    %v2249 = vadd.f32 %v1982, %v2248
    %v2250 = vpop.f32.mrb[0].mxu0
    %2251 = vmatprep.mubr.f32.mxu0 0.0
    %2252 = vmatmul.mubr.f32.gmra.mrb[0].mxu0 %v1992
    %v2253 = vpop.f32.mrb[0].mxu0
    %v2254 = vadd.f32 %v1982, %v2253
    %v2255 = vpop.f32.mrb[0].mxu0
    %2256 = vmatprep.mubr.f32.mxu0 0.0
    %2257 = vmatmul.mubr.f32.gmra.mrb[0].mxu0 %v1995
    %v2258 = vpop.f32.mrb[0].mxu0
    %v2259 = vadd.f32 %v1982, %v2258
    %v2260 = vpop.f32.mrb[0].mxu0
    %2261 = vmatprep.mubr.f32.mxu0 0.0
    %2262 = vmatmul.mubr.f32.gmra.mrb[0].mxu0 %v1998
    %v2263 = vpop.f32.mrb[0].mxu0
    %v2264 = vadd.f32 %v1982, %v2263
    %v2265 = vpop.f32.mrb[0].mxu0
    %2266 = vmatprep.mubr.f32.mxu0 0.0
    %2267 = vmatmul.mubr.f32.gmra.mrb[0].mxu0 %v2001
    %v2268 = vpop.f32.mrb[0].mxu0
    %v2269 = vadd.f32 %v1982, %v2268
    %v2270 = vpop.f32.mrb[0].mxu0
    %2271 = vmatprep.mubr.f32.mxu0 0.0
    %2272 = vmatmul.mubr.f32.gmra.mrb[0].mxu0 %v2004
    %v2273 = vpop.f32.mrb[0].mxu0
    %v2274 = vadd.f32 %v1982, %v2273
    %v2275 = vpop.f32.mrb[0].mxu0
    %2276 = vmatprep.mubr.f32.mxu0 0.0
    %2277 = vmatmul.mubr.f32.gmra.mrb[0].mxu0 %v2007
    %v2278 = vpop.f32.mrb[0].mxu0
    %v2279 = vadd.f32 %v1982, %v2278
    %v2280 = vpop.f32.mrb[0].mxu0
    %2281 = vmatprep.mubr.f32.mxu0 0.0
    %2282 = vmatmul.mubr.f32.gmra.mrb[0].mxu0 %v2010
    %v2283 = vpop.f32.mrb[0].mxu0
    %v2284 = vadd.f32 %v1982, %v2283
    %v2285 = vpop.f32.mrb[0].mxu0
    %2286 = vmatprep.mubr.f32.mxu0 0.0
    %2287 = vmatmul.mubr.f32.gmra.mrb[0].mxu0 %v2013
    %v2288 = vpop.f32.mrb[0].mxu0
    %v2289 = vadd.f32 %v1982, %v2288
    %v2290 = vpop.f32.mrb[0].mxu0
    %2291 = vmatprep.mubr.f32.mxu0 0.0
    %2292 = vmatmul.mubr.f32.gmra.mrb[0].mxu0 %v2016
    %v2293 = vpop.f32.mrb[0].mxu0
    %v2294 = vadd.f32 %v1982, %v2293
    %v2295 = vpop.f32.mrb[0].mxu0
    %2296 = vmatprep.mubr.f32.mxu0 0.0
    %2297 = vmatmul.mubr.f32.gmra.mrb[0].mxu0 %v2019
    %v2298 = vpop.f32.mrb[0].mxu0
    %v2299 = vadd.f32 %v1982, %v2298
    %v2300 = vpop.f32.mrb[0].mxu0
    %2301 = vmatprep.mubr.f32.mxu0 0.0
    %2302 = vmatmul.mubr.f32.gmra.mrb[0].mxu0 %v2022
    %v2303 = vpop.f32.mrb[0].mxu0
    %v2304 = vadd.f32 %v1982, %v2303
    %v2305 = vpop.f32.mrb[0].mxu0
    %2306 = vmatprep.mubr.f32.mxu0 0.0
    %2307 = vmatmul.mubr.f32.gmra.mrb[0].mxu0 %v2025
    %v2308 = vpop.f32.mrb[0].mxu0
    %v2309 = vadd.f32 %v1982, %v2308
    %v2310 = vpop.f32.mrb[0].mxu0
    %2311 = vmatprep.mubr.f32.mxu0 0.0
    %2312 = vmatmul.mubr.f32.gmra.mrb[0].mxu0 %v2028
    %v2313 = vpop.f32.mrb[0].mxu0
    %v2314 = vadd.f32 %v1982, %v2313
    %v2315 = vpop.f32.mrb[0].mxu0
    %2316 = vmatprep.mubr.f32.mxu0 0.0
    %2317 = vmatmul.mubr.f32.gmra.mrb[0].mxu0 %v2031
    %v2318 = vpop.f32.mrb[0].mxu0
    %v2319 = vadd.f32 %v1982, %v2318
    %v2320 = vpop.f32.mrb[0].mxu0
    %2321 = vmatprep.mubr.f32.mxu0 0.0
    %2322 = vmatmul.mubr.f32.gmra.mrb[0].mxu0 %v2034
    %v2323 = vpop.f32.mrb[0].mxu0
    %v2324 = vadd.f32 %v1982, %v2323
    %v2325 = vpop.f32.mrb[0].mxu0
    %2326 = vmatprep.mubr.f32.mxu0 0.0
    %2327 = vmatmul.mubr.f32.gmra.mrb[0].mxu0 %v2037
    %v2328 = vpop.f32.mrb[0].mxu0
    %v2329 = vadd.f32 %v1982, %v2328
    %v2330 = vpop.f32.mrb[0].mxu0
    %2331 = vmatprep.mubr.f32.mxu0 0.0
    %2332 = vmatmul.mubr.f32.gmra.mrb[0].mxu0 %v2040
    %v2333 = vpop.f32.mrb[0].mxu0
    %v2334 = vadd.f32 %v1982, %v2333
    %v2335 = vpop.f32.mrb[0].mxu0
    %2336 = vmatprep.mubr.f32.mxu0 0.0
    %2337 = vmatmul.mubr.f32.gmra.mrb[0].mxu0 %v2043
    %v2338 = vpop.f32.mrb[0].mxu0
    %v2339 = vadd.f32 %v1982, %v2338
    %v2340 = vpop.f32.mrb[0].mxu0
    %2341 = vmatprep.mubr.f32.mxu0 0.0
    %2342 = vmatmul.mubr.f32.gmra.mrb[0].mxu0 %v2046
    %v2343 = vpop.f32.mrb[0].mxu0
    %v2344 = vadd.f32 %v1982, %v2343
    %v2345 = vpop.f32.mrb[0].mxu0
    %2346 = vmatprep.mubr.f32.mxu0 0.0
    %2347 = vmatmul.mubr.f32.gmra.mrb[0].mxu0 %v2049
    %v2348 = vpop.f32.mrb[0].mxu0
    %v2349 = vadd.f32 %v1982, %v2348
    %v2350 = vpop.f32.mrb[0].mxu0
    %2351 = vmatprep.mubr.f32.mxu0 0.0
    %2352 = vmatmul.mubr.f32.gmra.mrb[0].mxu0 %v2052
    %v2353 = vpop.f32.mrb[0].mxu0
    %v2354 = vadd.f32 %v1982, %v2353
    %v2355 = vpop.f32.mrb[0].mxu0
    %2356 = vmatprep.mubr.f32.mxu0 0.0
    %2357 = vmatmul.mubr.f32.gmra.mrb[0].mxu0 %v2055
    %v2358 = vpop.f32.mrb[0].mxu0
    %v2359 = vadd.f32 %v1982, %v2358
    %v2360 = vpop.f32.mrb[0].mxu0
    %2361 = vmatprep.mubr.f32.mxu0 0.0
    %2362 = vmatmul.mubr.f32.gmra.mrb[0].mxu0 %v2058
    %v2363 = vpop.f32.mrb[0].mxu0
    %v2364 = vadd.f32 %v1982, %v2363
    %v2365 = vpop.f32.mrb[0].mxu0
    %2366 = vmatprep.mubr.f32.mxu0 0.0
    %2367 = vmatmul.mubr.f32.gmra.mrb[0].mxu0 %v2061
    %v2368 = vpop.f32.mrb[0].mxu0
    %v2369 = vadd.f32 %v1982, %v2368
    %v2370 = vpop.f32.mrb[0].mxu0
    %2371 = vmatprep.mubr.f32.mxu0 0.0
    %2372 = vmatmul.mubr.f32.gmra.mrb[0].mxu0 %v2064
    %v2373 = vpop.f32.mrb[0].mxu0
    %v2374 = vadd.f32 %v1982, %v2373
    %v2375 = vpop.f32.mrb[0].mxu0
    %2376 = vmatprep.mubr.f32.mxu0 0.0
    %2377 = vmatmul.mubr.f32.gmra.mrb[0].mxu0 %v2067
    %v2378 = vpop.f32.mrb[0].mxu0
    %v2379 = vadd.f32 %v1982, %v2378
    %v2380 = vpop.f32.mrb[0].mxu0
    %2381 = vmatprep.mubr.f32.mxu0 0.0
    %2382 = vmatmul.mubr.f32.gmra.mrb[0].mxu0 %v2070
    %v2383 = vpop.f32.mrb[0].mxu0
    %v2384 = vadd.f32 %v1982, %v2383
    %v2385 = vpop.f32.mrb[0].mxu0
    %2386 = vmatprep.mubr.f32.mxu0 0.0
    %2387 = vmatmul.mubr.f32.gmra.mrb[0].mxu0 %v2073
    %v2388 = vpop.f32.mrb[0].mxu0
    %v2389 = vadd.f32 %v1982, %v2388
    %v2390 = vpop.f32.mrb[0].mxu0
    %2391 = vmatprep.mubr.f32.mxu0 0.0
    %2392 = vmatmul.mubr.f32.gmra.mrb[0].mxu0 %v2076
    %v2393 = vpop.f32.mrb[0].mxu0
    %v2394 = vadd.f32 %v1982, %v2393
    %v2395 = vpop.f32.mrb[0].mxu0
    %2396 = vmatprep.mubr.f32.mxu0 0.0
    %2397 = vmatmul.mubr.f32.gmra.mrb[0].mxu0 %v2079
    %v2398 = vpop.f32.mrb[0].mxu0
    %v2399 = vadd.f32 %v1982, %v2398
    %v2400 = vpop.f32.mrb[0].mxu0
    %2401 = vmatprep.mubr.f32.mxu0 0.0
    %2402 = vmatmul.mubr.f32.gmra.mrb[0].mxu0 %v2082
    %v2403 = vpop.f32.mrb[0].mxu0
    %v2404 = vadd.f32 %v1982, %v2403
    %v2405 = vpop.f32.mrb[0].mxu0
    %2406 = vmatprep.mubr.f32.mxu0 0.0
    %2407 = vmatmul.mubr.f32.gmra.mrb[0].mxu0 %v2085
    %v2408 = vpop.f32.mrb[0].mxu0
    %v2409 = vadd.f32 %v1982, %v2408
    %v2410 = vpop.f32.mrb[0].mxu0
    %2411 = vmatprep.mubr.f32.mxu0 0.0
    %2412 = vmatmul.mubr.f32.gmra.mrb[0].mxu0 %v2088
    %v2413 = vpop.f32.mrb[0].mxu0
    %v2414 = vadd.f32 %v1982, %v2413
    %v2415 = vpop.f32.mrb[0].mxu0
    %2416 = vmatprep.mubr.f32.mxu0 0.0
    %2417 = vmatmul.mubr.f32.gmra.mrb[0].mxu0 %v2091
    %v2418 = vpop.f32.mrb[0].mxu0
    %v2419 = vadd.f32 %v1982, %v2418
    %v2420 = vpop.f32.mrb[0].mxu0
    %2421 = vmatprep.mubr.f32.mxu0 0.0
    %2422 = vmatmul.mubr.f32.gmra.mrb[0].mxu0 %v2094
    %v2423 = vpop.f32.mrb[0].mxu0
    %v2424 = vadd.f32 %v1982, %v2423
    %v2425 = vpop.f32.mrb[0].mxu0
    %2426 = vmatprep.mubr.f32.mxu0 0.0
    %2427 = vmatmul.mubr.f32.gmra.mrb[0].mxu0 %v2097
    %v2428 = vpop.f32.mrb[0].mxu0
    %v2429 = vadd.f32 %v1982, %v2428
    %v2430 = vpop.f32.mrb[0].mxu0
    %2431 = vmatprep.mubr.f32.mxu0 0.0
    %2432 = vmatmul.mubr.f32.gmra.mrb[0].mxu0 %v2100
    %v2433 = vpop.f32.mrb[0].mxu0
    %v2434 = vadd.f32 %v1982, %v2433
    %v2435 = vpop.f32.mrb[0].mxu0
    %2436 = vmatprep.mubr.f32.mxu0 0.0
    %2437 = vmatmul.mubr.f32.gmra.mrb[0].mxu0 %v2103
    %v2438 = vpop.f32.mrb[0].mxu0
    %v2439 = vadd.f32 %v1982, %v2438
    %v2440 = vpop.f32.mrb[0].mxu0
    %2441 = vmatprep.mubr.f32.mxu0 0.0
    %2442 = vmatmul.mubr.f32.gmra.mrb[0].mxu0 %v2106
    %v2443 = vpop.f32.mrb[0].mxu0
    %v2444 = vadd.f32 %v1982, %v2443
    %v2445 = vpop.f32.mrb[0].mxu0
    %2446 = vmatprep.mubr.f32.mxu0 0.0
    %2447 = vmatmul.mubr.f32.gmra.mrb[0].mxu0 %v2109
    %v2448 = vpop.f32.mrb[0].mxu0
    %v2449 = vadd.f32 %v1982, %v2448
    %v2450 = vpop.f32.mrb[0].mxu0
    %2451 = vmatprep.mubr.f32.mxu0 0.0
    %2452 = vmatmul.mubr.f32.gmra.mrb[0].mxu0 %v2112
    %v2453 = vpop.f32.mrb[0].mxu0
    %v2454 = vadd.f32 %v1982, %v2453
    %v2455 = vpop.f32.mrb[0].mxu0
    %2456 = vmatprep.mubr.f32.mxu0 0.0
    %2457 = vmatmul.mubr.f32.gmra.mrb[0].mxu0 %v2115
    %v2458 = vpop.f32.mrb[0].mxu0
    %v2459 = vadd.f32 %v1982, %v2458
    %v2460 = vpop.f32.mrb[0].mxu0
    %2461 = vmatprep.mubr.f32.mxu0 0.0
    %2462 = vmatmul.mubr.f32.gmra.mrb[0].mxu0 %v2118
    %v2463 = vpop.f32.mrb[0].mxu0
    %v2464 = vadd.f32 %v1982, %v2463
    %v2465 = vpop.f32.mrb[0].mxu0
    %2466 = vmatprep.mubr.f32.mxu0 0.0
    %2467 = vmatmul.mubr.f32.gmra.mrb[0].mxu0 %v2121
    %v2468 = vpop.f32.mrb[0].mxu0
    %v2469 = vadd.f32 %v1982, %v2468
    %v2470 = vpop.f32.mrb[0].mxu0
    %2471 = vmatprep.mubr.f32.mxu0 0.0
    %2472 = vmatmul.mubr.f32.gmra.mrb[0].mxu0 %v2124
    %v2473 = vpop.f32.mrb[0].mxu0
    %v2474 = vadd.f32 %v1982, %v2473
    %v2475 = vpop.f32.mrb[0].mxu0
    %2476 = vmatprep.mubr.f32.mxu0 0.0
    %2477 = vmatmul.mubr.f32.gmra.mrb[0].mxu0 %v2127
    %v2478 = vpop.f32.mrb[0].mxu0
    %v2479 = vadd.f32 %v1982, %v2478
    %v2480 = vpop.f32.mrb[0].mxu0
    %2481 = vmatprep.mubr.f32.mxu0 0.0
    %2482 = vmatmul.mubr.f32.gmra.mrb[0].mxu0 %v2130
    %v2483 = vpop.f32.mrb[0].mxu0
    %v2484 = vadd.f32 %v1982, %v2483
    %v2485 = vpop.f32.mrb[0].mxu0
    %2486 = vmatprep.mubr.f32.mxu0 0.0
    %2487 = vmatmul.mubr.f32.gmra.mrb[0].mxu0 %v2133
    %v2488 = vpop.f32.mrb[0].mxu0
    %v2489 = vadd.f32 %v1982, %v2488
    %v2490 = vpop.f32.mrb[0].mxu0
    %2491 = vmatprep.mubr.f32.mxu0 0.0
    %2492 = vmatmul.mubr.f32.gmra.mrb[0].mxu0 %v2136
    %v2493 = vpop.f32.mrb[0].mxu0
    %v2494 = vadd.f32 %v1982, %v2493
    %v2495 = vpop.f32.mrb[0].mxu0
    %2496 = vmatprep.mubr.f32.mxu0 0.0
    %2497 = vmatmul.mubr.f32.gmra.mrb[0].mxu0 %v2139
    %v2498 = vpop.f32.mrb[0].mxu0
    %v2499 = vadd.f32 %v1982, %v2498
    %v2500 = vpop.f32.mrb[0].mxu0
    %2501 = vmatprep.mubr.f32.mxu0 0.0
    %2502 = vmatmul.mubr.f32.gmra.mrb[0].mxu0 %v2142
    %v2503 = vpop.f32.mrb[0].mxu0
    %v2504 = vadd.f32 %v1982, %v2503
    %v2505 = vpop.f32.mrb[0].mxu0
    %2506 = vmatprep.mubr.f32.mxu0 0.0
    %2507 = vmatmul.mubr.f32.gmra.mrb[0].mxu0 %v2145
    %v2508 = vpop.f32.mrb[0].mxu0
    %v2509 = vadd.f32 %v1982, %v2508
    %v2510 = vpop.f32.mrb[0].mxu0
    %2511 = vmatprep.mubr.f32.mxu0 0.0
    %2512 = vmatmul.mubr.f32.gmra.mrb[0].mxu0 %v2148
    %v2513 = vpop.f32.mrb[0].mxu0
    %v2514 = vadd.f32 %v1982, %v2513
    %v2515 = vpop.f32.mrb[0].mxu0
    %2516 = vmatprep.mubr.f32.mxu0 0.0
    %2517 = vmatmul.mubr.f32.gmra.mrb[0].mxu0 %v2151
    %v2518 = vpop.f32.mrb[0].mxu0
    %v2519 = vadd.f32 %v1982, %v2518
    %v2520 = vpop.f32.mrb[0].mxu0
    %2521 = vmatprep.mubr.f32.mxu0 0.0
    %2522 = vmatmul.mubr.f32.gmra.mrb[0].mxu0 %v2154
    %v2523 = vpop.f32.mrb[0].mxu0
    %v2524 = vadd.f32 %v1982, %v2523
    %v2525 = vpop.f32.mrb[0].mxu0
    %2526 = vmatprep.mubr.f32.mxu0 0.0
    %2527 = vmatmul.mubr.f32.gmra.mrb[0].mxu0 %v2157
    %v2528 = vpop.f32.mrb[0].mxu0
    %v2529 = vadd.f32 %v1982, %v2528
    %v2530 = vpop.f32.mrb[0].mxu0
    %2531 = vmatprep.mubr.f32.mxu0 0.0
    %2532 = vmatmul.mubr.f32.gmra.mrb[0].mxu0 %v2160
    %v2533 = vpop.f32.mrb[0].mxu0
    %v2534 = vadd.f32 %v1982, %v2533
    %v2535 = vpop.f32.mrb[0].mxu0
    %2536 = vmatprep.mubr.f32.mxu0 0.0
    %2537 = vmatmul.mubr.f32.gmra.mrb[0].mxu0 %v2163
    %v2538 = vpop.f32.mrb[0].mxu0
    %v2539 = vadd.f32 %v1982, %v2538
    %v2540 = vpop.f32.mrb[0].mxu0
    %2541 = vmatprep.mubr.f32.mxu0 0.0
    %2542 = vmatmul.mubr.f32.gmra.mrb[0].mxu0 %v2166
    %v2543 = vpop.f32.mrb[0].mxu0
    %v2544 = vadd.f32 %v1982, %v2543
    %v2545 = vpop.f32.mrb[0].mxu0
    %2546 = vmatprep.mubr.f32.mxu0 0.0
    %2547 = vmatmul.mubr.f32.gmra.mrb[0].mxu0 %v2169
    %v2548 = vpop.f32.mrb[0].mxu0
    %v2549 = vadd.f32 %v1982, %v2548
    %v2550 = vpop.f32.mrb[0].mxu0
    %2551 = vmatprep.mubr.f32.mxu0 0.0
    %2552 = vmatmul.mubr.f32.gmra.mrb[0].mxu0 %v2172
    %v2553 = vpop.f32.mrb[0].mxu0
    %v2554 = vadd.f32 %v1982, %v2553
    %v2555 = vpop.f32.mrb[0].mxu0
    %2556 = vmatprep.mubr.f32.mxu0 0.0
    %2557 = vmatmul.mubr.f32.gmra.mrb[0].mxu0 %v2175
    %v2558 = vpop.f32.mrb[0].mxu0
    %v2559 = vadd.f32 %v1982, %v2558
    %v2560 = vpop.f32.mrb[0].mxu0
    %2561 = vdwg.mxu0
    %v2562 = vmax.f32 %v2244, 0.0
    %v2563 = vmax.f32 %v2249, 0.0
    %v2564 = vmax.f32 %v2254, 0.0
    %v2565 = vmax.f32 %v2259, 0.0
    %v2566 = vmax.f32 %v2264, 0.0
    %v2567 = vmax.f32 %v2269, 0.0
    %v2568 = vmax.f32 %v2274, 0.0
    %v2569 = vmax.f32 %v2279, 0.0
    %v2570 = vmax.f32 %v2284, 0.0
    %v2571 = vmax.f32 %v2289, 0.0
    %v2572 = vmax.f32 %v2294, 0.0
    %v2573 = vmax.f32 %v2299, 0.0
    %v2574 = vmax.f32 %v2304, 0.0
    %v2575 = vmax.f32 %v2309, 0.0
    %v2576 = vmax.f32 %v2314, 0.0
    %v2577 = vmax.f32 %v2319, 0.0
    %v2578 = vmax.f32 %v2324, 0.0
    %v2579 = vmax.f32 %v2329, 0.0
    %v2580 = vmax.f32 %v2334, 0.0
    %v2581 = vmax.f32 %v2339, 0.0
    %v2582 = vmax.f32 %v2344, 0.0
    %v2583 = vmax.f32 %v2349, 0.0
    %v2584 = vmax.f32 %v2354, 0.0
    %v2585 = vmax.f32 %v2359, 0.0
    %v2586 = vmax.f32 %v2364, 0.0
    %v2587 = vmax.f32 %v2369, 0.0
    %v2588 = vmax.f32 %v2374, 0.0
    %v2589 = vmax.f32 %v2379, 0.0
    %v2590 = vmax.f32 %v2384, 0.0
    %v2591 = vmax.f32 %v2389, 0.0
    %v2592 = vmax.f32 %v2394, 0.0
    %v2593 = vmax.f32 %v2399, 0.0
    %v2594 = vmax.f32 %v2404, 0.0
    %v2595 = vmax.f32 %v2409, 0.0
    %v2596 = vmax.f32 %v2414, 0.0
    %v2597 = vmax.f32 %v2419, 0.0
    %v2598 = vmax.f32 %v2424, 0.0
    %v2599 = vmax.f32 %v2429, 0.0
    %v2600 = vmax.f32 %v2434, 0.0
    %v2601 = vmax.f32 %v2439, 0.0
    %v2602 = vmax.f32 %v2444, 0.0
    %v2603 = vmax.f32 %v2449, 0.0
    %v2604 = vmax.f32 %v2454, 0.0
    %v2605 = vmax.f32 %v2459, 0.0
    %v2606 = vmax.f32 %v2464, 0.0
    %v2607 = vmax.f32 %v2469, 0.0
    %v2608 = vmax.f32 %v2474, 0.0
    %v2609 = vmax.f32 %v2479, 0.0
    %v2610 = vmax.f32 %v2484, 0.0
    %v2611 = vmax.f32 %v2489, 0.0
    %v2612 = vmax.f32 %v2494, 0.0
    %v2613 = vmax.f32 %v2499, 0.0
    %v2614 = vmax.f32 %v2504, 0.0
    %v2615 = vmax.f32 %v2509, 0.0
    %v2616 = vmax.f32 %v2514, 0.0
    %v2617 = vmax.f32 %v2519, 0.0
    %v2618 = vmax.f32 %v2524, 0.0
    %v2619 = vmax.f32 %v2529, 0.0
    %v2620 = vmax.f32 %v2534, 0.0
    %v2621 = vmax.f32 %v2539, 0.0
    %v2622 = vmax.f32 %v2544, 0.0
    %v2623 = vmax.f32 %v2549, 0.0
    %v2624 = vmax.f32 %v2554, 0.0
    %v2625 = vmax.f32 %v2559, 0.0
    %v2627 = vlaneseq
    %v2628 = vshrl.u32 %v2627, 7
    %v2629 = vsub.s32 0, %v2628
    %v2630 = vrot.slane %v68, %v2629
    %2632 = vmatprep.subr.mxu0 0.0
    %2633 = vmatpush1.msra.mxu0 %v52
    %2634 = vmatprep.subr.mxu0 0.0
    %2635 = vmatpush1.msra.mxu0 %v53
    %2636 = vmatprep.subr.mxu0 0.0
    %2637 = vmatpush1.msra.mxu0 %v54
    %2638 = vmatprep.subr.mxu0 0.0
    %2639 = vmatpush1.msra.mxu0 %v55
    %2640 = vmatprep.subr.mxu0 0.0
    %2641 = vmatpush1.msra.mxu0 %v56
    %2642 = vmatprep.subr.mxu0 0.0
    %2643 = vmatpush1.msra.mxu0 %v57
    %2644 = vmatprep.subr.mxu0 0.0
    %2645 = vmatpush1.msra.mxu0 %v58
    %2646 = vmatprep.subr.mxu0 0.0
    %2647 = vmatpush1.msra.mxu0 %v59
    %2648 = vmatprep.subr.mxu0 0.0
    %2649 = vmatpush1.msra.mxu0 %v60
    %2650 = vmatprep.subr.mxu0 0.0
    %2651 = vmatpush1.msra.mxu0 %v61
    %2652 = vmatprep.subr.mxu0 0.0
    %2653 = vmatpush1.msra.mxu0 %v62
    %2654 = vmatprep.subr.mxu0 0.0
    %2655 = vmatpush1.msra.mxu0 %v63
    %2656 = vmatprep.subr.mxu0 0.0
    %2657 = vmatpush1.msra.mxu0 %v64
    %2658 = vmatprep.subr.mxu0 0.0
    %2659 = vmatpush1.msra.mxu0 %v65
    %2660 = vmatprep.subr.mxu0 0.0
    %2661 = vmatpush1.msra.mxu0 %v66
    %2662 = vmatprep.subr.mxu0 0.0
    %2663 = vmatpush1.msra.mxu0 %v67
    %2664 = vmatprep.subr.mxu0 0.0
    %2665 = vmatpush1.msra.mxu0 0.0
    %2666 = vmatprep.subr.mxu0 0.0
    %2667 = vmatpush1.msra.mxu0 0.0
    %2668 = vmatprep.subr.mxu0 0.0
    %2669 = vmatpush1.msra.mxu0 0.0
    %2670 = vmatprep.subr.mxu0 0.0
    %2671 = vmatpush1.msra.mxu0 0.0
    %2672 = vmatprep.subr.mxu0 0.0
    %2673 = vmatpush1.msra.mxu0 0.0
    %2674 = vmatprep.subr.mxu0 0.0
    %2675 = vmatpush1.msra.mxu0 0.0
    %2676 = vmatprep.subr.mxu0 0.0
    %2677 = vmatpush1.msra.mxu0 0.0
    %2678 = vmatprep.subr.mxu0 0.0
    %2679 = vmatpush1.msra.mxu0 0.0
    %2680 = vmatprep.subr.mxu0 0.0
    %2681 = vmatpush1.msra.mxu0 0.0
    %2682 = vmatprep.subr.mxu0 0.0
    %2683 = vmatpush1.msra.mxu0 0.0
    %2684 = vmatprep.subr.mxu0 0.0
    %2685 = vmatpush1.msra.mxu0 0.0
    %2686 = vmatprep.subr.mxu0 0.0
    %2687 = vmatpush1.msra.mxu0 0.0
    %2688 = vmatprep.subr.mxu0 0.0
    %2689 = vmatpush1.msra.mxu0 0.0
    %2690 = vmatprep.subr.mxu0 0.0
    %2691 = vmatpush1.msra.mxu0 0.0
    %2692 = vmatprep.subr.mxu0 0.0
    %2693 = vmatpush1.msra.mxu0 0.0
    %2694 = vmatprep.subr.mxu0 0.0
    %2695 = vmatpush1.msra.mxu0 0.0
    %2696 = vmatprep.mubr.f32.mxu0 0.0
    %2697 = vmatmul.mubr.f32.gmra.mrb[0].mxu0 %v2562
    %v2698 = vpop.f32.mrb[0].mxu0
    %v2699 = vadd.f32 %v2630, %v2698
    %v2700 = vpop.f32.mrb[0].mxu0
    %2701 = vmatprep.mubr.f32.mxu0 0.0
    %2702 = vmatmul.mubr.f32.gmra.mrb[0].mxu0 %v2563
    %v2703 = vpop.f32.mrb[0].mxu0
    %v2704 = vadd.f32 %v2630, %v2703
    %v2705 = vpop.f32.mrb[0].mxu0
    %2706 = vmatprep.mubr.f32.mxu0 0.0
    %2707 = vmatmul.mubr.f32.gmra.mrb[0].mxu0 %v2564
    %v2708 = vpop.f32.mrb[0].mxu0
    %v2709 = vadd.f32 %v2630, %v2708
    %v2710 = vpop.f32.mrb[0].mxu0
    %2711 = vmatprep.mubr.f32.mxu0 0.0
    %2712 = vmatmul.mubr.f32.gmra.mrb[0].mxu0 %v2565
    %v2713 = vpop.f32.mrb[0].mxu0
    %v2714 = vadd.f32 %v2630, %v2713
    %v2715 = vpop.f32.mrb[0].mxu0
    %2716 = vmatprep.mubr.f32.mxu0 0.0
    %2717 = vmatmul.mubr.f32.gmra.mrb[0].mxu0 %v2566
    %v2718 = vpop.f32.mrb[0].mxu0
    %v2719 = vadd.f32 %v2630, %v2718
    %v2720 = vpop.f32.mrb[0].mxu0
    %2721 = vmatprep.mubr.f32.mxu0 0.0
    %2722 = vmatmul.mubr.f32.gmra.mrb[0].mxu0 %v2567
    %v2723 = vpop.f32.mrb[0].mxu0
    %v2724 = vadd.f32 %v2630, %v2723
    %v2725 = vpop.f32.mrb[0].mxu0
    %2726 = vmatprep.mubr.f32.mxu0 0.0
    %2727 = vmatmul.mubr.f32.gmra.mrb[0].mxu0 %v2568
    %v2728 = vpop.f32.mrb[0].mxu0
    %v2729 = vadd.f32 %v2630, %v2728
    %v2730 = vpop.f32.mrb[0].mxu0
    %2731 = vmatprep.mubr.f32.mxu0 0.0
    %2732 = vmatmul.mubr.f32.gmra.mrb[0].mxu0 %v2569
    %v2733 = vpop.f32.mrb[0].mxu0
    %v2734 = vadd.f32 %v2630, %v2733
    %v2735 = vpop.f32.mrb[0].mxu0
    %2736 = vmatprep.mubr.f32.mxu0 0.0
    %2737 = vmatmul.mubr.f32.gmra.mrb[0].mxu0 %v2570
    %v2738 = vpop.f32.mrb[0].mxu0
    %v2739 = vadd.f32 %v2630, %v2738
    %v2740 = vpop.f32.mrb[0].mxu0
    %2741 = vmatprep.mubr.f32.mxu0 0.0
    %2742 = vmatmul.mubr.f32.gmra.mrb[0].mxu0 %v2571
    %v2743 = vpop.f32.mrb[0].mxu0
    %v2744 = vadd.f32 %v2630, %v2743
    %v2745 = vpop.f32.mrb[0].mxu0
    %2746 = vmatprep.mubr.f32.mxu0 0.0
    %2747 = vmatmul.mubr.f32.gmra.mrb[0].mxu0 %v2572
    %v2748 = vpop.f32.mrb[0].mxu0
    %v2749 = vadd.f32 %v2630, %v2748
    %v2750 = vpop.f32.mrb[0].mxu0
    %2751 = vmatprep.mubr.f32.mxu0 0.0
    %2752 = vmatmul.mubr.f32.gmra.mrb[0].mxu0 %v2573
    %v2753 = vpop.f32.mrb[0].mxu0
    %v2754 = vadd.f32 %v2630, %v2753
    %v2755 = vpop.f32.mrb[0].mxu0
    %2756 = vmatprep.mubr.f32.mxu0 0.0
    %2757 = vmatmul.mubr.f32.gmra.mrb[0].mxu0 %v2574
    %v2758 = vpop.f32.mrb[0].mxu0
    %v2759 = vadd.f32 %v2630, %v2758
    %v2760 = vpop.f32.mrb[0].mxu0
    %2761 = vmatprep.mubr.f32.mxu0 0.0
    %2762 = vmatmul.mubr.f32.gmra.mrb[0].mxu0 %v2575
    %v2763 = vpop.f32.mrb[0].mxu0
    %v2764 = vadd.f32 %v2630, %v2763
    %v2765 = vpop.f32.mrb[0].mxu0
    %2766 = vmatprep.mubr.f32.mxu0 0.0
    %2767 = vmatmul.mubr.f32.gmra.mrb[0].mxu0 %v2576
    %v2768 = vpop.f32.mrb[0].mxu0
    %v2769 = vadd.f32 %v2630, %v2768
    %v2770 = vpop.f32.mrb[0].mxu0
    %2771 = vmatprep.mubr.f32.mxu0 0.0
    %2772 = vmatmul.mubr.f32.gmra.mrb[0].mxu0 %v2577
    %v2773 = vpop.f32.mrb[0].mxu0
    %v2774 = vadd.f32 %v2630, %v2773
    %v2775 = vpop.f32.mrb[0].mxu0
    %2776 = vmatprep.mubr.f32.mxu0 0.0
    %2777 = vmatmul.mubr.f32.gmra.mrb[0].mxu0 %v2578
    %v2778 = vpop.f32.mrb[0].mxu0
    %v2779 = vadd.f32 %v2630, %v2778
    %v2780 = vpop.f32.mrb[0].mxu0
    %2781 = vmatprep.mubr.f32.mxu0 0.0
    %2782 = vmatmul.mubr.f32.gmra.mrb[0].mxu0 %v2579
    %v2783 = vpop.f32.mrb[0].mxu0
    %v2784 = vadd.f32 %v2630, %v2783
    %v2785 = vpop.f32.mrb[0].mxu0
    %2786 = vmatprep.mubr.f32.mxu0 0.0
    %2787 = vmatmul.mubr.f32.gmra.mrb[0].mxu0 %v2580
    %v2788 = vpop.f32.mrb[0].mxu0
    %v2789 = vadd.f32 %v2630, %v2788
    %v2790 = vpop.f32.mrb[0].mxu0
    %2791 = vmatprep.mubr.f32.mxu0 0.0
    %2792 = vmatmul.mubr.f32.gmra.mrb[0].mxu0 %v2581
    %v2793 = vpop.f32.mrb[0].mxu0
    %v2794 = vadd.f32 %v2630, %v2793
    %v2795 = vpop.f32.mrb[0].mxu0
    %2796 = vmatprep.mubr.f32.mxu0 0.0
    %2797 = vmatmul.mubr.f32.gmra.mrb[0].mxu0 %v2582
    %v2798 = vpop.f32.mrb[0].mxu0
    %v2799 = vadd.f32 %v2630, %v2798
    %v2800 = vpop.f32.mrb[0].mxu0
    %2801 = vmatprep.mubr.f32.mxu0 0.0
    %2802 = vmatmul.mubr.f32.gmra.mrb[0].mxu0 %v2583
    %v2803 = vpop.f32.mrb[0].mxu0
    %v2804 = vadd.f32 %v2630, %v2803
    %v2805 = vpop.f32.mrb[0].mxu0
    %2806 = vmatprep.mubr.f32.mxu0 0.0
    %2807 = vmatmul.mubr.f32.gmra.mrb[0].mxu0 %v2584
    %v2808 = vpop.f32.mrb[0].mxu0
    %v2809 = vadd.f32 %v2630, %v2808
    %v2810 = vpop.f32.mrb[0].mxu0
    %2811 = vmatprep.mubr.f32.mxu0 0.0
    %2812 = vmatmul.mubr.f32.gmra.mrb[0].mxu0 %v2585
    %v2813 = vpop.f32.mrb[0].mxu0
    %v2814 = vadd.f32 %v2630, %v2813
    %v2815 = vpop.f32.mrb[0].mxu0
    %2816 = vmatprep.mubr.f32.mxu0 0.0
    %2817 = vmatmul.mubr.f32.gmra.mrb[0].mxu0 %v2586
    %v2818 = vpop.f32.mrb[0].mxu0
    %v2819 = vadd.f32 %v2630, %v2818
    %v2820 = vpop.f32.mrb[0].mxu0
    %2821 = vmatprep.mubr.f32.mxu0 0.0
    %2822 = vmatmul.mubr.f32.gmra.mrb[0].mxu0 %v2587
    %v2823 = vpop.f32.mrb[0].mxu0
    %v2824 = vadd.f32 %v2630, %v2823
    %v2825 = vpop.f32.mrb[0].mxu0
    %2826 = vmatprep.mubr.f32.mxu0 0.0
    %2827 = vmatmul.mubr.f32.gmra.mrb[0].mxu0 %v2588
    %v2828 = vpop.f32.mrb[0].mxu0
    %v2829 = vadd.f32 %v2630, %v2828
    %v2830 = vpop.f32.mrb[0].mxu0
    %2831 = vmatprep.mubr.f32.mxu0 0.0
    %2832 = vmatmul.mubr.f32.gmra.mrb[0].mxu0 %v2589
    %v2833 = vpop.f32.mrb[0].mxu0
    %v2834 = vadd.f32 %v2630, %v2833
    %v2835 = vpop.f32.mrb[0].mxu0
    %2836 = vmatprep.mubr.f32.mxu0 0.0
    %2837 = vmatmul.mubr.f32.gmra.mrb[0].mxu0 %v2590
    %v2838 = vpop.f32.mrb[0].mxu0
    %v2839 = vadd.f32 %v2630, %v2838
    %v2840 = vpop.f32.mrb[0].mxu0
    %2841 = vmatprep.mubr.f32.mxu0 0.0
    %2842 = vmatmul.mubr.f32.gmra.mrb[0].mxu0 %v2591
    %v2843 = vpop.f32.mrb[0].mxu0
    %v2844 = vadd.f32 %v2630, %v2843
    %v2845 = vpop.f32.mrb[0].mxu0
    %2846 = vmatprep.mubr.f32.mxu0 0.0
    %2847 = vmatmul.mubr.f32.gmra.mrb[0].mxu0 %v2592
    %v2848 = vpop.f32.mrb[0].mxu0
    %v2849 = vadd.f32 %v2630, %v2848
    %v2850 = vpop.f32.mrb[0].mxu0
    %2851 = vmatprep.mubr.f32.mxu0 0.0
    %2852 = vmatmul.mubr.f32.gmra.mrb[0].mxu0 %v2593
    %v2853 = vpop.f32.mrb[0].mxu0
    %v2854 = vadd.f32 %v2630, %v2853
    %v2855 = vpop.f32.mrb[0].mxu0
    %2856 = vmatprep.mubr.f32.mxu0 0.0
    %2857 = vmatmul.mubr.f32.gmra.mrb[0].mxu0 %v2594
    %v2858 = vpop.f32.mrb[0].mxu0
    %v2859 = vadd.f32 %v2630, %v2858
    %v2860 = vpop.f32.mrb[0].mxu0
    %2861 = vmatprep.mubr.f32.mxu0 0.0
    %2862 = vmatmul.mubr.f32.gmra.mrb[0].mxu0 %v2595
    %v2863 = vpop.f32.mrb[0].mxu0
    %v2864 = vadd.f32 %v2630, %v2863
    %v2865 = vpop.f32.mrb[0].mxu0
    %2866 = vmatprep.mubr.f32.mxu0 0.0
    %2867 = vmatmul.mubr.f32.gmra.mrb[0].mxu0 %v2596
    %v2868 = vpop.f32.mrb[0].mxu0
    %v2869 = vadd.f32 %v2630, %v2868
    %v2870 = vpop.f32.mrb[0].mxu0
    %2871 = vmatprep.mubr.f32.mxu0 0.0
    %2872 = vmatmul.mubr.f32.gmra.mrb[0].mxu0 %v2597
    %v2873 = vpop.f32.mrb[0].mxu0
    %v2874 = vadd.f32 %v2630, %v2873
    %v2875 = vpop.f32.mrb[0].mxu0
    %2876 = vmatprep.mubr.f32.mxu0 0.0
    %2877 = vmatmul.mubr.f32.gmra.mrb[0].mxu0 %v2598
    %v2878 = vpop.f32.mrb[0].mxu0
    %v2879 = vadd.f32 %v2630, %v2878
    %v2880 = vpop.f32.mrb[0].mxu0
    %2881 = vmatprep.mubr.f32.mxu0 0.0
    %2882 = vmatmul.mubr.f32.gmra.mrb[0].mxu0 %v2599
    %v2883 = vpop.f32.mrb[0].mxu0
    %v2884 = vadd.f32 %v2630, %v2883
    %v2885 = vpop.f32.mrb[0].mxu0
    %2886 = vmatprep.mubr.f32.mxu0 0.0
    %2887 = vmatmul.mubr.f32.gmra.mrb[0].mxu0 %v2600
    %v2888 = vpop.f32.mrb[0].mxu0
    %v2889 = vadd.f32 %v2630, %v2888
    %v2890 = vpop.f32.mrb[0].mxu0
    %2891 = vmatprep.mubr.f32.mxu0 0.0
    %2892 = vmatmul.mubr.f32.gmra.mrb[0].mxu0 %v2601
    %v2893 = vpop.f32.mrb[0].mxu0
    %v2894 = vadd.f32 %v2630, %v2893
    %v2895 = vpop.f32.mrb[0].mxu0
    %2896 = vmatprep.mubr.f32.mxu0 0.0
    %2897 = vmatmul.mubr.f32.gmra.mrb[0].mxu0 %v2602
    %v2898 = vpop.f32.mrb[0].mxu0
    %v2899 = vadd.f32 %v2630, %v2898
    %v2900 = vpop.f32.mrb[0].mxu0
    %2901 = vmatprep.mubr.f32.mxu0 0.0
    %2902 = vmatmul.mubr.f32.gmra.mrb[0].mxu0 %v2603
    %v2903 = vpop.f32.mrb[0].mxu0
    %v2904 = vadd.f32 %v2630, %v2903
    %v2905 = vpop.f32.mrb[0].mxu0
    %2906 = vmatprep.mubr.f32.mxu0 0.0
    %2907 = vmatmul.mubr.f32.gmra.mrb[0].mxu0 %v2604
    %v2908 = vpop.f32.mrb[0].mxu0
    %v2909 = vadd.f32 %v2630, %v2908
    %v2910 = vpop.f32.mrb[0].mxu0
    %2911 = vmatprep.mubr.f32.mxu0 0.0
    %2912 = vmatmul.mubr.f32.gmra.mrb[0].mxu0 %v2605
    %v2913 = vpop.f32.mrb[0].mxu0
    %v2914 = vadd.f32 %v2630, %v2913
    %v2915 = vpop.f32.mrb[0].mxu0
    %2916 = vmatprep.mubr.f32.mxu0 0.0
    %2917 = vmatmul.mubr.f32.gmra.mrb[0].mxu0 %v2606
    %v2918 = vpop.f32.mrb[0].mxu0
    %v2919 = vadd.f32 %v2630, %v2918
    %v2920 = vpop.f32.mrb[0].mxu0
    %2921 = vmatprep.mubr.f32.mxu0 0.0
    %2922 = vmatmul.mubr.f32.gmra.mrb[0].mxu0 %v2607
    %v2923 = vpop.f32.mrb[0].mxu0
    %v2924 = vadd.f32 %v2630, %v2923
    %v2925 = vpop.f32.mrb[0].mxu0
    %2926 = vmatprep.mubr.f32.mxu0 0.0
    %2927 = vmatmul.mubr.f32.gmra.mrb[0].mxu0 %v2608
    %v2928 = vpop.f32.mrb[0].mxu0
    %v2929 = vadd.f32 %v2630, %v2928
    %v2930 = vpop.f32.mrb[0].mxu0
    %2931 = vmatprep.mubr.f32.mxu0 0.0
    %2932 = vmatmul.mubr.f32.gmra.mrb[0].mxu0 %v2609
    %v2933 = vpop.f32.mrb[0].mxu0
    %v2934 = vadd.f32 %v2630, %v2933
    %v2935 = vpop.f32.mrb[0].mxu0
    %2936 = vmatprep.mubr.f32.mxu0 0.0
    %2937 = vmatmul.mubr.f32.gmra.mrb[0].mxu0 %v2610
    %v2938 = vpop.f32.mrb[0].mxu0
    %v2939 = vadd.f32 %v2630, %v2938
    %v2940 = vpop.f32.mrb[0].mxu0
    %2941 = vmatprep.mubr.f32.mxu0 0.0
    %2942 = vmatmul.mubr.f32.gmra.mrb[0].mxu0 %v2611
    %v2943 = vpop.f32.mrb[0].mxu0
    %v2944 = vadd.f32 %v2630, %v2943
    %v2945 = vpop.f32.mrb[0].mxu0
    %2946 = vmatprep.mubr.f32.mxu0 0.0
    %2947 = vmatmul.mubr.f32.gmra.mrb[0].mxu0 %v2612
    %v2948 = vpop.f32.mrb[0].mxu0
    %v2949 = vadd.f32 %v2630, %v2948
    %v2950 = vpop.f32.mrb[0].mxu0
    %2951 = vmatprep.mubr.f32.mxu0 0.0
    %2952 = vmatmul.mubr.f32.gmra.mrb[0].mxu0 %v2613
    %v2953 = vpop.f32.mrb[0].mxu0
    %v2954 = vadd.f32 %v2630, %v2953
    %v2955 = vpop.f32.mrb[0].mxu0
    %2956 = vmatprep.mubr.f32.mxu0 0.0
    %2957 = vmatmul.mubr.f32.gmra.mrb[0].mxu0 %v2614
    %v2958 = vpop.f32.mrb[0].mxu0
    %v2959 = vadd.f32 %v2630, %v2958
    %v2960 = vpop.f32.mrb[0].mxu0
    %2961 = vmatprep.mubr.f32.mxu0 0.0
    %2962 = vmatmul.mubr.f32.gmra.mrb[0].mxu0 %v2615
    %v2963 = vpop.f32.mrb[0].mxu0
    %v2964 = vadd.f32 %v2630, %v2963
    %v2965 = vpop.f32.mrb[0].mxu0
    %2966 = vmatprep.mubr.f32.mxu0 0.0
    %2967 = vmatmul.mubr.f32.gmra.mrb[0].mxu0 %v2616
    %v2968 = vpop.f32.mrb[0].mxu0
    %v2969 = vadd.f32 %v2630, %v2968
    %v2970 = vpop.f32.mrb[0].mxu0
    %2971 = vmatprep.mubr.f32.mxu0 0.0
    %2972 = vmatmul.mubr.f32.gmra.mrb[0].mxu0 %v2617
    %v2973 = vpop.f32.mrb[0].mxu0
    %v2974 = vadd.f32 %v2630, %v2973
    %v2975 = vpop.f32.mrb[0].mxu0
    %2976 = vmatprep.mubr.f32.mxu0 0.0
    %2977 = vmatmul.mubr.f32.gmra.mrb[0].mxu0 %v2618
    %v2978 = vpop.f32.mrb[0].mxu0
    %v2979 = vadd.f32 %v2630, %v2978
    %v2980 = vpop.f32.mrb[0].mxu0
    %2981 = vmatprep.mubr.f32.mxu0 0.0
    %2982 = vmatmul.mubr.f32.gmra.mrb[0].mxu0 %v2619
    %v2983 = vpop.f32.mrb[0].mxu0
    %v2984 = vadd.f32 %v2630, %v2983
    %v2985 = vpop.f32.mrb[0].mxu0
    %2986 = vmatprep.mubr.f32.mxu0 0.0
    %2987 = vmatmul.mubr.f32.gmra.mrb[0].mxu0 %v2620
    %v2988 = vpop.f32.mrb[0].mxu0
    %v2989 = vadd.f32 %v2630, %v2988
    %v2990 = vpop.f32.mrb[0].mxu0
    %2991 = vmatprep.mubr.f32.mxu0 0.0
    %2992 = vmatmul.mubr.f32.gmra.mrb[0].mxu0 %v2621
    %v2993 = vpop.f32.mrb[0].mxu0
    %v2994 = vadd.f32 %v2630, %v2993
    %v2995 = vpop.f32.mrb[0].mxu0
    %2996 = vmatprep.mubr.f32.mxu0 0.0
    %2997 = vmatmul.mubr.f32.gmra.mrb[0].mxu0 %v2622
    %v2998 = vpop.f32.mrb[0].mxu0
    %v2999 = vadd.f32 %v2630, %v2998
    %v3000 = vpop.f32.mrb[0].mxu0
    %3001 = vmatprep.mubr.f32.mxu0 0.0
    %3002 = vmatmul.mubr.f32.gmra.mrb[0].mxu0 %v2623
    %v3003 = vpop.f32.mrb[0].mxu0
    %v3004 = vadd.f32 %v2630, %v3003
    %v3005 = vpop.f32.mrb[0].mxu0
    %3006 = vmatprep.mubr.f32.mxu0 0.0
    %3007 = vmatmul.mubr.f32.gmra.mrb[0].mxu0 %v2624
    %v3008 = vpop.f32.mrb[0].mxu0
    %v3009 = vadd.f32 %v2630, %v3008
    %v3010 = vpop.f32.mrb[0].mxu0
    %3011 = vmatprep.mubr.f32.mxu0 0.0
    %3012 = vmatmul.mubr.f32.gmra.mrb[0].mxu0 %v2625
    %v3013 = vpop.f32.mrb[0].mxu0
    %v3014 = vadd.f32 %v2630, %v3013
    %v3015 = vpop.f32.mrb[0].mxu0
    %3016 = vdwg.mxu0
    %v3017 = vmax.f32 %v2699, 0.0
    %v3018 = vmax.f32 %v2704, 0.0
    %v3019 = vmax.f32 %v2709, 0.0
    %v3020 = vmax.f32 %v2714, 0.0
    %v3021 = vmax.f32 %v2719, 0.0
    %v3022 = vmax.f32 %v2724, 0.0
    %v3023 = vmax.f32 %v2729, 0.0
    %v3024 = vmax.f32 %v2734, 0.0
    %v3025 = vmax.f32 %v2739, 0.0
    %v3026 = vmax.f32 %v2744, 0.0
    %v3027 = vmax.f32 %v2749, 0.0
    %v3028 = vmax.f32 %v2754, 0.0
    %v3029 = vmax.f32 %v2759, 0.0
    %v3030 = vmax.f32 %v2764, 0.0
    %v3031 = vmax.f32 %v2769, 0.0
    %v3032 = vmax.f32 %v2774, 0.0
    %v3033 = vmax.f32 %v2779, 0.0
    %v3034 = vmax.f32 %v2784, 0.0
    %v3035 = vmax.f32 %v2789, 0.0
    %v3036 = vmax.f32 %v2794, 0.0
    %v3037 = vmax.f32 %v2799, 0.0
    %v3038 = vmax.f32 %v2804, 0.0
    %v3039 = vmax.f32 %v2809, 0.0
    %v3040 = vmax.f32 %v2814, 0.0
    %v3041 = vmax.f32 %v2819, 0.0
    %v3042 = vmax.f32 %v2824, 0.0
    %v3043 = vmax.f32 %v2829, 0.0
    %v3044 = vmax.f32 %v2834, 0.0
    %v3045 = vmax.f32 %v2839, 0.0
    %v3046 = vmax.f32 %v2844, 0.0
    %v3047 = vmax.f32 %v2849, 0.0
    %v3048 = vmax.f32 %v2854, 0.0
    %v3049 = vmax.f32 %v2859, 0.0
    %v3050 = vmax.f32 %v2864, 0.0
    %v3051 = vmax.f32 %v2869, 0.0
    %v3052 = vmax.f32 %v2874, 0.0
    %v3053 = vmax.f32 %v2879, 0.0
    %v3054 = vmax.f32 %v2884, 0.0
    %v3055 = vmax.f32 %v2889, 0.0
    %v3056 = vmax.f32 %v2894, 0.0
    %v3057 = vmax.f32 %v2899, 0.0
    %v3058 = vmax.f32 %v2904, 0.0
    %v3059 = vmax.f32 %v2909, 0.0
    %v3060 = vmax.f32 %v2914, 0.0
    %v3061 = vmax.f32 %v2919, 0.0
    %v3062 = vmax.f32 %v2924, 0.0
    %v3063 = vmax.f32 %v2929, 0.0
    %v3064 = vmax.f32 %v2934, 0.0
    %v3065 = vmax.f32 %v2939, 0.0
    %v3066 = vmax.f32 %v2944, 0.0
    %v3067 = vmax.f32 %v2949, 0.0
    %v3068 = vmax.f32 %v2954, 0.0
    %v3069 = vmax.f32 %v2959, 0.0
    %v3070 = vmax.f32 %v2964, 0.0
    %v3071 = vmax.f32 %v2969, 0.0
    %v3072 = vmax.f32 %v2974, 0.0
    %v3073 = vmax.f32 %v2979, 0.0
    %v3074 = vmax.f32 %v2984, 0.0
    %v3075 = vmax.f32 %v2989, 0.0
    %v3076 = vmax.f32 %v2994, 0.0
    %v3077 = vmax.f32 %v2999, 0.0
    %v3078 = vmax.f32 %v3004, 0.0
    %v3079 = vmax.f32 %v3009, 0.0
    %v3080 = vmax.f32 %v3014, 0.0
    %v3082 = vlaneseq
    %v3083 = vshrl.u32 %v3082, 7
    %v3084 = vsub.s32 0, %v3083
    %v3085 = vrot.slane %v71, %v3084
    %v3088 = vsel %vm1984, %v3017, 0
    %v3091 = vsel %vm1984, %v3018, 0
    %v3094 = vsel %vm1984, %v3019, 0
    %v3097 = vsel %vm1984, %v3020, 0
    %v3100 = vsel %vm1984, %v3021, 0
    %v3103 = vsel %vm1984, %v3022, 0
    %v3106 = vsel %vm1984, %v3023, 0
    %v3109 = vsel %vm1984, %v3024, 0
    %v3112 = vsel %vm1984, %v3025, 0
    %v3115 = vsel %vm1984, %v3026, 0
    %v3118 = vsel %vm1984, %v3027, 0
    %v3121 = vsel %vm1984, %v3028, 0
    %v3124 = vsel %vm1984, %v3029, 0
    %v3127 = vsel %vm1984, %v3030, 0
    %v3130 = vsel %vm1984, %v3031, 0
    %v3133 = vsel %vm1984, %v3032, 0
    %v3136 = vsel %vm1984, %v3033, 0
    %v3139 = vsel %vm1984, %v3034, 0
    %v3142 = vsel %vm1984, %v3035, 0
    %v3145 = vsel %vm1984, %v3036, 0
    %v3148 = vsel %vm1984, %v3037, 0
    %v3151 = vsel %vm1984, %v3038, 0
    %v3154 = vsel %vm1984, %v3039, 0
    %v3157 = vsel %vm1984, %v3040, 0
    %v3160 = vsel %vm1984, %v3041, 0
    %v3163 = vsel %vm1984, %v3042, 0
    %v3166 = vsel %vm1984, %v3043, 0
    %v3169 = vsel %vm1984, %v3044, 0
    %v3172 = vsel %vm1984, %v3045, 0
    %v3175 = vsel %vm1984, %v3046, 0
    %v3178 = vsel %vm1984, %v3047, 0
    %v3181 = vsel %vm1984, %v3048, 0
    %v3184 = vsel %vm1984, %v3049, 0
    %v3187 = vsel %vm1984, %v3050, 0
    %v3190 = vsel %vm1984, %v3051, 0
    %v3193 = vsel %vm1984, %v3052, 0
    %v3196 = vsel %vm1984, %v3053, 0
    %v3199 = vsel %vm1984, %v3054, 0
    %v3202 = vsel %vm1984, %v3055, 0
    %v3205 = vsel %vm1984, %v3056, 0
    %v3208 = vsel %vm1984, %v3057, 0
    %v3211 = vsel %vm1984, %v3058, 0
    %v3214 = vsel %vm1984, %v3059, 0
    %v3217 = vsel %vm1984, %v3060, 0
    %v3220 = vsel %vm1984, %v3061, 0
    %v3223 = vsel %vm1984, %v3062, 0
    %v3226 = vsel %vm1984, %v3063, 0
    %v3229 = vsel %vm1984, %v3064, 0
    %v3232 = vsel %vm1984, %v3065, 0
    %v3235 = vsel %vm1984, %v3066, 0
    %v3238 = vsel %vm1984, %v3067, 0
    %v3241 = vsel %vm1984, %v3068, 0
    %v3244 = vsel %vm1984, %v3069, 0
    %v3247 = vsel %vm1984, %v3070, 0
    %v3250 = vsel %vm1984, %v3071, 0
    %v3253 = vsel %vm1984, %v3072, 0
    %v3256 = vsel %vm1984, %v3073, 0
    %v3259 = vsel %vm1984, %v3074, 0
    %v3262 = vsel %vm1984, %v3075, 0
    %v3265 = vsel %vm1984, %v3076, 0
    %v3268 = vsel %vm1984, %v3077, 0
    %v3271 = vsel %vm1984, %v3078, 0
    %v3274 = vsel %vm1984, %v3079, 0
    %v3277 = vsel %vm1984, %v3080, 0
    %3279 = vmatprep.subr.mxu0 0.0
    %3280 = vmatpush1.msra.mxu0 %v69
    %3281 = vmatprep.subr.mxu0 0.0
    %3282 = vmatpush1.msra.mxu0 %v70
    %3283 = vmatprep.subr.mxu0 0.0
    %3284 = vmatpush1.msra.mxu0 0.0
    %3285 = vmatprep.subr.mxu0 0.0
    %3286 = vmatpush1.msra.mxu0 0.0
    %3287 = vmatprep.subr.mxu0 0.0
    %3288 = vmatpush1.msra.mxu0 0.0
    %3289 = vmatprep.subr.mxu0 0.0
    %3290 = vmatpush1.msra.mxu0 0.0
    %3291 = vmatprep.subr.mxu0 0.0
    %3292 = vmatpush1.msra.mxu0 0.0
    %3293 = vmatprep.subr.mxu0 0.0
    %3294 = vmatpush1.msra.mxu0 0.0
    %3295 = vmatprep.subr.mxu0 0.0
    %3296 = vmatpush1.msra.mxu0 0.0
    %3297 = vmatprep.subr.mxu0 0.0
    %3298 = vmatpush1.msra.mxu0 0.0
    %3299 = vmatprep.subr.mxu0 0.0
    %3300 = vmatpush1.msra.mxu0 0.0
    %3301 = vmatprep.subr.mxu0 0.0
    %3302 = vmatpush1.msra.mxu0 0.0
    %3303 = vmatprep.subr.mxu0 0.0
    %3304 = vmatpush1.msra.mxu0 0.0
    %3305 = vmatprep.subr.mxu0 0.0
    %3306 = vmatpush1.msra.mxu0 0.0
    %3307 = vmatprep.subr.mxu0 0.0
    %3308 = vmatpush1.msra.mxu0 0.0
    %3309 = vmatprep.subr.mxu0 0.0
    %3310 = vmatpush1.msra.mxu0 0.0
    %3311 = vmatprep.subr.mxu0 0.0
    %3312 = vmatpush1.msra.mxu0 0.0
    %3313 = vmatprep.subr.mxu0 0.0
    %3314 = vmatpush1.msra.mxu0 0.0
    %3315 = vmatprep.subr.mxu0 0.0
    %3316 = vmatpush1.msra.mxu0 0.0
    %3317 = vmatprep.subr.mxu0 0.0
    %3318 = vmatpush1.msra.mxu0 0.0
    %3319 = vmatprep.subr.mxu0 0.0
    %3320 = vmatpush1.msra.mxu0 0.0
    %3321 = vmatprep.subr.mxu0 0.0
    %3322 = vmatpush1.msra.mxu0 0.0
    %3323 = vmatprep.subr.mxu0 0.0
    %3324 = vmatpush1.msra.mxu0 0.0
    %3325 = vmatprep.subr.mxu0 0.0
    %3326 = vmatpush1.msra.mxu0 0.0
    %3327 = vmatprep.subr.mxu0 0.0
    %3328 = vmatpush1.msra.mxu0 0.0
    %3329 = vmatprep.subr.mxu0 0.0
    %3330 = vmatpush1.msra.mxu0 0.0
    %3331 = vmatprep.subr.mxu0 0.0
    %3332 = vmatpush1.msra.mxu0 0.0
    %3333 = vmatprep.subr.mxu0 0.0
    %3334 = vmatpush1.msra.mxu0 0.0
    %3335 = vmatprep.subr.mxu0 0.0
    %3336 = vmatpush1.msra.mxu0 0.0
    %3337 = vmatprep.subr.mxu0 0.0
    %3338 = vmatpush1.msra.mxu0 0.0
    %3339 = vmatprep.subr.mxu0 0.0
    %3340 = vmatpush1.msra.mxu0 0.0
    %3341 = vmatprep.subr.mxu0 0.0
    %3342 = vmatpush1.msra.mxu0 0.0
    %3343 = vmatprep.mubr.f32.mxu0 0.0
    %3344 = vmatmul.mubr.f32.gmra.mrb[0].mxu0 %v3088
    %v3345 = vpop.f32.mrb[0].mxu0
    %v3346 = vadd.f32 %v3085, %v3345
    %v3347 = vpop.f32.mrb[0].mxu0
    %3348 = vmatprep.mubr.f32.mxu0 0.0
    %3349 = vmatmul.mubr.f32.gmra.mrb[0].mxu0 %v3091
    %v3350 = vpop.f32.mrb[0].mxu0
    %v3351 = vadd.f32 %v3085, %v3350
    %v3352 = vpop.f32.mrb[0].mxu0
    %3353 = vmatprep.mubr.f32.mxu0 0.0
    %3354 = vmatmul.mubr.f32.gmra.mrb[0].mxu0 %v3094
    %v3355 = vpop.f32.mrb[0].mxu0
    %v3356 = vadd.f32 %v3085, %v3355
    %v3357 = vpop.f32.mrb[0].mxu0
    %3358 = vmatprep.mubr.f32.mxu0 0.0
    %3359 = vmatmul.mubr.f32.gmra.mrb[0].mxu0 %v3097
    %v3360 = vpop.f32.mrb[0].mxu0
    %v3361 = vadd.f32 %v3085, %v3360
    %v3362 = vpop.f32.mrb[0].mxu0
    %3363 = vmatprep.mubr.f32.mxu0 0.0
    %3364 = vmatmul.mubr.f32.gmra.mrb[0].mxu0 %v3100
    %v3365 = vpop.f32.mrb[0].mxu0
    %v3366 = vadd.f32 %v3085, %v3365
    %v3367 = vpop.f32.mrb[0].mxu0
    %3368 = vmatprep.mubr.f32.mxu0 0.0
    %3369 = vmatmul.mubr.f32.gmra.mrb[0].mxu0 %v3103
    %v3370 = vpop.f32.mrb[0].mxu0
    %v3371 = vadd.f32 %v3085, %v3370
    %v3372 = vpop.f32.mrb[0].mxu0
    %3373 = vmatprep.mubr.f32.mxu0 0.0
    %3374 = vmatmul.mubr.f32.gmra.mrb[0].mxu0 %v3106
    %v3375 = vpop.f32.mrb[0].mxu0
    %v3376 = vadd.f32 %v3085, %v3375
    %v3377 = vpop.f32.mrb[0].mxu0
    %3378 = vmatprep.mubr.f32.mxu0 0.0
    %3379 = vmatmul.mubr.f32.gmra.mrb[0].mxu0 %v3109
    %v3380 = vpop.f32.mrb[0].mxu0
    %v3381 = vadd.f32 %v3085, %v3380
    %v3382 = vpop.f32.mrb[0].mxu0
    %3383 = vmatprep.mubr.f32.mxu0 0.0
    %3384 = vmatmul.mubr.f32.gmra.mrb[0].mxu0 %v3112
    %v3385 = vpop.f32.mrb[0].mxu0
    %v3386 = vadd.f32 %v3085, %v3385
    %v3387 = vpop.f32.mrb[0].mxu0
    %3388 = vmatprep.mubr.f32.mxu0 0.0
    %3389 = vmatmul.mubr.f32.gmra.mrb[0].mxu0 %v3115
    %v3390 = vpop.f32.mrb[0].mxu0
    %v3391 = vadd.f32 %v3085, %v3390
    %v3392 = vpop.f32.mrb[0].mxu0
    %3393 = vmatprep.mubr.f32.mxu0 0.0
    %3394 = vmatmul.mubr.f32.gmra.mrb[0].mxu0 %v3118
    %v3395 = vpop.f32.mrb[0].mxu0
    %v3396 = vadd.f32 %v3085, %v3395
    %v3397 = vpop.f32.mrb[0].mxu0
    %3398 = vmatprep.mubr.f32.mxu0 0.0
    %3399 = vmatmul.mubr.f32.gmra.mrb[0].mxu0 %v3121
    %v3400 = vpop.f32.mrb[0].mxu0
    %v3401 = vadd.f32 %v3085, %v3400
    %v3402 = vpop.f32.mrb[0].mxu0
    %3403 = vmatprep.mubr.f32.mxu0 0.0
    %3404 = vmatmul.mubr.f32.gmra.mrb[0].mxu0 %v3124
    %v3405 = vpop.f32.mrb[0].mxu0
    %v3406 = vadd.f32 %v3085, %v3405
    %v3407 = vpop.f32.mrb[0].mxu0
    %3408 = vmatprep.mubr.f32.mxu0 0.0
    %3409 = vmatmul.mubr.f32.gmra.mrb[0].mxu0 %v3127
    %v3410 = vpop.f32.mrb[0].mxu0
    %v3411 = vadd.f32 %v3085, %v3410
    %v3412 = vpop.f32.mrb[0].mxu0
    %3413 = vmatprep.mubr.f32.mxu0 0.0
    %3414 = vmatmul.mubr.f32.gmra.mrb[0].mxu0 %v3130
    %v3415 = vpop.f32.mrb[0].mxu0
    %v3416 = vadd.f32 %v3085, %v3415
    %v3417 = vpop.f32.mrb[0].mxu0
    %3418 = vmatprep.mubr.f32.mxu0 0.0
    %3419 = vmatmul.mubr.f32.gmra.mrb[0].mxu0 %v3133
    %v3420 = vpop.f32.mrb[0].mxu0
    %v3421 = vadd.f32 %v3085, %v3420
    %v3422 = vpop.f32.mrb[0].mxu0
    %3423 = vmatprep.mubr.f32.mxu0 0.0
    %3424 = vmatmul.mubr.f32.gmra.mrb[0].mxu0 %v3136
    %v3425 = vpop.f32.mrb[0].mxu0
    %v3426 = vadd.f32 %v3085, %v3425
    %v3427 = vpop.f32.mrb[0].mxu0
    %3428 = vmatprep.mubr.f32.mxu0 0.0
    %3429 = vmatmul.mubr.f32.gmra.mrb[0].mxu0 %v3139
    %v3430 = vpop.f32.mrb[0].mxu0
    %v3431 = vadd.f32 %v3085, %v3430
    %v3432 = vpop.f32.mrb[0].mxu0
    %3433 = vmatprep.mubr.f32.mxu0 0.0
    %3434 = vmatmul.mubr.f32.gmra.mrb[0].mxu0 %v3142
    %v3435 = vpop.f32.mrb[0].mxu0
    %v3436 = vadd.f32 %v3085, %v3435
    %v3437 = vpop.f32.mrb[0].mxu0
    %3438 = vmatprep.mubr.f32.mxu0 0.0
    %3439 = vmatmul.mubr.f32.gmra.mrb[0].mxu0 %v3145
    %v3440 = vpop.f32.mrb[0].mxu0
    %v3441 = vadd.f32 %v3085, %v3440
    %v3442 = vpop.f32.mrb[0].mxu0
    %3443 = vmatprep.mubr.f32.mxu0 0.0
    %3444 = vmatmul.mubr.f32.gmra.mrb[0].mxu0 %v3148
    %v3445 = vpop.f32.mrb[0].mxu0
    %v3446 = vadd.f32 %v3085, %v3445
    %v3447 = vpop.f32.mrb[0].mxu0
    %3448 = vmatprep.mubr.f32.mxu0 0.0
    %3449 = vmatmul.mubr.f32.gmra.mrb[0].mxu0 %v3151
    %v3450 = vpop.f32.mrb[0].mxu0
    %v3451 = vadd.f32 %v3085, %v3450
    %v3452 = vpop.f32.mrb[0].mxu0
    %3453 = vmatprep.mubr.f32.mxu0 0.0
    %3454 = vmatmul.mubr.f32.gmra.mrb[0].mxu0 %v3154
    %v3455 = vpop.f32.mrb[0].mxu0
    %v3456 = vadd.f32 %v3085, %v3455
    %v3457 = vpop.f32.mrb[0].mxu0
    %3458 = vmatprep.mubr.f32.mxu0 0.0
    %3459 = vmatmul.mubr.f32.gmra.mrb[0].mxu0 %v3157
    %v3460 = vpop.f32.mrb[0].mxu0
    %v3461 = vadd.f32 %v3085, %v3460
    %v3462 = vpop.f32.mrb[0].mxu0
    %3463 = vmatprep.mubr.f32.mxu0 0.0
    %3464 = vmatmul.mubr.f32.gmra.mrb[0].mxu0 %v3160
    %v3465 = vpop.f32.mrb[0].mxu0
    %v3466 = vadd.f32 %v3085, %v3465
    %v3467 = vpop.f32.mrb[0].mxu0
    %3468 = vmatprep.mubr.f32.mxu0 0.0
    %3469 = vmatmul.mubr.f32.gmra.mrb[0].mxu0 %v3163
    %v3470 = vpop.f32.mrb[0].mxu0
    %v3471 = vadd.f32 %v3085, %v3470
    %v3472 = vpop.f32.mrb[0].mxu0
    %3473 = vmatprep.mubr.f32.mxu0 0.0
    %3474 = vmatmul.mubr.f32.gmra.mrb[0].mxu0 %v3166
    %v3475 = vpop.f32.mrb[0].mxu0
    %v3476 = vadd.f32 %v3085, %v3475
    %v3477 = vpop.f32.mrb[0].mxu0
    %3478 = vmatprep.mubr.f32.mxu0 0.0
    %3479 = vmatmul.mubr.f32.gmra.mrb[0].mxu0 %v3169
    %v3480 = vpop.f32.mrb[0].mxu0
    %v3481 = vadd.f32 %v3085, %v3480
    %v3482 = vpop.f32.mrb[0].mxu0
    %3483 = vmatprep.mubr.f32.mxu0 0.0
    %3484 = vmatmul.mubr.f32.gmra.mrb[0].mxu0 %v3172
    %v3485 = vpop.f32.mrb[0].mxu0
    %v3486 = vadd.f32 %v3085, %v3485
    %v3487 = vpop.f32.mrb[0].mxu0
    %3488 = vmatprep.mubr.f32.mxu0 0.0
    %3489 = vmatmul.mubr.f32.gmra.mrb[0].mxu0 %v3175
    %v3490 = vpop.f32.mrb[0].mxu0
    %v3491 = vadd.f32 %v3085, %v3490
    %v3492 = vpop.f32.mrb[0].mxu0
    %3493 = vmatprep.mubr.f32.mxu0 0.0
    %3494 = vmatmul.mubr.f32.gmra.mrb[0].mxu0 %v3178
    %v3495 = vpop.f32.mrb[0].mxu0
    %v3496 = vadd.f32 %v3085, %v3495
    %v3497 = vpop.f32.mrb[0].mxu0
    %3498 = vmatprep.mubr.f32.mxu0 0.0
    %3499 = vmatmul.mubr.f32.gmra.mrb[0].mxu0 %v3181
    %v3500 = vpop.f32.mrb[0].mxu0
    %v3501 = vadd.f32 %v3085, %v3500
    %v3502 = vpop.f32.mrb[0].mxu0
    %3503 = vmatprep.mubr.f32.mxu0 0.0
    %3504 = vmatmul.mubr.f32.gmra.mrb[0].mxu0 %v3184
    %v3505 = vpop.f32.mrb[0].mxu0
    %v3506 = vadd.f32 %v3085, %v3505
    %v3507 = vpop.f32.mrb[0].mxu0
    %3508 = vmatprep.mubr.f32.mxu0 0.0
    %3509 = vmatmul.mubr.f32.gmra.mrb[0].mxu0 %v3187
    %v3510 = vpop.f32.mrb[0].mxu0
    %v3511 = vadd.f32 %v3085, %v3510
    %v3512 = vpop.f32.mrb[0].mxu0
    %3513 = vmatprep.mubr.f32.mxu0 0.0
    %3514 = vmatmul.mubr.f32.gmra.mrb[0].mxu0 %v3190
    %v3515 = vpop.f32.mrb[0].mxu0
    %v3516 = vadd.f32 %v3085, %v3515
    %v3517 = vpop.f32.mrb[0].mxu0
    %3518 = vmatprep.mubr.f32.mxu0 0.0
    %3519 = vmatmul.mubr.f32.gmra.mrb[0].mxu0 %v3193
    %v3520 = vpop.f32.mrb[0].mxu0
    %v3521 = vadd.f32 %v3085, %v3520
    %v3522 = vpop.f32.mrb[0].mxu0
    %3523 = vmatprep.mubr.f32.mxu0 0.0
    %3524 = vmatmul.mubr.f32.gmra.mrb[0].mxu0 %v3196
    %v3525 = vpop.f32.mrb[0].mxu0
    %v3526 = vadd.f32 %v3085, %v3525
    %v3527 = vpop.f32.mrb[0].mxu0
    %3528 = vmatprep.mubr.f32.mxu0 0.0
    %3529 = vmatmul.mubr.f32.gmra.mrb[0].mxu0 %v3199
    %v3530 = vpop.f32.mrb[0].mxu0
    %v3531 = vadd.f32 %v3085, %v3530
    %v3532 = vpop.f32.mrb[0].mxu0
    %3533 = vmatprep.mubr.f32.mxu0 0.0
    %3534 = vmatmul.mubr.f32.gmra.mrb[0].mxu0 %v3202
    %v3535 = vpop.f32.mrb[0].mxu0
    %v3536 = vadd.f32 %v3085, %v3535
    %v3537 = vpop.f32.mrb[0].mxu0
    %3538 = vmatprep.mubr.f32.mxu0 0.0
    %3539 = vmatmul.mubr.f32.gmra.mrb[0].mxu0 %v3205
    %v3540 = vpop.f32.mrb[0].mxu0
    %v3541 = vadd.f32 %v3085, %v3540
    %v3542 = vpop.f32.mrb[0].mxu0
    %3543 = vmatprep.mubr.f32.mxu0 0.0
    %3544 = vmatmul.mubr.f32.gmra.mrb[0].mxu0 %v3208
    %v3545 = vpop.f32.mrb[0].mxu0
    %v3546 = vadd.f32 %v3085, %v3545
    %v3547 = vpop.f32.mrb[0].mxu0
    %3548 = vmatprep.mubr.f32.mxu0 0.0
    %3549 = vmatmul.mubr.f32.gmra.mrb[0].mxu0 %v3211
    %v3550 = vpop.f32.mrb[0].mxu0
    %v3551 = vadd.f32 %v3085, %v3550
    %v3552 = vpop.f32.mrb[0].mxu0
    %3553 = vmatprep.mubr.f32.mxu0 0.0
    %3554 = vmatmul.mubr.f32.gmra.mrb[0].mxu0 %v3214
    %v3555 = vpop.f32.mrb[0].mxu0
    %v3556 = vadd.f32 %v3085, %v3555
    %v3557 = vpop.f32.mrb[0].mxu0
    %3558 = vmatprep.mubr.f32.mxu0 0.0
    %3559 = vmatmul.mubr.f32.gmra.mrb[0].mxu0 %v3217
    %v3560 = vpop.f32.mrb[0].mxu0
    %v3561 = vadd.f32 %v3085, %v3560
    %v3562 = vpop.f32.mrb[0].mxu0
    %3563 = vmatprep.mubr.f32.mxu0 0.0
    %3564 = vmatmul.mubr.f32.gmra.mrb[0].mxu0 %v3220
    %v3565 = vpop.f32.mrb[0].mxu0
    %v3566 = vadd.f32 %v3085, %v3565
    %v3567 = vpop.f32.mrb[0].mxu0
    %3568 = vmatprep.mubr.f32.mxu0 0.0
    %3569 = vmatmul.mubr.f32.gmra.mrb[0].mxu0 %v3223
    %v3570 = vpop.f32.mrb[0].mxu0
    %v3571 = vadd.f32 %v3085, %v3570
    %v3572 = vpop.f32.mrb[0].mxu0
    %3573 = vmatprep.mubr.f32.mxu0 0.0
    %3574 = vmatmul.mubr.f32.gmra.mrb[0].mxu0 %v3226
    %v3575 = vpop.f32.mrb[0].mxu0
    %v3576 = vadd.f32 %v3085, %v3575
    %v3577 = vpop.f32.mrb[0].mxu0
    %3578 = vmatprep.mubr.f32.mxu0 0.0
    %3579 = vmatmul.mubr.f32.gmra.mrb[0].mxu0 %v3229
    %v3580 = vpop.f32.mrb[0].mxu0
    %v3581 = vadd.f32 %v3085, %v3580
    %v3582 = vpop.f32.mrb[0].mxu0
    %3583 = vmatprep.mubr.f32.mxu0 0.0
    %3584 = vmatmul.mubr.f32.gmra.mrb[0].mxu0 %v3232
    %v3585 = vpop.f32.mrb[0].mxu0
    %v3586 = vadd.f32 %v3085, %v3585
    %v3587 = vpop.f32.mrb[0].mxu0
    %3588 = vmatprep.mubr.f32.mxu0 0.0
    %3589 = vmatmul.mubr.f32.gmra.mrb[0].mxu0 %v3235
    %v3590 = vpop.f32.mrb[0].mxu0
    %v3591 = vadd.f32 %v3085, %v3590
    %v3592 = vpop.f32.mrb[0].mxu0
    %3593 = vmatprep.mubr.f32.mxu0 0.0
    %3594 = vmatmul.mubr.f32.gmra.mrb[0].mxu0 %v3238
    %v3595 = vpop.f32.mrb[0].mxu0
    %v3596 = vadd.f32 %v3085, %v3595
    %v3597 = vpop.f32.mrb[0].mxu0
    %3598 = vmatprep.mubr.f32.mxu0 0.0
    %3599 = vmatmul.mubr.f32.gmra.mrb[0].mxu0 %v3241
    %v3600 = vpop.f32.mrb[0].mxu0
    %v3601 = vadd.f32 %v3085, %v3600
    %v3602 = vpop.f32.mrb[0].mxu0
    %3603 = vmatprep.mubr.f32.mxu0 0.0
    %3604 = vmatmul.mubr.f32.gmra.mrb[0].mxu0 %v3244
    %v3605 = vpop.f32.mrb[0].mxu0
    %v3606 = vadd.f32 %v3085, %v3605
    %v3607 = vpop.f32.mrb[0].mxu0
    %3608 = vmatprep.mubr.f32.mxu0 0.0
    %3609 = vmatmul.mubr.f32.gmra.mrb[0].mxu0 %v3247
    %v3610 = vpop.f32.mrb[0].mxu0
    %v3611 = vadd.f32 %v3085, %v3610
    %v3612 = vpop.f32.mrb[0].mxu0
    %3613 = vmatprep.mubr.f32.mxu0 0.0
    %3614 = vmatmul.mubr.f32.gmra.mrb[0].mxu0 %v3250
    %v3615 = vpop.f32.mrb[0].mxu0
    %v3616 = vadd.f32 %v3085, %v3615
    %v3617 = vpop.f32.mrb[0].mxu0
    %3618 = vmatprep.mubr.f32.mxu0 0.0
    %3619 = vmatmul.mubr.f32.gmra.mrb[0].mxu0 %v3253
    %v3620 = vpop.f32.mrb[0].mxu0
    %v3621 = vadd.f32 %v3085, %v3620
    %v3622 = vpop.f32.mrb[0].mxu0
    %3623 = vmatprep.mubr.f32.mxu0 0.0
    %3624 = vmatmul.mubr.f32.gmra.mrb[0].mxu0 %v3256
    %v3625 = vpop.f32.mrb[0].mxu0
    %v3626 = vadd.f32 %v3085, %v3625
    %v3627 = vpop.f32.mrb[0].mxu0
    %3628 = vmatprep.mubr.f32.mxu0 0.0
    %3629 = vmatmul.mubr.f32.gmra.mrb[0].mxu0 %v3259
    %v3630 = vpop.f32.mrb[0].mxu0
    %v3631 = vadd.f32 %v3085, %v3630
    %v3632 = vpop.f32.mrb[0].mxu0
    %3633 = vmatprep.mubr.f32.mxu0 0.0
    %3634 = vmatmul.mubr.f32.gmra.mrb[0].mxu0 %v3262
    %v3635 = vpop.f32.mrb[0].mxu0
    %v3636 = vadd.f32 %v3085, %v3635
    %v3637 = vpop.f32.mrb[0].mxu0
    %3638 = vmatprep.mubr.f32.mxu0 0.0
    %3639 = vmatmul.mubr.f32.gmra.mrb[0].mxu0 %v3265
    %v3640 = vpop.f32.mrb[0].mxu0
    %v3641 = vadd.f32 %v3085, %v3640
    %v3642 = vpop.f32.mrb[0].mxu0
    %3643 = vmatprep.mubr.f32.mxu0 0.0
    %3644 = vmatmul.mubr.f32.gmra.mrb[0].mxu0 %v3268
    %v3645 = vpop.f32.mrb[0].mxu0
    %v3646 = vadd.f32 %v3085, %v3645
    %v3647 = vpop.f32.mrb[0].mxu0
    %3648 = vmatprep.mubr.f32.mxu0 0.0
    %3649 = vmatmul.mubr.f32.gmra.mrb[0].mxu0 %v3271
    %v3650 = vpop.f32.mrb[0].mxu0
    %v3651 = vadd.f32 %v3085, %v3650
    %v3652 = vpop.f32.mrb[0].mxu0
    %3653 = vmatprep.mubr.f32.mxu0 0.0
    %3654 = vmatmul.mubr.f32.gmra.mrb[0].mxu0 %v3274
    %v3655 = vpop.f32.mrb[0].mxu0
    %v3656 = vadd.f32 %v3085, %v3655
    %v3657 = vpop.f32.mrb[0].mxu0
    %3658 = vmatprep.mubr.f32.mxu0 0.0
    %3659 = vmatmul.mubr.f32.gmra.mrb[0].mxu0 %v3277
    %v3660 = vpop.f32.mrb[0].mxu0
    %v3661 = vadd.f32 %v3085, %v3660
    %v3662 = vpop.f32.mrb[0].mxu0
    %3663 = vdwg.mxu0
    %vm3664 = vcmask 392192
    %3665 = vst.msk [vmem:[#allocation2 + $0x200] sm:$0xff] %vm3664, %v3346
    %3666 = vst.msk [vmem:[#allocation2 + $0x208] sm:$0xff] %vm3664, %v3351
    %3667 = vst.msk [vmem:[#allocation2 + $0x210] sm:$0xff] %vm3664, %v3356
    %3668 = vst.msk [vmem:[#allocation2 + $0x218] sm:$0xff] %vm3664, %v3361
    %3669 = vst.msk [vmem:[#allocation2 + $0x220] sm:$0xff] %vm3664, %v3366
    %3670 = vst.msk [vmem:[#allocation2 + $0x228] sm:$0xff] %vm3664, %v3371
    %3671 = vst.msk [vmem:[#allocation2 + $0x230] sm:$0xff] %vm3664, %v3376
    %3672 = vst.msk [vmem:[#allocation2 + $0x238] sm:$0xff] %vm3664, %v3381
    %3673 = vst.msk [vmem:[#allocation2 + $0x240] sm:$0xff] %vm3664, %v3386
    %3674 = vst.msk [vmem:[#allocation2 + $0x248] sm:$0xff] %vm3664, %v3391
    %3675 = vst.msk [vmem:[#allocation2 + $0x250] sm:$0xff] %vm3664, %v3396
    %3676 = vst.msk [vmem:[#allocation2 + $0x258] sm:$0xff] %vm3664, %v3401
    %3677 = vst.msk [vmem:[#allocation2 + $0x260] sm:$0xff] %vm3664, %v3406
    %3678 = vst.msk [vmem:[#allocation2 + $0x268] sm:$0xff] %vm3664, %v3411
    %3679 = vst.msk [vmem:[#allocation2 + $0x270] sm:$0xff] %vm3664, %v3416
    %3680 = vst.msk [vmem:[#allocation2 + $0x278] sm:$0xff] %vm3664, %v3421
    %3681 = vst.msk [vmem:[#allocation2 + $0x280] sm:$0xff] %vm3664, %v3426
    %3682 = vst.msk [vmem:[#allocation2 + $0x288] sm:$0xff] %vm3664, %v3431
    %3683 = vst.msk [vmem:[#allocation2 + $0x290] sm:$0xff] %vm3664, %v3436
    %3684 = vst.msk [vmem:[#allocation2 + $0x298] sm:$0xff] %vm3664, %v3441
    %3685 = vst.msk [vmem:[#allocation2 + $0x2a0] sm:$0xff] %vm3664, %v3446
    %3686 = vst.msk [vmem:[#allocation2 + $0x2a8] sm:$0xff] %vm3664, %v3451
    %3687 = vst.msk [vmem:[#allocation2 + $0x2b0] sm:$0xff] %vm3664, %v3456
    %3688 = vst.msk [vmem:[#allocation2 + $0x2b8] sm:$0xff] %vm3664, %v3461
    %3689 = vst.msk [vmem:[#allocation2 + $0x2c0] sm:$0xff] %vm3664, %v3466
    %3690 = vst.msk [vmem:[#allocation2 + $0x2c8] sm:$0xff] %vm3664, %v3471
    %3691 = vst.msk [vmem:[#allocation2 + $0x2d0] sm:$0xff] %vm3664, %v3476
    %3692 = vst.msk [vmem:[#allocation2 + $0x2d8] sm:$0xff] %vm3664, %v3481
    %3693 = vst.msk [vmem:[#allocation2 + $0x2e0] sm:$0xff] %vm3664, %v3486
    %3694 = vst.msk [vmem:[#allocation2 + $0x2e8] sm:$0xff] %vm3664, %v3491
    %3695 = vst.msk [vmem:[#allocation2 + $0x2f0] sm:$0xff] %vm3664, %v3496
    %3696 = vst.msk [vmem:[#allocation2 + $0x2f8] sm:$0xff] %vm3664, %v3501
    %3697 = vst.msk [vmem:[#allocation2 + $0x300] sm:$0xff] %vm3664, %v3506
    %3698 = vst.msk [vmem:[#allocation2 + $0x308] sm:$0xff] %vm3664, %v3511
    %3699 = vst.msk [vmem:[#allocation2 + $0x310] sm:$0xff] %vm3664, %v3516
    %3700 = vst.msk [vmem:[#allocation2 + $0x318] sm:$0xff] %vm3664, %v3521
    %3701 = vst.msk [vmem:[#allocation2 + $0x320] sm:$0xff] %vm3664, %v3526
    %3702 = vst.msk [vmem:[#allocation2 + $0x328] sm:$0xff] %vm3664, %v3531
    %3703 = vst.msk [vmem:[#allocation2 + $0x330] sm:$0xff] %vm3664, %v3536
    %3704 = vst.msk [vmem:[#allocation2 + $0x338] sm:$0xff] %vm3664, %v3541
    %3705 = vst.msk [vmem:[#allocation2 + $0x340] sm:$0xff] %vm3664, %v3546
    %3706 = vst.msk [vmem:[#allocation2 + $0x348] sm:$0xff] %vm3664, %v3551
    %3707 = vst.msk [vmem:[#allocation2 + $0x350] sm:$0xff] %vm3664, %v3556
    %3708 = vst.msk [vmem:[#allocation2 + $0x358] sm:$0xff] %vm3664, %v3561
    %3709 = vst.msk [vmem:[#allocation2 + $0x360] sm:$0xff] %vm3664, %v3566
    %3710 = vst.msk [vmem:[#allocation2 + $0x368] sm:$0xff] %vm3664, %v3571
    %3711 = vst.msk [vmem:[#allocation2 + $0x370] sm:$0xff] %vm3664, %v3576
    %3712 = vst.msk [vmem:[#allocation2 + $0x378] sm:$0xff] %vm3664, %v3581
    %3713 = vst.msk [vmem:[#allocation2 + $0x380] sm:$0xff] %vm3664, %v3586
    %3714 = vst.msk [vmem:[#allocation2 + $0x388] sm:$0xff] %vm3664, %v3591
    %3715 = vst.msk [vmem:[#allocation2 + $0x390] sm:$0xff] %vm3664, %v3596
    %3716 = vst.msk [vmem:[#allocation2 + $0x398] sm:$0xff] %vm3664, %v3601
    %3717 = vst.msk [vmem:[#allocation2 + $0x3a0] sm:$0xff] %vm3664, %v3606
    %3718 = vst.msk [vmem:[#allocation2 + $0x3a8] sm:$0xff] %vm3664, %v3611
    %3719 = vst.msk [vmem:[#allocation2 + $0x3b0] sm:$0xff] %vm3664, %v3616
    %3720 = vst.msk [vmem:[#allocation2 + $0x3b8] sm:$0xff] %vm3664, %v3621
    %3721 = vst.msk [vmem:[#allocation2 + $0x3c0] sm:$0xff] %vm3664, %v3626
    %3722 = vst.msk [vmem:[#allocation2 + $0x3c8] sm:$0xff] %vm3664, %v3631
    %3723 = vst.msk [vmem:[#allocation2 + $0x3d0] sm:$0xff] %vm3664, %v3636
    %3724 = vst.msk [vmem:[#allocation2 + $0x3d8] sm:$0xff] %vm3664, %v3641
    %3725 = vst.msk [vmem:[#allocation2 + $0x3e0] sm:$0xff] %vm3664, %v3646
    %3726 = vst.msk [vmem:[#allocation2 + $0x3e8] sm:$0xff] %vm3664, %v3651
    %3727 = vst.msk [vmem:[#allocation2 + $0x3f0] sm:$0xff] %vm3664, %v3656
    %3728 = vst.msk [vmem:[#allocation2 + $0x3f8] sm:$0xff] %vm3664, %v3661
  $region49: #{tpu_custom_call.1} parent=0 // pred_fallthru
    _
  // While loop
  $region50: #{tpu_custom_call.1} parent=0 // loop_pre_header
    _
  $region51: #{tpu_custom_call.1} parent=0 // loop_header
    %s3730 = sphi 0, %s3732
    %p3731 = scmp.ge.s32.totalorder %s3730, %s37
  $region52: #{tpu_custom_call.1} parent=0 // loop_header_branch
    %3734 = sbr.rel (%p3731) target = $region56
  $region53: #{tpu_custom_call.1} parent=0 // loop_body
    %s3735 = smul.u32 %s3730, 128
    %s3736 = ssub.s32 %s37, 1
    %s3737 = ssub.s32 %s3736, %s3730
    %s3738 = smul.u32 %s3737, 128
    %s3739 = scalar_lea.vmem [#allocation2], %s3735
    %v3740 = vld [vmem:[%s3739] sm:$0xff]
    %v3741 = vld [vmem:[%s3739 + $0x8] sm:$0xff]
    %v3742 = vld [vmem:[%s3739 + $0x10] sm:$0xff]
    %v3743 = vld [vmem:[%s3739 + $0x18] sm:$0xff]
    %v3744 = vld [vmem:[%s3739 + $0x20] sm:$0xff]
    %v3745 = vld [vmem:[%s3739 + $0x28] sm:$0xff]
    %v3746 = vld [vmem:[%s3739 + $0x30] sm:$0xff]
    %v3747 = vld [vmem:[%s3739 + $0x38] sm:$0xff]
    %v3748 = vld [vmem:[%s3739 + $0x40] sm:$0xff]
    %v3749 = vld [vmem:[%s3739 + $0x48] sm:$0xff]
    %v3750 = vld [vmem:[%s3739 + $0x50] sm:$0xff]
    %v3751 = vld [vmem:[%s3739 + $0x58] sm:$0xff]
    %v3752 = vld [vmem:[%s3739 + $0x60] sm:$0xff]
    %v3753 = vld [vmem:[%s3739 + $0x68] sm:$0xff]
    %v3754 = vld [vmem:[%s3739 + $0x70] sm:$0xff]
    %v3755 = vld [vmem:[%s3739 + $0x78] sm:$0xff]
    %s3756 = scalar_lea.vmem [#allocation2], %s3738
    %v3757 = vld [vmem:[%s3756] sm:$0xff]
    %v3758 = vld [vmem:[%s3756 + $0x8] sm:$0xff]
    %v3759 = vld [vmem:[%s3756 + $0x10] sm:$0xff]
    %v3760 = vld [vmem:[%s3756 + $0x18] sm:$0xff]
    %v3761 = vld [vmem:[%s3756 + $0x20] sm:$0xff]
    %v3762 = vld [vmem:[%s3756 + $0x28] sm:$0xff]
    %v3763 = vld [vmem:[%s3756 + $0x30] sm:$0xff]
    %v3764 = vld [vmem:[%s3756 + $0x38] sm:$0xff]
    %v3765 = vld [vmem:[%s3756 + $0x40] sm:$0xff]
    %v3766 = vld [vmem:[%s3756 + $0x48] sm:$0xff]
    %v3767 = vld [vmem:[%s3756 + $0x50] sm:$0xff]
    %v3768 = vld [vmem:[%s3756 + $0x58] sm:$0xff]
    %v3769 = vld [vmem:[%s3756 + $0x60] sm:$0xff]
    %v3770 = vld [vmem:[%s3756 + $0x68] sm:$0xff]
    %v3771 = vld [vmem:[%s3756 + $0x70] sm:$0xff]
    %v3772 = vld [vmem:[%s3756 + $0x78] sm:$0xff]
    %v3773 = vsel %vm48, %v3740, %v3757
    %v3774 = vsel %vm48, %v3741, %v3758
    %v3775 = vsel %vm48, %v3742, %v3759
    %v3776 = vsel %vm48, %v3743, %v3760
    %v3777 = vsel %vm48, %v3744, %v3761
    %v3778 = vsel %vm48, %v3745, %v3762
    %v3779 = vsel %vm48, %v3746, %v3763
    %v3780 = vsel %vm48, %v3747, %v3764
    %v3781 = vsel %vm48, %v3748, %v3765
    %v3782 = vsel %vm48, %v3749, %v3766
    %v3783 = vsel %vm48, %v3750, %v3767
    %v3784 = vsel %vm48, %v3751, %v3768
    %v3785 = vsel %vm48, %v3752, %v3769
    %v3786 = vsel %vm48, %v3753, %v3770
    %v3787 = vsel %vm48, %v3754, %v3771
    %v3788 = vsel %vm48, %v3755, %v3772
    %s3789 = scalar_lea.vmem [#allocation3], %s3735
    %vm3790 = vcmask 392192
    %3791 = vst.msk [vmem:[%s3789] sm:$0xff] %vm3790, %v3773
    %3792 = vst.msk [vmem:[%s3789 + $0x8] sm:$0xff] %vm3790, %v3774
    %3793 = vst.msk [vmem:[%s3789 + $0x10] sm:$0xff] %vm3790, %v3775
    %3794 = vst.msk [vmem:[%s3789 + $0x18] sm:$0xff] %vm3790, %v3776
    %3795 = vst.msk [vmem:[%s3789 + $0x20] sm:$0xff] %vm3790, %v3777
    %3796 = vst.msk [vmem:[%s3789 + $0x28] sm:$0xff] %vm3790, %v3778
    %3797 = vst.msk [vmem:[%s3789 + $0x30] sm:$0xff] %vm3790, %v3779
    %3798 = vst.msk [vmem:[%s3789 + $0x38] sm:$0xff] %vm3790, %v3780
    %3799 = vst.msk [vmem:[%s3789 + $0x40] sm:$0xff] %vm3790, %v3781
    %3800 = vst.msk [vmem:[%s3789 + $0x48] sm:$0xff] %vm3790, %v3782
    %3801 = vst.msk [vmem:[%s3789 + $0x50] sm:$0xff] %vm3790, %v3783
    %3802 = vst.msk [vmem:[%s3789 + $0x58] sm:$0xff] %vm3790, %v3784
    %3803 = vst.msk [vmem:[%s3789 + $0x60] sm:$0xff] %vm3790, %v3785
    %3804 = vst.msk [vmem:[%s3789 + $0x68] sm:$0xff] %vm3790, %v3786
    %3805 = vst.msk [vmem:[%s3789 + $0x70] sm:$0xff] %vm3790, %v3787
    %3806 = vst.msk [vmem:[%s3789 + $0x78] sm:$0xff] %vm3790, %v3788
  $region54: #{tpu_custom_call.1} parent=0 // loop_footer
    %s3732 = sadd.s32 %s3730, 1
  $region55: #{tpu_custom_call.1} parent=0 // loop_footer_branch
    %3729 = sbr.rel target = $region51
  $region56: #{tpu_custom_call.1} parent=0 // loop_exit
    _
  // While loop
  $region57: #{tpu_custom_call.1} parent=0 // loop_pre_header
    _
  $region58: #{tpu_custom_call.1} parent=0 // loop_header
    %s3808 = sphi 0, %s3810
    %p3809 = scmp.ge.s32.totalorder %s3808, %s37
    %v3813 = vphi 0.0, %v5523
    %v3814 = vphi 0.0, %v5524
    %v3815 = vphi 0.0, %v5525
    %v3816 = vphi 0.0, %v5526
    %v3817 = vphi 0.0, %v5527
    %v3818 = vphi 0.0, %v5528
    %v3819 = vphi 0.0, %v5529
    %v3820 = vphi 0.0, %v5530
    %v3821 = vphi 0.0, %v5531
    %v3822 = vphi 0.0, %v5532
    %v3823 = vphi 0.0, %v5533
    %v3824 = vphi 0.0, %v5534
    %v3825 = vphi 0.0, %v5535
    %v3826 = vphi 0.0, %v5536
    %v3827 = vphi 0.0, %v5537
    %v3828 = vphi 0.0, %v5538
  $region59: #{tpu_custom_call.1} parent=0 // loop_header_branch
    %3812 = sbr.rel (%p3809) target = $region63
  $region60: #{tpu_custom_call.1} parent=0 // loop_body
    %s3829 = smul.u32 %s3808, 128
    %s3830 = scalar_lea.vmem [#allocation3], %s3829
    %v3831 = vld [vmem:[%s3830] sm:$0xff]
    %v3832 = vld [vmem:[%s3830 + $0x8] sm:$0xff]
    %v3833 = vld [vmem:[%s3830 + $0x10] sm:$0xff]
    %v3834 = vld [vmem:[%s3830 + $0x18] sm:$0xff]
    %v3835 = vld [vmem:[%s3830 + $0x20] sm:$0xff]
    %v3836 = vld [vmem:[%s3830 + $0x28] sm:$0xff]
    %v3837 = vld [vmem:[%s3830 + $0x30] sm:$0xff]
    %v3838 = vld [vmem:[%s3830 + $0x38] sm:$0xff]
    %v3839 = vld [vmem:[%s3830 + $0x40] sm:$0xff]
    %v3840 = vld [vmem:[%s3830 + $0x48] sm:$0xff]
    %v3841 = vld [vmem:[%s3830 + $0x50] sm:$0xff]
    %v3842 = vld [vmem:[%s3830 + $0x58] sm:$0xff]
    %v3843 = vld [vmem:[%s3830 + $0x60] sm:$0xff]
    %v3844 = vld [vmem:[%s3830 + $0x68] sm:$0xff]
    %v3845 = vld [vmem:[%s3830 + $0x70] sm:$0xff]
    %v3846 = vld [vmem:[%s3830 + $0x78] sm:$0xff]
    %v3848 = vlaneseq
    %v3849 = vshrl.u32 %v3848, 7
    %v3850 = vsub.s32 0, %v3849
    %v3851 = vrot.slane %v74, %v3850
    %vm3853 = vcmask 130048
    %v3855 = vsel %vm3853, %v3813, 0
    %v3858 = vsel %vm3853, %v3814, 0
    %v3861 = vsel %vm3853, %v3815, 0
    %v3864 = vsel %vm3853, %v3816, 0
    %v3867 = vsel %vm3853, %v3817, 0
    %v3870 = vsel %vm3853, %v3818, 0
    %v3873 = vsel %vm3853, %v3819, 0
    %v3876 = vsel %vm3853, %v3820, 0
    %v3879 = vsel %vm3853, %v3821, 0
    %v3882 = vsel %vm3853, %v3822, 0
    %v3885 = vsel %vm3853, %v3823, 0
    %v3888 = vsel %vm3853, %v3824, 0
    %v3891 = vsel %vm3853, %v3825, 0
    %v3894 = vsel %vm3853, %v3826, 0
    %v3897 = vsel %vm3853, %v3827, 0
    %v3900 = vsel %vm3853, %v3828, 0
    %3902 = vmatprep.subr.mxu0 0.0
    %v3903 = vand.u32 %v72, 4294901760
    %3904 = vmatpush1.msra.mxu0 %v3903
    %3905 = vmatprep.subr.mxu0 0.0
    %v3906 = vand.u32 %v73, 4294901760
    %3907 = vmatpush1.msra.mxu0 %v3906
    %3908 = vmatprep.subr.mxu0 0.0
    %3909 = vmatpush1.msra.mxu0 0.0
    %3910 = vmatprep.subr.mxu0 0.0
    %3911 = vmatpush1.msra.mxu0 0.0
    %3912 = vmatprep.subr.mxu0 0.0
    %3913 = vmatpush1.msra.mxu0 0.0
    %3914 = vmatprep.subr.mxu0 0.0
    %3915 = vmatpush1.msra.mxu0 0.0
    %3916 = vmatprep.subr.mxu0 0.0
    %3917 = vmatpush1.msra.mxu0 0.0
    %3918 = vmatprep.subr.mxu0 0.0
    %3919 = vmatpush1.msra.mxu0 0.0
    %3920 = vmatprep.subr.mxu0 0.0
    %3921 = vmatpush1.msra.mxu0 0.0
    %3922 = vmatprep.subr.mxu0 0.0
    %3923 = vmatpush1.msra.mxu0 0.0
    %3924 = vmatprep.subr.mxu0 0.0
    %3925 = vmatpush1.msra.mxu0 0.0
    %3926 = vmatprep.subr.mxu0 0.0
    %3927 = vmatpush1.msra.mxu0 0.0
    %3928 = vmatprep.subr.mxu0 0.0
    %3929 = vmatpush1.msra.mxu0 0.0
    %3930 = vmatprep.subr.mxu0 0.0
    %3931 = vmatpush1.msra.mxu0 0.0
    %3932 = vmatprep.subr.mxu0 0.0
    %3933 = vmatpush1.msra.mxu0 0.0
    %3934 = vmatprep.subr.mxu0 0.0
    %3935 = vmatpush1.msra.mxu0 0.0
    %3936 = vmatprep.subr.mxu0 0.0
    %3937 = vmatpush1.msra.mxu0 0.0
    %3938 = vmatprep.subr.mxu0 0.0
    %3939 = vmatpush1.msra.mxu0 0.0
    %3940 = vmatprep.subr.mxu0 0.0
    %3941 = vmatpush1.msra.mxu0 0.0
    %3942 = vmatprep.subr.mxu0 0.0
    %3943 = vmatpush1.msra.mxu0 0.0
    %3944 = vmatprep.subr.mxu0 0.0
    %3945 = vmatpush1.msra.mxu0 0.0
    %3946 = vmatprep.subr.mxu0 0.0
    %3947 = vmatpush1.msra.mxu0 0.0
    %3948 = vmatprep.subr.mxu0 0.0
    %3949 = vmatpush1.msra.mxu0 0.0
    %3950 = vmatprep.subr.mxu0 0.0
    %3951 = vmatpush1.msra.mxu0 0.0
    %3952 = vmatprep.subr.mxu0 0.0
    %3953 = vmatpush1.msra.mxu0 0.0
    %3954 = vmatprep.subr.mxu0 0.0
    %3955 = vmatpush1.msra.mxu0 0.0
    %3956 = vmatprep.subr.mxu0 0.0
    %3957 = vmatpush1.msra.mxu0 0.0
    %3958 = vmatprep.subr.mxu0 0.0
    %3959 = vmatpush1.msra.mxu0 0.0
    %3960 = vmatprep.subr.mxu0 0.0
    %3961 = vmatpush1.msra.mxu0 0.0
    %3962 = vmatprep.subr.mxu0 0.0
    %3963 = vmatpush1.msra.mxu0 0.0
    %3964 = vmatprep.subr.mxu0 0.0
    %3965 = vmatpush1.msra.mxu0 0.0
    %3966 = vmatprep.subr.mxu0 0.0
    %3967 = vmatpush1.msra.mxu0 0.0
    %3968 = vmatprep.mubr.f32.mxu0 0.0
    %v3969 = vand.u32 %v3855, 4294901760
    %v3970 = vsub.f32 %v3855, %v3969
    %v3971 = vand.u32 %v3970, 4294901760
    %v3972 = vsub.f32 %v3970, %v3971
    %v3973 = vand.u32 %v3972, 4294901760
    %3974 = vmatmul.mubr.f32.gmra.mrb[0].mxu0 %v3973
    %v3975 = vpop.f32.mrb[0].mxu0
    %v3976 = vadd.f32 %v3851, %v3975
    %v3977 = vpop.f32.mrb[0].mxu0
    %3978 = vmatprep.mubr.f32.mxu0 0.0
    %v3979 = vand.u32 %v3858, 4294901760
    %v3980 = vsub.f32 %v3858, %v3979
    %v3981 = vand.u32 %v3980, 4294901760
    %v3982 = vsub.f32 %v3980, %v3981
    %v3983 = vand.u32 %v3982, 4294901760
    %3984 = vmatmul.mubr.f32.gmra.mrb[0].mxu0 %v3983
    %v3985 = vpop.f32.mrb[0].mxu0
    %v3986 = vadd.f32 %v3851, %v3985
    %v3987 = vpop.f32.mrb[0].mxu0
    %3988 = vmatprep.mubr.f32.mxu0 0.0
    %v3989 = vand.u32 %v3861, 4294901760
    %v3990 = vsub.f32 %v3861, %v3989
    %v3991 = vand.u32 %v3990, 4294901760
    %v3992 = vsub.f32 %v3990, %v3991
    %v3993 = vand.u32 %v3992, 4294901760
    %3994 = vmatmul.mubr.f32.gmra.mrb[0].mxu0 %v3993
    %v3995 = vpop.f32.mrb[0].mxu0
    %v3996 = vadd.f32 %v3851, %v3995
    %v3997 = vpop.f32.mrb[0].mxu0
    %3998 = vmatprep.mubr.f32.mxu0 0.0
    %v3999 = vand.u32 %v3864, 4294901760
    %v4000 = vsub.f32 %v3864, %v3999
    %v4001 = vand.u32 %v4000, 4294901760
    %v4002 = vsub.f32 %v4000, %v4001
    %v4003 = vand.u32 %v4002, 4294901760
    %4004 = vmatmul.mubr.f32.gmra.mrb[0].mxu0 %v4003
    %v4005 = vpop.f32.mrb[0].mxu0
    %v4006 = vadd.f32 %v3851, %v4005
    %v4007 = vpop.f32.mrb[0].mxu0
    %4008 = vmatprep.mubr.f32.mxu0 0.0
    %v4009 = vand.u32 %v3867, 4294901760
    %v4010 = vsub.f32 %v3867, %v4009
    %v4011 = vand.u32 %v4010, 4294901760
    %v4012 = vsub.f32 %v4010, %v4011
    %v4013 = vand.u32 %v4012, 4294901760
    %4014 = vmatmul.mubr.f32.gmra.mrb[0].mxu0 %v4013
    %v4015 = vpop.f32.mrb[0].mxu0
    %v4016 = vadd.f32 %v3851, %v4015
    %v4017 = vpop.f32.mrb[0].mxu0
    %4018 = vmatprep.mubr.f32.mxu0 0.0
    %v4019 = vand.u32 %v3870, 4294901760
    %v4020 = vsub.f32 %v3870, %v4019
    %v4021 = vand.u32 %v4020, 4294901760
    %v4022 = vsub.f32 %v4020, %v4021
    %v4023 = vand.u32 %v4022, 4294901760
    %4024 = vmatmul.mubr.f32.gmra.mrb[0].mxu0 %v4023
    %v4025 = vpop.f32.mrb[0].mxu0
    %v4026 = vadd.f32 %v3851, %v4025
    %v4027 = vpop.f32.mrb[0].mxu0
    %4028 = vmatprep.mubr.f32.mxu0 0.0
    %v4029 = vand.u32 %v3873, 4294901760
    %v4030 = vsub.f32 %v3873, %v4029
    %v4031 = vand.u32 %v4030, 4294901760
    %v4032 = vsub.f32 %v4030, %v4031
    %v4033 = vand.u32 %v4032, 4294901760
    %4034 = vmatmul.mubr.f32.gmra.mrb[0].mxu0 %v4033
    %v4035 = vpop.f32.mrb[0].mxu0
    %v4036 = vadd.f32 %v3851, %v4035
    %v4037 = vpop.f32.mrb[0].mxu0
    %4038 = vmatprep.mubr.f32.mxu0 0.0
    %v4039 = vand.u32 %v3876, 4294901760
    %v4040 = vsub.f32 %v3876, %v4039
    %v4041 = vand.u32 %v4040, 4294901760
    %v4042 = vsub.f32 %v4040, %v4041
    %v4043 = vand.u32 %v4042, 4294901760
    %4044 = vmatmul.mubr.f32.gmra.mrb[0].mxu0 %v4043
    %v4045 = vpop.f32.mrb[0].mxu0
    %v4046 = vadd.f32 %v3851, %v4045
    %v4047 = vpop.f32.mrb[0].mxu0
    %4048 = vmatprep.mubr.f32.mxu0 0.0
    %v4049 = vand.u32 %v3879, 4294901760
    %v4050 = vsub.f32 %v3879, %v4049
    %v4051 = vand.u32 %v4050, 4294901760
    %v4052 = vsub.f32 %v4050, %v4051
    %v4053 = vand.u32 %v4052, 4294901760
    %4054 = vmatmul.mubr.f32.gmra.mrb[0].mxu0 %v4053
    %v4055 = vpop.f32.mrb[0].mxu0
    %v4056 = vadd.f32 %v3851, %v4055
    %v4057 = vpop.f32.mrb[0].mxu0
    %4058 = vmatprep.mubr.f32.mxu0 0.0
    %v4059 = vand.u32 %v3882, 4294901760
    %v4060 = vsub.f32 %v3882, %v4059
    %v4061 = vand.u32 %v4060, 4294901760
    %v4062 = vsub.f32 %v4060, %v4061
    %v4063 = vand.u32 %v4062, 4294901760
    %4064 = vmatmul.mubr.f32.gmra.mrb[0].mxu0 %v4063
    %v4065 = vpop.f32.mrb[0].mxu0
    %v4066 = vadd.f32 %v3851, %v4065
    %v4067 = vpop.f32.mrb[0].mxu0
    %4068 = vmatprep.mubr.f32.mxu0 0.0
    %v4069 = vand.u32 %v3885, 4294901760
    %v4070 = vsub.f32 %v3885, %v4069
    %v4071 = vand.u32 %v4070, 4294901760
    %v4072 = vsub.f32 %v4070, %v4071
    %v4073 = vand.u32 %v4072, 4294901760
    %4074 = vmatmul.mubr.f32.gmra.mrb[0].mxu0 %v4073
    %v4075 = vpop.f32.mrb[0].mxu0
    %v4076 = vadd.f32 %v3851, %v4075
    %v4077 = vpop.f32.mrb[0].mxu0
    %4078 = vmatprep.mubr.f32.mxu0 0.0
    %v4079 = vand.u32 %v3888, 4294901760
    %v4080 = vsub.f32 %v3888, %v4079
    %v4081 = vand.u32 %v4080, 4294901760
    %v4082 = vsub.f32 %v4080, %v4081
    %v4083 = vand.u32 %v4082, 4294901760
    %4084 = vmatmul.mubr.f32.gmra.mrb[0].mxu0 %v4083
    %v4085 = vpop.f32.mrb[0].mxu0
    %v4086 = vadd.f32 %v3851, %v4085
    %v4087 = vpop.f32.mrb[0].mxu0
    %4088 = vmatprep.mubr.f32.mxu0 0.0
    %v4089 = vand.u32 %v3891, 4294901760
    %v4090 = vsub.f32 %v3891, %v4089
    %v4091 = vand.u32 %v4090, 4294901760
    %v4092 = vsub.f32 %v4090, %v4091
    %v4093 = vand.u32 %v4092, 4294901760
    %4094 = vmatmul.mubr.f32.gmra.mrb[0].mxu0 %v4093
    %v4095 = vpop.f32.mrb[0].mxu0
    %v4096 = vadd.f32 %v3851, %v4095
    %v4097 = vpop.f32.mrb[0].mxu0
    %4098 = vmatprep.mubr.f32.mxu0 0.0
    %v4099 = vand.u32 %v3894, 4294901760
    %v4100 = vsub.f32 %v3894, %v4099
    %v4101 = vand.u32 %v4100, 4294901760
    %v4102 = vsub.f32 %v4100, %v4101
    %v4103 = vand.u32 %v4102, 4294901760
    %4104 = vmatmul.mubr.f32.gmra.mrb[0].mxu0 %v4103
    %v4105 = vpop.f32.mrb[0].mxu0
    %v4106 = vadd.f32 %v3851, %v4105
    %v4107 = vpop.f32.mrb[0].mxu0
    %4108 = vmatprep.mubr.f32.mxu0 0.0
    %v4109 = vand.u32 %v3897, 4294901760
    %v4110 = vsub.f32 %v3897, %v4109
    %v4111 = vand.u32 %v4110, 4294901760
    %v4112 = vsub.f32 %v4110, %v4111
    %v4113 = vand.u32 %v4112, 4294901760
    %4114 = vmatmul.mubr.f32.gmra.mrb[0].mxu0 %v4113
    %v4115 = vpop.f32.mrb[0].mxu0
    %v4116 = vadd.f32 %v3851, %v4115
    %v4117 = vpop.f32.mrb[0].mxu0
    %4118 = vmatprep.mubr.f32.mxu0 0.0
    %v4119 = vand.u32 %v3900, 4294901760
    %v4120 = vsub.f32 %v3900, %v4119
    %v4121 = vand.u32 %v4120, 4294901760
    %v4122 = vsub.f32 %v4120, %v4121
    %v4123 = vand.u32 %v4122, 4294901760
    %4124 = vmatmul.mubr.f32.gmra.mrb[0].mxu0 %v4123
    %v4125 = vpop.f32.mrb[0].mxu0
    %v4126 = vadd.f32 %v3851, %v4125
    %v4127 = vpop.f32.mrb[0].mxu0
    %4128 = vdwg.mxu0
    %4129 = vmatprep.subr.mxu0 0.0
    %v4130 = vand.u32 %v72, 4294901760
    %v4131 = vsub.f32 %v72, %v4130
    %v4132 = vand.u32 %v4131, 4294901760
    %v4133 = vsub.f32 %v4131, %v4132
    %v4134 = vand.u32 %v4133, 4294901760
    %4135 = vmatpush1.msra.mxu0 %v4134
    %4136 = vmatprep.subr.mxu0 0.0
    %v4137 = vand.u32 %v73, 4294901760
    %v4138 = vsub.f32 %v73, %v4137
    %v4139 = vand.u32 %v4138, 4294901760
    %v4140 = vsub.f32 %v4138, %v4139
    %v4141 = vand.u32 %v4140, 4294901760
    %4142 = vmatpush1.msra.mxu0 %v4141
    %4143 = vmatprep.subr.mxu0 0.0
    %4144 = vmatpush1.msra.mxu0 0.0
    %4145 = vmatprep.subr.mxu0 0.0
    %4146 = vmatpush1.msra.mxu0 0.0
    %4147 = vmatprep.subr.mxu0 0.0
    %4148 = vmatpush1.msra.mxu0 0.0
    %4149 = vmatprep.subr.mxu0 0.0
    %4150 = vmatpush1.msra.mxu0 0.0
    %4151 = vmatprep.subr.mxu0 0.0
    %4152 = vmatpush1.msra.mxu0 0.0
    %4153 = vmatprep.subr.mxu0 0.0
    %4154 = vmatpush1.msra.mxu0 0.0
    %4155 = vmatprep.subr.mxu0 0.0
    %4156 = vmatpush1.msra.mxu0 0.0
    %4157 = vmatprep.subr.mxu0 0.0
    %4158 = vmatpush1.msra.mxu0 0.0
    %4159 = vmatprep.subr.mxu0 0.0
    %4160 = vmatpush1.msra.mxu0 0.0
    %4161 = vmatprep.subr.mxu0 0.0
    %4162 = vmatpush1.msra.mxu0 0.0
    %4163 = vmatprep.subr.mxu0 0.0
    %4164 = vmatpush1.msra.mxu0 0.0
    %4165 = vmatprep.subr.mxu0 0.0
    %4166 = vmatpush1.msra.mxu0 0.0
    %4167 = vmatprep.subr.mxu0 0.0
    %4168 = vmatpush1.msra.mxu0 0.0
    %4169 = vmatprep.subr.mxu0 0.0
    %4170 = vmatpush1.msra.mxu0 0.0
    %4171 = vmatprep.subr.mxu0 0.0
    %4172 = vmatpush1.msra.mxu0 0.0
    %4173 = vmatprep.subr.mxu0 0.0
    %4174 = vmatpush1.msra.mxu0 0.0
    %4175 = vmatprep.subr.mxu0 0.0
    %4176 = vmatpush1.msra.mxu0 0.0
    %4177 = vmatprep.subr.mxu0 0.0
    %4178 = vmatpush1.msra.mxu0 0.0
    %4179 = vmatprep.subr.mxu0 0.0
    %4180 = vmatpush1.msra.mxu0 0.0
    %4181 = vmatprep.subr.mxu0 0.0
    %4182 = vmatpush1.msra.mxu0 0.0
    %4183 = vmatprep.subr.mxu0 0.0
    %4184 = vmatpush1.msra.mxu0 0.0
    %4185 = vmatprep.subr.mxu0 0.0
    %4186 = vmatpush1.msra.mxu0 0.0
    %4187 = vmatprep.subr.mxu0 0.0
    %4188 = vmatpush1.msra.mxu0 0.0
    %4189 = vmatprep.subr.mxu0 0.0
    %4190 = vmatpush1.msra.mxu0 0.0
    %4191 = vmatprep.subr.mxu0 0.0
    %4192 = vmatpush1.msra.mxu0 0.0
    %4193 = vmatprep.subr.mxu0 0.0
    %4194 = vmatpush1.msra.mxu0 0.0
    %4195 = vmatprep.subr.mxu0 0.0
    %4196 = vmatpush1.msra.mxu0 0.0
    %4197 = vmatprep.subr.mxu0 0.0
    %4198 = vmatpush1.msra.mxu0 0.0
    %4199 = vmatprep.subr.mxu0 0.0
    %4200 = vmatpush1.msra.mxu0 0.0
    %4201 = vmatprep.subr.mxu0 0.0
    %4202 = vmatpush1.msra.mxu0 0.0
    %4203 = vmatprep.mubr.f32.mxu0 0.0
    %v4204 = vand.u32 %v3855, 4294901760
    %4205 = vmatmul.mubr.f32.gmra.mrb[0].mxu0 %v4204
    %v4206 = vpop.f32.mrb[0].mxu0
    %v4207 = vadd.f32 %v3976, %v4206
    %v4208 = vpop.f32.mrb[0].mxu0
    %4209 = vmatprep.mubr.f32.mxu0 0.0
    %v4210 = vand.u32 %v3858, 4294901760
    %4211 = vmatmul.mubr.f32.gmra.mrb[0].mxu0 %v4210
    %v4212 = vpop.f32.mrb[0].mxu0
    %v4213 = vadd.f32 %v3986, %v4212
    %v4214 = vpop.f32.mrb[0].mxu0
    %4215 = vmatprep.mubr.f32.mxu0 0.0
    %v4216 = vand.u32 %v3861, 4294901760
    %4217 = vmatmul.mubr.f32.gmra.mrb[0].mxu0 %v4216
    %v4218 = vpop.f32.mrb[0].mxu0
    %v4219 = vadd.f32 %v3996, %v4218
    %v4220 = vpop.f32.mrb[0].mxu0
    %4221 = vmatprep.mubr.f32.mxu0 0.0
    %v4222 = vand.u32 %v3864, 4294901760
    %4223 = vmatmul.mubr.f32.gmra.mrb[0].mxu0 %v4222
    %v4224 = vpop.f32.mrb[0].mxu0
    %v4225 = vadd.f32 %v4006, %v4224
    %v4226 = vpop.f32.mrb[0].mxu0
    %4227 = vmatprep.mubr.f32.mxu0 0.0
    %v4228 = vand.u32 %v3867, 4294901760
    %4229 = vmatmul.mubr.f32.gmra.mrb[0].mxu0 %v4228
    %v4230 = vpop.f32.mrb[0].mxu0
    %v4231 = vadd.f32 %v4016, %v4230
    %v4232 = vpop.f32.mrb[0].mxu0
    %4233 = vmatprep.mubr.f32.mxu0 0.0
    %v4234 = vand.u32 %v3870, 4294901760
    %4235 = vmatmul.mubr.f32.gmra.mrb[0].mxu0 %v4234
    %v4236 = vpop.f32.mrb[0].mxu0
    %v4237 = vadd.f32 %v4026, %v4236
    %v4238 = vpop.f32.mrb[0].mxu0
    %4239 = vmatprep.mubr.f32.mxu0 0.0
    %v4240 = vand.u32 %v3873, 4294901760
    %4241 = vmatmul.mubr.f32.gmra.mrb[0].mxu0 %v4240
    %v4242 = vpop.f32.mrb[0].mxu0
    %v4243 = vadd.f32 %v4036, %v4242
    %v4244 = vpop.f32.mrb[0].mxu0
    %4245 = vmatprep.mubr.f32.mxu0 0.0
    %v4246 = vand.u32 %v3876, 4294901760
    %4247 = vmatmul.mubr.f32.gmra.mrb[0].mxu0 %v4246
    %v4248 = vpop.f32.mrb[0].mxu0
    %v4249 = vadd.f32 %v4046, %v4248
    %v4250 = vpop.f32.mrb[0].mxu0
    %4251 = vmatprep.mubr.f32.mxu0 0.0
    %v4252 = vand.u32 %v3879, 4294901760
    %4253 = vmatmul.mubr.f32.gmra.mrb[0].mxu0 %v4252
    %v4254 = vpop.f32.mrb[0].mxu0
    %v4255 = vadd.f32 %v4056, %v4254
    %v4256 = vpop.f32.mrb[0].mxu0
    %4257 = vmatprep.mubr.f32.mxu0 0.0
    %v4258 = vand.u32 %v3882, 4294901760
    %4259 = vmatmul.mubr.f32.gmra.mrb[0].mxu0 %v4258
    %v4260 = vpop.f32.mrb[0].mxu0
    %v4261 = vadd.f32 %v4066, %v4260
    %v4262 = vpop.f32.mrb[0].mxu0
    %4263 = vmatprep.mubr.f32.mxu0 0.0
    %v4264 = vand.u32 %v3885, 4294901760
    %4265 = vmatmul.mubr.f32.gmra.mrb[0].mxu0 %v4264
    %v4266 = vpop.f32.mrb[0].mxu0
    %v4267 = vadd.f32 %v4076, %v4266
    %v4268 = vpop.f32.mrb[0].mxu0
    %4269 = vmatprep.mubr.f32.mxu0 0.0
    %v4270 = vand.u32 %v3888, 4294901760
    %4271 = vmatmul.mubr.f32.gmra.mrb[0].mxu0 %v4270
    %v4272 = vpop.f32.mrb[0].mxu0
    %v4273 = vadd.f32 %v4086, %v4272
    %v4274 = vpop.f32.mrb[0].mxu0
    %4275 = vmatprep.mubr.f32.mxu0 0.0
    %v4276 = vand.u32 %v3891, 4294901760
    %4277 = vmatmul.mubr.f32.gmra.mrb[0].mxu0 %v4276
    %v4278 = vpop.f32.mrb[0].mxu0
    %v4279 = vadd.f32 %v4096, %v4278
    %v4280 = vpop.f32.mrb[0].mxu0
    %4281 = vmatprep.mubr.f32.mxu0 0.0
    %v4282 = vand.u32 %v3894, 4294901760
    %4283 = vmatmul.mubr.f32.gmra.mrb[0].mxu0 %v4282
    %v4284 = vpop.f32.mrb[0].mxu0
    %v4285 = vadd.f32 %v4106, %v4284
    %v4286 = vpop.f32.mrb[0].mxu0
    %4287 = vmatprep.mubr.f32.mxu0 0.0
    %v4288 = vand.u32 %v3897, 4294901760
    %4289 = vmatmul.mubr.f32.gmra.mrb[0].mxu0 %v4288
    %v4290 = vpop.f32.mrb[0].mxu0
    %v4291 = vadd.f32 %v4116, %v4290
    %v4292 = vpop.f32.mrb[0].mxu0
    %4293 = vmatprep.mubr.f32.mxu0 0.0
    %v4294 = vand.u32 %v3900, 4294901760
    %4295 = vmatmul.mubr.f32.gmra.mrb[0].mxu0 %v4294
    %v4296 = vpop.f32.mrb[0].mxu0
    %v4297 = vadd.f32 %v4126, %v4296
    %v4298 = vpop.f32.mrb[0].mxu0
    %4299 = vdwg.mxu0
    %4300 = vmatprep.subr.mxu0 0.0
    %v4301 = vand.u32 %v72, 4294901760
    %v4302 = vsub.f32 %v72, %v4301
    %4303 = vmatpush1.msra.mxu0 %v4302
    %4304 = vmatprep.subr.mxu0 0.0
    %v4305 = vand.u32 %v73, 4294901760
    %v4306 = vsub.f32 %v73, %v4305
    %4307 = vmatpush1.msra.mxu0 %v4306
    %4308 = vmatprep.subr.mxu0 0.0
    %4309 = vmatpush1.msra.mxu0 0.0
    %4310 = vmatprep.subr.mxu0 0.0
    %4311 = vmatpush1.msra.mxu0 0.0
    %4312 = vmatprep.subr.mxu0 0.0
    %4313 = vmatpush1.msra.mxu0 0.0
    %4314 = vmatprep.subr.mxu0 0.0
    %4315 = vmatpush1.msra.mxu0 0.0
    %4316 = vmatprep.subr.mxu0 0.0
    %4317 = vmatpush1.msra.mxu0 0.0
    %4318 = vmatprep.subr.mxu0 0.0
    %4319 = vmatpush1.msra.mxu0 0.0
    %4320 = vmatprep.subr.mxu0 0.0
    %4321 = vmatpush1.msra.mxu0 0.0
    %4322 = vmatprep.subr.mxu0 0.0
    %4323 = vmatpush1.msra.mxu0 0.0
    %4324 = vmatprep.subr.mxu0 0.0
    %4325 = vmatpush1.msra.mxu0 0.0
    %4326 = vmatprep.subr.mxu0 0.0
    %4327 = vmatpush1.msra.mxu0 0.0
    %4328 = vmatprep.subr.mxu0 0.0
    %4329 = vmatpush1.msra.mxu0 0.0
    %4330 = vmatprep.subr.mxu0 0.0
    %4331 = vmatpush1.msra.mxu0 0.0
    %4332 = vmatprep.subr.mxu0 0.0
    %4333 = vmatpush1.msra.mxu0 0.0
    %4334 = vmatprep.subr.mxu0 0.0
    %4335 = vmatpush1.msra.mxu0 0.0
    %4336 = vmatprep.subr.mxu0 0.0
    %4337 = vmatpush1.msra.mxu0 0.0
    %4338 = vmatprep.subr.mxu0 0.0
    %4339 = vmatpush1.msra.mxu0 0.0
    %4340 = vmatprep.subr.mxu0 0.0
    %4341 = vmatpush1.msra.mxu0 0.0
    %4342 = vmatprep.subr.mxu0 0.0
    %4343 = vmatpush1.msra.mxu0 0.0
    %4344 = vmatprep.subr.mxu0 0.0
    %4345 = vmatpush1.msra.mxu0 0.0
    %4346 = vmatprep.subr.mxu0 0.0
    %4347 = vmatpush1.msra.mxu0 0.0
    %4348 = vmatprep.subr.mxu0 0.0
    %4349 = vmatpush1.msra.mxu0 0.0
    %4350 = vmatprep.subr.mxu0 0.0
    %4351 = vmatpush1.msra.mxu0 0.0
    %4352 = vmatprep.subr.mxu0 0.0
    %4353 = vmatpush1.msra.mxu0 0.0
    %4354 = vmatprep.subr.mxu0 0.0
    %4355 = vmatpush1.msra.mxu0 0.0
    %4356 = vmatprep.subr.mxu0 0.0
    %4357 = vmatpush1.msra.mxu0 0.0
    %4358 = vmatprep.subr.mxu0 0.0
    %4359 = vmatpush1.msra.mxu0 0.0
    %4360 = vmatprep.subr.mxu0 0.0
    %4361 = vmatpush1.msra.mxu0 0.0
    %4362 = vmatprep.subr.mxu0 0.0
    %4363 = vmatpush1.msra.mxu0 0.0
    %4364 = vmatprep.subr.mxu0 0.0
    %4365 = vmatpush1.msra.mxu0 0.0
    %4366 = vmatprep.subr.mxu0 0.0
    %4367 = vmatpush1.msra.mxu0 0.0
    %4368 = vmatprep.mubr.f32.mxu0 0.0
    %v4369 = vand.u32 %v3855, 4294901760
    %v4370 = vsub.f32 %v3855, %v4369
    %4371 = vmatmul.mubr.f32.gmra.mrb[0].mxu0 %v4370
    %v4372 = vpop.f32.mrb[0].mxu0
    %v4373 = vadd.f32 %v4207, %v4372
    %v4374 = vpop.f32.mrb[0].mxu0
    %4375 = vmatprep.mubr.f32.mxu0 0.0
    %v4376 = vand.u32 %v3858, 4294901760
    %v4377 = vsub.f32 %v3858, %v4376
    %4378 = vmatmul.mubr.f32.gmra.mrb[0].mxu0 %v4377
    %v4379 = vpop.f32.mrb[0].mxu0
    %v4380 = vadd.f32 %v4213, %v4379
    %v4381 = vpop.f32.mrb[0].mxu0
    %4382 = vmatprep.mubr.f32.mxu0 0.0
    %v4383 = vand.u32 %v3861, 4294901760
    %v4384 = vsub.f32 %v3861, %v4383
    %4385 = vmatmul.mubr.f32.gmra.mrb[0].mxu0 %v4384
    %v4386 = vpop.f32.mrb[0].mxu0
    %v4387 = vadd.f32 %v4219, %v4386
    %v4388 = vpop.f32.mrb[0].mxu0
    %4389 = vmatprep.mubr.f32.mxu0 0.0
    %v4390 = vand.u32 %v3864, 4294901760
    %v4391 = vsub.f32 %v3864, %v4390
    %4392 = vmatmul.mubr.f32.gmra.mrb[0].mxu0 %v4391
    %v4393 = vpop.f32.mrb[0].mxu0
    %v4394 = vadd.f32 %v4225, %v4393
    %v4395 = vpop.f32.mrb[0].mxu0
    %4396 = vmatprep.mubr.f32.mxu0 0.0
    %v4397 = vand.u32 %v3867, 4294901760
    %v4398 = vsub.f32 %v3867, %v4397
    %4399 = vmatmul.mubr.f32.gmra.mrb[0].mxu0 %v4398
    %v4400 = vpop.f32.mrb[0].mxu0
    %v4401 = vadd.f32 %v4231, %v4400
    %v4402 = vpop.f32.mrb[0].mxu0
    %4403 = vmatprep.mubr.f32.mxu0 0.0
    %v4404 = vand.u32 %v3870, 4294901760
    %v4405 = vsub.f32 %v3870, %v4404
    %4406 = vmatmul.mubr.f32.gmra.mrb[0].mxu0 %v4405
    %v4407 = vpop.f32.mrb[0].mxu0
    %v4408 = vadd.f32 %v4237, %v4407
    %v4409 = vpop.f32.mrb[0].mxu0
    %4410 = vmatprep.mubr.f32.mxu0 0.0
    %v4411 = vand.u32 %v3873, 4294901760
    %v4412 = vsub.f32 %v3873, %v4411
    %4413 = vmatmul.mubr.f32.gmra.mrb[0].mxu0 %v4412
    %v4414 = vpop.f32.mrb[0].mxu0
    %v4415 = vadd.f32 %v4243, %v4414
    %v4416 = vpop.f32.mrb[0].mxu0
    %4417 = vmatprep.mubr.f32.mxu0 0.0
    %v4418 = vand.u32 %v3876, 4294901760
    %v4419 = vsub.f32 %v3876, %v4418
    %4420 = vmatmul.mubr.f32.gmra.mrb[0].mxu0 %v4419
    %v4421 = vpop.f32.mrb[0].mxu0
    %v4422 = vadd.f32 %v4249, %v4421
    %v4423 = vpop.f32.mrb[0].mxu0
    %4424 = vmatprep.mubr.f32.mxu0 0.0
    %v4425 = vand.u32 %v3879, 4294901760
    %v4426 = vsub.f32 %v3879, %v4425
    %4427 = vmatmul.mubr.f32.gmra.mrb[0].mxu0 %v4426
    %v4428 = vpop.f32.mrb[0].mxu0
    %v4429 = vadd.f32 %v4255, %v4428
    %v4430 = vpop.f32.mrb[0].mxu0
    %4431 = vmatprep.mubr.f32.mxu0 0.0
    %v4432 = vand.u32 %v3882, 4294901760
    %v4433 = vsub.f32 %v3882, %v4432
    %4434 = vmatmul.mubr.f32.gmra.mrb[0].mxu0 %v4433
    %v4435 = vpop.f32.mrb[0].mxu0
    %v4436 = vadd.f32 %v4261, %v4435
    %v4437 = vpop.f32.mrb[0].mxu0
    %4438 = vmatprep.mubr.f32.mxu0 0.0
    %v4439 = vand.u32 %v3885, 4294901760
    %v4440 = vsub.f32 %v3885, %v4439
    %4441 = vmatmul.mubr.f32.gmra.mrb[0].mxu0 %v4440
    %v4442 = vpop.f32.mrb[0].mxu0
    %v4443 = vadd.f32 %v4267, %v4442
    %v4444 = vpop.f32.mrb[0].mxu0
    %4445 = vmatprep.mubr.f32.mxu0 0.0
    %v4446 = vand.u32 %v3888, 4294901760
    %v4447 = vsub.f32 %v3888, %v4446
    %4448 = vmatmul.mubr.f32.gmra.mrb[0].mxu0 %v4447
    %v4449 = vpop.f32.mrb[0].mxu0
    %v4450 = vadd.f32 %v4273, %v4449
    %v4451 = vpop.f32.mrb[0].mxu0
    %4452 = vmatprep.mubr.f32.mxu0 0.0
    %v4453 = vand.u32 %v3891, 4294901760
    %v4454 = vsub.f32 %v3891, %v4453
    %4455 = vmatmul.mubr.f32.gmra.mrb[0].mxu0 %v4454
    %v4456 = vpop.f32.mrb[0].mxu0
    %v4457 = vadd.f32 %v4279, %v4456
    %v4458 = vpop.f32.mrb[0].mxu0
    %4459 = vmatprep.mubr.f32.mxu0 0.0
    %v4460 = vand.u32 %v3894, 4294901760
    %v4461 = vsub.f32 %v3894, %v4460
    %4462 = vmatmul.mubr.f32.gmra.mrb[0].mxu0 %v4461
    %v4463 = vpop.f32.mrb[0].mxu0
    %v4464 = vadd.f32 %v4285, %v4463
    %v4465 = vpop.f32.mrb[0].mxu0
    %4466 = vmatprep.mubr.f32.mxu0 0.0
    %v4467 = vand.u32 %v3897, 4294901760
    %v4468 = vsub.f32 %v3897, %v4467
    %4469 = vmatmul.mubr.f32.gmra.mrb[0].mxu0 %v4468
    %v4470 = vpop.f32.mrb[0].mxu0
    %v4471 = vadd.f32 %v4291, %v4470
    %v4472 = vpop.f32.mrb[0].mxu0
    %4473 = vmatprep.mubr.f32.mxu0 0.0
    %v4474 = vand.u32 %v3900, 4294901760
    %v4475 = vsub.f32 %v3900, %v4474
    %4476 = vmatmul.mubr.f32.gmra.mrb[0].mxu0 %v4475
    %v4477 = vpop.f32.mrb[0].mxu0
    %v4478 = vadd.f32 %v4297, %v4477
    %v4479 = vpop.f32.mrb[0].mxu0
    %4480 = vdwg.mxu0
    %4481 = vmatprep.subr.mxu0 0.0
    %v4482 = vand.u32 %v72, 4294901760
    %4483 = vmatpush1.msra.mxu0 %v4482
    %4484 = vmatprep.subr.mxu0 0.0
    %v4485 = vand.u32 %v73, 4294901760
    %4486 = vmatpush1.msra.mxu0 %v4485
    %4487 = vmatprep.subr.mxu0 0.0
    %4488 = vmatpush1.msra.mxu0 0.0
    %4489 = vmatprep.subr.mxu0 0.0
    %4490 = vmatpush1.msra.mxu0 0.0
    %4491 = vmatprep.subr.mxu0 0.0
    %4492 = vmatpush1.msra.mxu0 0.0
    %4493 = vmatprep.subr.mxu0 0.0
    %4494 = vmatpush1.msra.mxu0 0.0
    %4495 = vmatprep.subr.mxu0 0.0
    %4496 = vmatpush1.msra.mxu0 0.0
    %4497 = vmatprep.subr.mxu0 0.0
    %4498 = vmatpush1.msra.mxu0 0.0
    %4499 = vmatprep.subr.mxu0 0.0
    %4500 = vmatpush1.msra.mxu0 0.0
    %4501 = vmatprep.subr.mxu0 0.0
    %4502 = vmatpush1.msra.mxu0 0.0
    %4503 = vmatprep.subr.mxu0 0.0
    %4504 = vmatpush1.msra.mxu0 0.0
    %4505 = vmatprep.subr.mxu0 0.0
    %4506 = vmatpush1.msra.mxu0 0.0
    %4507 = vmatprep.subr.mxu0 0.0
    %4508 = vmatpush1.msra.mxu0 0.0
    %4509 = vmatprep.subr.mxu0 0.0
    %4510 = vmatpush1.msra.mxu0 0.0
    %4511 = vmatprep.subr.mxu0 0.0
    %4512 = vmatpush1.msra.mxu0 0.0
    %4513 = vmatprep.subr.mxu0 0.0
    %4514 = vmatpush1.msra.mxu0 0.0
    %4515 = vmatprep.subr.mxu0 0.0
    %4516 = vmatpush1.msra.mxu0 0.0
    %4517 = vmatprep.subr.mxu0 0.0
    %4518 = vmatpush1.msra.mxu0 0.0
    %4519 = vmatprep.subr.mxu0 0.0
    %4520 = vmatpush1.msra.mxu0 0.0
    %4521 = vmatprep.subr.mxu0 0.0
    %4522 = vmatpush1.msra.mxu0 0.0
    %4523 = vmatprep.subr.mxu0 0.0
    %4524 = vmatpush1.msra.mxu0 0.0
    %4525 = vmatprep.subr.mxu0 0.0
    %4526 = vmatpush1.msra.mxu0 0.0
    %4527 = vmatprep.subr.mxu0 0.0
    %4528 = vmatpush1.msra.mxu0 0.0
    %4529 = vmatprep.subr.mxu0 0.0
    %4530 = vmatpush1.msra.mxu0 0.0
    %4531 = vmatprep.subr.mxu0 0.0
    %4532 = vmatpush1.msra.mxu0 0.0
    %4533 = vmatprep.subr.mxu0 0.0
    %4534 = vmatpush1.msra.mxu0 0.0
    %4535 = vmatprep.subr.mxu0 0.0
    %4536 = vmatpush1.msra.mxu0 0.0
    %4537 = vmatprep.subr.mxu0 0.0
    %4538 = vmatpush1.msra.mxu0 0.0
    %4539 = vmatprep.subr.mxu0 0.0
    %4540 = vmatpush1.msra.mxu0 0.0
    %4541 = vmatprep.subr.mxu0 0.0
    %4542 = vmatpush1.msra.mxu0 0.0
    %4543 = vmatprep.subr.mxu0 0.0
    %4544 = vmatpush1.msra.mxu0 0.0
    %4545 = vmatprep.subr.mxu0 0.0
    %4546 = vmatpush1.msra.mxu0 0.0
    %4547 = vmatprep.mubr.f32.mxu0 0.0
    %v4548 = vand.u32 %v3855, 4294901760
    %v4549 = vsub.f32 %v3855, %v4548
    %v4550 = vand.u32 %v4549, 4294901760
    %4551 = vmatmul.mubr.f32.gmra.mrb[0].mxu0 %v4550
    %v4552 = vpop.f32.mrb[0].mxu0
    %v4553 = vadd.f32 %v4373, %v4552
    %v4554 = vpop.f32.mrb[0].mxu0
    %4555 = vmatprep.mubr.f32.mxu0 0.0
    %v4556 = vand.u32 %v3858, 4294901760
    %v4557 = vsub.f32 %v3858, %v4556
    %v4558 = vand.u32 %v4557, 4294901760
    %4559 = vmatmul.mubr.f32.gmra.mrb[0].mxu0 %v4558
    %v4560 = vpop.f32.mrb[0].mxu0
    %v4561 = vadd.f32 %v4380, %v4560
    %v4562 = vpop.f32.mrb[0].mxu0
    %4563 = vmatprep.mubr.f32.mxu0 0.0
    %v4564 = vand.u32 %v3861, 4294901760
    %v4565 = vsub.f32 %v3861, %v4564
    %v4566 = vand.u32 %v4565, 4294901760
    %4567 = vmatmul.mubr.f32.gmra.mrb[0].mxu0 %v4566
    %v4568 = vpop.f32.mrb[0].mxu0
    %v4569 = vadd.f32 %v4387, %v4568
    %v4570 = vpop.f32.mrb[0].mxu0
    %4571 = vmatprep.mubr.f32.mxu0 0.0
    %v4572 = vand.u32 %v3864, 4294901760
    %v4573 = vsub.f32 %v3864, %v4572
    %v4574 = vand.u32 %v4573, 4294901760
    %4575 = vmatmul.mubr.f32.gmra.mrb[0].mxu0 %v4574
    %v4576 = vpop.f32.mrb[0].mxu0
    %v4577 = vadd.f32 %v4394, %v4576
    %v4578 = vpop.f32.mrb[0].mxu0
    %4579 = vmatprep.mubr.f32.mxu0 0.0
    %v4580 = vand.u32 %v3867, 4294901760
    %v4581 = vsub.f32 %v3867, %v4580
    %v4582 = vand.u32 %v4581, 4294901760
    %4583 = vmatmul.mubr.f32.gmra.mrb[0].mxu0 %v4582
    %v4584 = vpop.f32.mrb[0].mxu0
    %v4585 = vadd.f32 %v4401, %v4584
    %v4586 = vpop.f32.mrb[0].mxu0
    %4587 = vmatprep.mubr.f32.mxu0 0.0
    %v4588 = vand.u32 %v3870, 4294901760
    %v4589 = vsub.f32 %v3870, %v4588
    %v4590 = vand.u32 %v4589, 4294901760
    %4591 = vmatmul.mubr.f32.gmra.mrb[0].mxu0 %v4590
    %v4592 = vpop.f32.mrb[0].mxu0
    %v4593 = vadd.f32 %v4408, %v4592
    %v4594 = vpop.f32.mrb[0].mxu0
    %4595 = vmatprep.mubr.f32.mxu0 0.0
    %v4596 = vand.u32 %v3873, 4294901760
    %v4597 = vsub.f32 %v3873, %v4596
    %v4598 = vand.u32 %v4597, 4294901760
    %4599 = vmatmul.mubr.f32.gmra.mrb[0].mxu0 %v4598
    %v4600 = vpop.f32.mrb[0].mxu0
    %v4601 = vadd.f32 %v4415, %v4600
    %v4602 = vpop.f32.mrb[0].mxu0
    %4603 = vmatprep.mubr.f32.mxu0 0.0
    %v4604 = vand.u32 %v3876, 4294901760
    %v4605 = vsub.f32 %v3876, %v4604
    %v4606 = vand.u32 %v4605, 4294901760
    %4607 = vmatmul.mubr.f32.gmra.mrb[0].mxu0 %v4606
    %v4608 = vpop.f32.mrb[0].mxu0
    %v4609 = vadd.f32 %v4422, %v4608
    %v4610 = vpop.f32.mrb[0].mxu0
    %4611 = vmatprep.mubr.f32.mxu0 0.0
    %v4612 = vand.u32 %v3879, 4294901760
    %v4613 = vsub.f32 %v3879, %v4612
    %v4614 = vand.u32 %v4613, 4294901760
    %4615 = vmatmul.mubr.f32.gmra.mrb[0].mxu0 %v4614
    %v4616 = vpop.f32.mrb[0].mxu0
    %v4617 = vadd.f32 %v4429, %v4616
    %v4618 = vpop.f32.mrb[0].mxu0
    %4619 = vmatprep.mubr.f32.mxu0 0.0
    %v4620 = vand.u32 %v3882, 4294901760
    %v4621 = vsub.f32 %v3882, %v4620
    %v4622 = vand.u32 %v4621, 4294901760
    %4623 = vmatmul.mubr.f32.gmra.mrb[0].mxu0 %v4622
    %v4624 = vpop.f32.mrb[0].mxu0
    %v4625 = vadd.f32 %v4436, %v4624
    %v4626 = vpop.f32.mrb[0].mxu0
    %4627 = vmatprep.mubr.f32.mxu0 0.0
    %v4628 = vand.u32 %v3885, 4294901760
    %v4629 = vsub.f32 %v3885, %v4628
    %v4630 = vand.u32 %v4629, 4294901760
    %4631 = vmatmul.mubr.f32.gmra.mrb[0].mxu0 %v4630
    %v4632 = vpop.f32.mrb[0].mxu0
    %v4633 = vadd.f32 %v4443, %v4632
    %v4634 = vpop.f32.mrb[0].mxu0
    %4635 = vmatprep.mubr.f32.mxu0 0.0
    %v4636 = vand.u32 %v3888, 4294901760
    %v4637 = vsub.f32 %v3888, %v4636
    %v4638 = vand.u32 %v4637, 4294901760
    %4639 = vmatmul.mubr.f32.gmra.mrb[0].mxu0 %v4638
    %v4640 = vpop.f32.mrb[0].mxu0
    %v4641 = vadd.f32 %v4450, %v4640
    %v4642 = vpop.f32.mrb[0].mxu0
    %4643 = vmatprep.mubr.f32.mxu0 0.0
    %v4644 = vand.u32 %v3891, 4294901760
    %v4645 = vsub.f32 %v3891, %v4644
    %v4646 = vand.u32 %v4645, 4294901760
    %4647 = vmatmul.mubr.f32.gmra.mrb[0].mxu0 %v4646
    %v4648 = vpop.f32.mrb[0].mxu0
    %v4649 = vadd.f32 %v4457, %v4648
    %v4650 = vpop.f32.mrb[0].mxu0
    %4651 = vmatprep.mubr.f32.mxu0 0.0
    %v4652 = vand.u32 %v3894, 4294901760
    %v4653 = vsub.f32 %v3894, %v4652
    %v4654 = vand.u32 %v4653, 4294901760
    %4655 = vmatmul.mubr.f32.gmra.mrb[0].mxu0 %v4654
    %v4656 = vpop.f32.mrb[0].mxu0
    %v4657 = vadd.f32 %v4464, %v4656
    %v4658 = vpop.f32.mrb[0].mxu0
    %4659 = vmatprep.mubr.f32.mxu0 0.0
    %v4660 = vand.u32 %v3897, 4294901760
    %v4661 = vsub.f32 %v3897, %v4660
    %v4662 = vand.u32 %v4661, 4294901760
    %4663 = vmatmul.mubr.f32.gmra.mrb[0].mxu0 %v4662
    %v4664 = vpop.f32.mrb[0].mxu0
    %v4665 = vadd.f32 %v4471, %v4664
    %v4666 = vpop.f32.mrb[0].mxu0
    %4667 = vmatprep.mubr.f32.mxu0 0.0
    %v4668 = vand.u32 %v3900, 4294901760
    %v4669 = vsub.f32 %v3900, %v4668
    %v4670 = vand.u32 %v4669, 4294901760
    %4671 = vmatmul.mubr.f32.gmra.mrb[0].mxu0 %v4670
    %v4672 = vpop.f32.mrb[0].mxu0
    %v4673 = vadd.f32 %v4478, %v4672
    %v4674 = vpop.f32.mrb[0].mxu0
    %4675 = vdwg.mxu0
    %4676 = vmatprep.subr.mxu0 0.0
    %v4677 = vand.u32 %v72, 4294901760
    %v4678 = vsub.f32 %v72, %v4677
    %v4679 = vand.u32 %v4678, 4294901760
    %4680 = vmatpush1.msra.mxu0 %v4679
    %4681 = vmatprep.subr.mxu0 0.0
    %v4682 = vand.u32 %v73, 4294901760
    %v4683 = vsub.f32 %v73, %v4682
    %v4684 = vand.u32 %v4683, 4294901760
    %4685 = vmatpush1.msra.mxu0 %v4684
    %4686 = vmatprep.subr.mxu0 0.0
    %4687 = vmatpush1.msra.mxu0 0.0
    %4688 = vmatprep.subr.mxu0 0.0
    %4689 = vmatpush1.msra.mxu0 0.0
    %4690 = vmatprep.subr.mxu0 0.0
    %4691 = vmatpush1.msra.mxu0 0.0
    %4692 = vmatprep.subr.mxu0 0.0
    %4693 = vmatpush1.msra.mxu0 0.0
    %4694 = vmatprep.subr.mxu0 0.0
    %4695 = vmatpush1.msra.mxu0 0.0
    %4696 = vmatprep.subr.mxu0 0.0
    %4697 = vmatpush1.msra.mxu0 0.0
    %4698 = vmatprep.subr.mxu0 0.0
    %4699 = vmatpush1.msra.mxu0 0.0
    %4700 = vmatprep.subr.mxu0 0.0
    %4701 = vmatpush1.msra.mxu0 0.0
    %4702 = vmatprep.subr.mxu0 0.0
    %4703 = vmatpush1.msra.mxu0 0.0
    %4704 = vmatprep.subr.mxu0 0.0
    %4705 = vmatpush1.msra.mxu0 0.0
    %4706 = vmatprep.subr.mxu0 0.0
    %4707 = vmatpush1.msra.mxu0 0.0
    %4708 = vmatprep.subr.mxu0 0.0
    %4709 = vmatpush1.msra.mxu0 0.0
    %4710 = vmatprep.subr.mxu0 0.0
    %4711 = vmatpush1.msra.mxu0 0.0
    %4712 = vmatprep.subr.mxu0 0.0
    %4713 = vmatpush1.msra.mxu0 0.0
    %4714 = vmatprep.subr.mxu0 0.0
    %4715 = vmatpush1.msra.mxu0 0.0
    %4716 = vmatprep.subr.mxu0 0.0
    %4717 = vmatpush1.msra.mxu0 0.0
    %4718 = vmatprep.subr.mxu0 0.0
    %4719 = vmatpush1.msra.mxu0 0.0
    %4720 = vmatprep.subr.mxu0 0.0
    %4721 = vmatpush1.msra.mxu0 0.0
    %4722 = vmatprep.subr.mxu0 0.0
    %4723 = vmatpush1.msra.mxu0 0.0
    %4724 = vmatprep.subr.mxu0 0.0
    %4725 = vmatpush1.msra.mxu0 0.0
    %4726 = vmatprep.subr.mxu0 0.0
    %4727 = vmatpush1.msra.mxu0 0.0
    %4728 = vmatprep.subr.mxu0 0.0
    %4729 = vmatpush1.msra.mxu0 0.0
    %4730 = vmatprep.subr.mxu0 0.0
    %4731 = vmatpush1.msra.mxu0 0.0
    %4732 = vmatprep.subr.mxu0 0.0
    %4733 = vmatpush1.msra.mxu0 0.0
    %4734 = vmatprep.subr.mxu0 0.0
    %4735 = vmatpush1.msra.mxu0 0.0
    %4736 = vmatprep.subr.mxu0 0.0
    %4737 = vmatpush1.msra.mxu0 0.0
    %4738 = vmatprep.subr.mxu0 0.0
    %4739 = vmatpush1.msra.mxu0 0.0
    %4740 = vmatprep.subr.mxu0 0.0
    %4741 = vmatpush1.msra.mxu0 0.0
    %4742 = vmatprep.subr.mxu0 0.0
    %4743 = vmatpush1.msra.mxu0 0.0
    %4744 = vmatprep.subr.mxu0 0.0
    %4745 = vmatpush1.msra.mxu0 0.0
    %4746 = vmatprep.mubr.f32.mxu0 0.0
    %v4747 = vand.u32 %v3855, 4294901760
    %4748 = vmatmul.mubr.f32.gmra.mrb[0].mxu0 %v4747
    %v4749 = vpop.f32.mrb[0].mxu0
    %v4750 = vadd.f32 %v4553, %v4749
    %v4751 = vpop.f32.mrb[0].mxu0
    %4752 = vmatprep.mubr.f32.mxu0 0.0
    %v4753 = vand.u32 %v3858, 4294901760
    %4754 = vmatmul.mubr.f32.gmra.mrb[0].mxu0 %v4753
    %v4755 = vpop.f32.mrb[0].mxu0
    %v4756 = vadd.f32 %v4561, %v4755
    %v4757 = vpop.f32.mrb[0].mxu0
    %4758 = vmatprep.mubr.f32.mxu0 0.0
    %v4759 = vand.u32 %v3861, 4294901760
    %4760 = vmatmul.mubr.f32.gmra.mrb[0].mxu0 %v4759
    %v4761 = vpop.f32.mrb[0].mxu0
    %v4762 = vadd.f32 %v4569, %v4761
    %v4763 = vpop.f32.mrb[0].mxu0
    %4764 = vmatprep.mubr.f32.mxu0 0.0
    %v4765 = vand.u32 %v3864, 4294901760
    %4766 = vmatmul.mubr.f32.gmra.mrb[0].mxu0 %v4765
    %v4767 = vpop.f32.mrb[0].mxu0
    %v4768 = vadd.f32 %v4577, %v4767
    %v4769 = vpop.f32.mrb[0].mxu0
    %4770 = vmatprep.mubr.f32.mxu0 0.0
    %v4771 = vand.u32 %v3867, 4294901760
    %4772 = vmatmul.mubr.f32.gmra.mrb[0].mxu0 %v4771
    %v4773 = vpop.f32.mrb[0].mxu0
    %v4774 = vadd.f32 %v4585, %v4773
    %v4775 = vpop.f32.mrb[0].mxu0
    %4776 = vmatprep.mubr.f32.mxu0 0.0
    %v4777 = vand.u32 %v3870, 4294901760
    %4778 = vmatmul.mubr.f32.gmra.mrb[0].mxu0 %v4777
    %v4779 = vpop.f32.mrb[0].mxu0
    %v4780 = vadd.f32 %v4593, %v4779
    %v4781 = vpop.f32.mrb[0].mxu0
    %4782 = vmatprep.mubr.f32.mxu0 0.0
    %v4783 = vand.u32 %v3873, 4294901760
    %4784 = vmatmul.mubr.f32.gmra.mrb[0].mxu0 %v4783
    %v4785 = vpop.f32.mrb[0].mxu0
    %v4786 = vadd.f32 %v4601, %v4785
    %v4787 = vpop.f32.mrb[0].mxu0
    %4788 = vmatprep.mubr.f32.mxu0 0.0
    %v4789 = vand.u32 %v3876, 4294901760
    %4790 = vmatmul.mubr.f32.gmra.mrb[0].mxu0 %v4789
    %v4791 = vpop.f32.mrb[0].mxu0
    %v4792 = vadd.f32 %v4609, %v4791
    %v4793 = vpop.f32.mrb[0].mxu0
    %4794 = vmatprep.mubr.f32.mxu0 0.0
    %v4795 = vand.u32 %v3879, 4294901760
    %4796 = vmatmul.mubr.f32.gmra.mrb[0].mxu0 %v4795
    %v4797 = vpop.f32.mrb[0].mxu0
    %v4798 = vadd.f32 %v4617, %v4797
    %v4799 = vpop.f32.mrb[0].mxu0
    %4800 = vmatprep.mubr.f32.mxu0 0.0
    %v4801 = vand.u32 %v3882, 4294901760
    %4802 = vmatmul.mubr.f32.gmra.mrb[0].mxu0 %v4801
    %v4803 = vpop.f32.mrb[0].mxu0
    %v4804 = vadd.f32 %v4625, %v4803
    %v4805 = vpop.f32.mrb[0].mxu0
    %4806 = vmatprep.mubr.f32.mxu0 0.0
    %v4807 = vand.u32 %v3885, 4294901760
    %4808 = vmatmul.mubr.f32.gmra.mrb[0].mxu0 %v4807
    %v4809 = vpop.f32.mrb[0].mxu0
    %v4810 = vadd.f32 %v4633, %v4809
    %v4811 = vpop.f32.mrb[0].mxu0
    %4812 = vmatprep.mubr.f32.mxu0 0.0
    %v4813 = vand.u32 %v3888, 4294901760
    %4814 = vmatmul.mubr.f32.gmra.mrb[0].mxu0 %v4813
    %v4815 = vpop.f32.mrb[0].mxu0
    %v4816 = vadd.f32 %v4641, %v4815
    %v4817 = vpop.f32.mrb[0].mxu0
    %4818 = vmatprep.mubr.f32.mxu0 0.0
    %v4819 = vand.u32 %v3891, 4294901760
    %4820 = vmatmul.mubr.f32.gmra.mrb[0].mxu0 %v4819
    %v4821 = vpop.f32.mrb[0].mxu0
    %v4822 = vadd.f32 %v4649, %v4821
    %v4823 = vpop.f32.mrb[0].mxu0
    %4824 = vmatprep.mubr.f32.mxu0 0.0
    %v4825 = vand.u32 %v3894, 4294901760
    %4826 = vmatmul.mubr.f32.gmra.mrb[0].mxu0 %v4825
    %v4827 = vpop.f32.mrb[0].mxu0
    %v4828 = vadd.f32 %v4657, %v4827
    %v4829 = vpop.f32.mrb[0].mxu0
    %4830 = vmatprep.mubr.f32.mxu0 0.0
    %v4831 = vand.u32 %v3897, 4294901760
    %4832 = vmatmul.mubr.f32.gmra.mrb[0].mxu0 %v4831
    %v4833 = vpop.f32.mrb[0].mxu0
    %v4834 = vadd.f32 %v4665, %v4833
    %v4835 = vpop.f32.mrb[0].mxu0
    %4836 = vmatprep.mubr.f32.mxu0 0.0
    %v4837 = vand.u32 %v3900, 4294901760
    %4838 = vmatmul.mubr.f32.gmra.mrb[0].mxu0 %v4837
    %v4839 = vpop.f32.mrb[0].mxu0
    %v4840 = vadd.f32 %v4673, %v4839
    %v4841 = vpop.f32.mrb[0].mxu0
    %4842 = vdwg.mxu0
    %4843 = vmatprep.subr.mxu0 0.0
    %v4844 = vand.u32 %v72, 4294901760
    %4845 = vmatpush1.msra.mxu0 %v4844
    %4846 = vmatprep.subr.mxu0 0.0
    %v4847 = vand.u32 %v73, 4294901760
    %4848 = vmatpush1.msra.mxu0 %v4847
    %4849 = vmatprep.subr.mxu0 0.0
    %4850 = vmatpush1.msra.mxu0 0.0
    %4851 = vmatprep.subr.mxu0 0.0
    %4852 = vmatpush1.msra.mxu0 0.0
    %4853 = vmatprep.subr.mxu0 0.0
    %4854 = vmatpush1.msra.mxu0 0.0
    %4855 = vmatprep.subr.mxu0 0.0
    %4856 = vmatpush1.msra.mxu0 0.0
    %4857 = vmatprep.subr.mxu0 0.0
    %4858 = vmatpush1.msra.mxu0 0.0
    %4859 = vmatprep.subr.mxu0 0.0
    %4860 = vmatpush1.msra.mxu0 0.0
    %4861 = vmatprep.subr.mxu0 0.0
    %4862 = vmatpush1.msra.mxu0 0.0
    %4863 = vmatprep.subr.mxu0 0.0
    %4864 = vmatpush1.msra.mxu0 0.0
    %4865 = vmatprep.subr.mxu0 0.0
    %4866 = vmatpush1.msra.mxu0 0.0
    %4867 = vmatprep.subr.mxu0 0.0
    %4868 = vmatpush1.msra.mxu0 0.0
    %4869 = vmatprep.subr.mxu0 0.0
    %4870 = vmatpush1.msra.mxu0 0.0
    %4871 = vmatprep.subr.mxu0 0.0
    %4872 = vmatpush1.msra.mxu0 0.0
    %4873 = vmatprep.subr.mxu0 0.0
    %4874 = vmatpush1.msra.mxu0 0.0
    %4875 = vmatprep.subr.mxu0 0.0
    %4876 = vmatpush1.msra.mxu0 0.0
    %4877 = vmatprep.subr.mxu0 0.0
    %4878 = vmatpush1.msra.mxu0 0.0
    %4879 = vmatprep.subr.mxu0 0.0
    %4880 = vmatpush1.msra.mxu0 0.0
    %4881 = vmatprep.subr.mxu0 0.0
    %4882 = vmatpush1.msra.mxu0 0.0
    %4883 = vmatprep.subr.mxu0 0.0
    %4884 = vmatpush1.msra.mxu0 0.0
    %4885 = vmatprep.subr.mxu0 0.0
    %4886 = vmatpush1.msra.mxu0 0.0
    %4887 = vmatprep.subr.mxu0 0.0
    %4888 = vmatpush1.msra.mxu0 0.0
    %4889 = vmatprep.subr.mxu0 0.0
    %4890 = vmatpush1.msra.mxu0 0.0
    %4891 = vmatprep.subr.mxu0 0.0
    %4892 = vmatpush1.msra.mxu0 0.0
    %4893 = vmatprep.subr.mxu0 0.0
    %4894 = vmatpush1.msra.mxu0 0.0
    %4895 = vmatprep.subr.mxu0 0.0
    %4896 = vmatpush1.msra.mxu0 0.0
    %4897 = vmatprep.subr.mxu0 0.0
    %4898 = vmatpush1.msra.mxu0 0.0
    %4899 = vmatprep.subr.mxu0 0.0
    %4900 = vmatpush1.msra.mxu0 0.0
    %4901 = vmatprep.subr.mxu0 0.0
    %4902 = vmatpush1.msra.mxu0 0.0
    %4903 = vmatprep.subr.mxu0 0.0
    %4904 = vmatpush1.msra.mxu0 0.0
    %4905 = vmatprep.subr.mxu0 0.0
    %4906 = vmatpush1.msra.mxu0 0.0
    %4907 = vmatprep.subr.mxu0 0.0
    %4908 = vmatpush1.msra.mxu0 0.0
    %4909 = vmatprep.mubr.f32.mxu0 0.0
    %v4910 = vand.u32 %v3855, 4294901760
    %4911 = vmatmul.mubr.f32.gmra.mrb[0].mxu0 %v4910
    %v4912 = vpop.f32.mrb[0].mxu0
    %v4913 = vadd.f32 %v4750, %v4912
    %v4914 = vpop.f32.mrb[0].mxu0
    %4915 = vmatprep.mubr.f32.mxu0 0.0
    %v4916 = vand.u32 %v3858, 4294901760
    %4917 = vmatmul.mubr.f32.gmra.mrb[0].mxu0 %v4916
    %v4918 = vpop.f32.mrb[0].mxu0
    %v4919 = vadd.f32 %v4756, %v4918
    %v4920 = vpop.f32.mrb[0].mxu0
    %4921 = vmatprep.mubr.f32.mxu0 0.0
    %v4922 = vand.u32 %v3861, 4294901760
    %4923 = vmatmul.mubr.f32.gmra.mrb[0].mxu0 %v4922
    %v4924 = vpop.f32.mrb[0].mxu0
    %v4925 = vadd.f32 %v4762, %v4924
    %v4926 = vpop.f32.mrb[0].mxu0
    %4927 = vmatprep.mubr.f32.mxu0 0.0
    %v4928 = vand.u32 %v3864, 4294901760
    %4929 = vmatmul.mubr.f32.gmra.mrb[0].mxu0 %v4928
    %v4930 = vpop.f32.mrb[0].mxu0
    %v4931 = vadd.f32 %v4768, %v4930
    %v4932 = vpop.f32.mrb[0].mxu0
    %4933 = vmatprep.mubr.f32.mxu0 0.0
    %v4934 = vand.u32 %v3867, 4294901760
    %4935 = vmatmul.mubr.f32.gmra.mrb[0].mxu0 %v4934
    %v4936 = vpop.f32.mrb[0].mxu0
    %v4937 = vadd.f32 %v4774, %v4936
    %v4938 = vpop.f32.mrb[0].mxu0
    %4939 = vmatprep.mubr.f32.mxu0 0.0
    %v4940 = vand.u32 %v3870, 4294901760
    %4941 = vmatmul.mubr.f32.gmra.mrb[0].mxu0 %v4940
    %v4942 = vpop.f32.mrb[0].mxu0
    %v4943 = vadd.f32 %v4780, %v4942
    %v4944 = vpop.f32.mrb[0].mxu0
    %4945 = vmatprep.mubr.f32.mxu0 0.0
    %v4946 = vand.u32 %v3873, 4294901760
    %4947 = vmatmul.mubr.f32.gmra.mrb[0].mxu0 %v4946
    %v4948 = vpop.f32.mrb[0].mxu0
    %v4949 = vadd.f32 %v4786, %v4948
    %v4950 = vpop.f32.mrb[0].mxu0
    %4951 = vmatprep.mubr.f32.mxu0 0.0
    %v4952 = vand.u32 %v3876, 4294901760
    %4953 = vmatmul.mubr.f32.gmra.mrb[0].mxu0 %v4952
    %v4954 = vpop.f32.mrb[0].mxu0
    %v4955 = vadd.f32 %v4792, %v4954
    %v4956 = vpop.f32.mrb[0].mxu0
    %4957 = vmatprep.mubr.f32.mxu0 0.0
    %v4958 = vand.u32 %v3879, 4294901760
    %4959 = vmatmul.mubr.f32.gmra.mrb[0].mxu0 %v4958
    %v4960 = vpop.f32.mrb[0].mxu0
    %v4961 = vadd.f32 %v4798, %v4960
    %v4962 = vpop.f32.mrb[0].mxu0
    %4963 = vmatprep.mubr.f32.mxu0 0.0
    %v4964 = vand.u32 %v3882, 4294901760
    %4965 = vmatmul.mubr.f32.gmra.mrb[0].mxu0 %v4964
    %v4966 = vpop.f32.mrb[0].mxu0
    %v4967 = vadd.f32 %v4804, %v4966
    %v4968 = vpop.f32.mrb[0].mxu0
    %4969 = vmatprep.mubr.f32.mxu0 0.0
    %v4970 = vand.u32 %v3885, 4294901760
    %4971 = vmatmul.mubr.f32.gmra.mrb[0].mxu0 %v4970
    %v4972 = vpop.f32.mrb[0].mxu0
    %v4973 = vadd.f32 %v4810, %v4972
    %v4974 = vpop.f32.mrb[0].mxu0
    %4975 = vmatprep.mubr.f32.mxu0 0.0
    %v4976 = vand.u32 %v3888, 4294901760
    %4977 = vmatmul.mubr.f32.gmra.mrb[0].mxu0 %v4976
    %v4978 = vpop.f32.mrb[0].mxu0
    %v4979 = vadd.f32 %v4816, %v4978
    %v4980 = vpop.f32.mrb[0].mxu0
    %4981 = vmatprep.mubr.f32.mxu0 0.0
    %v4982 = vand.u32 %v3891, 4294901760
    %4983 = vmatmul.mubr.f32.gmra.mrb[0].mxu0 %v4982
    %v4984 = vpop.f32.mrb[0].mxu0
    %v4985 = vadd.f32 %v4822, %v4984
    %v4986 = vpop.f32.mrb[0].mxu0
    %4987 = vmatprep.mubr.f32.mxu0 0.0
    %v4988 = vand.u32 %v3894, 4294901760
    %4989 = vmatmul.mubr.f32.gmra.mrb[0].mxu0 %v4988
    %v4990 = vpop.f32.mrb[0].mxu0
    %v4991 = vadd.f32 %v4828, %v4990
    %v4992 = vpop.f32.mrb[0].mxu0
    %4993 = vmatprep.mubr.f32.mxu0 0.0
    %v4994 = vand.u32 %v3897, 4294901760
    %4995 = vmatmul.mubr.f32.gmra.mrb[0].mxu0 %v4994
    %v4996 = vpop.f32.mrb[0].mxu0
    %v4997 = vadd.f32 %v4834, %v4996
    %v4998 = vpop.f32.mrb[0].mxu0
    %4999 = vmatprep.mubr.f32.mxu0 0.0
    %v5000 = vand.u32 %v3900, 4294901760
    %5001 = vmatmul.mubr.f32.gmra.mrb[0].mxu0 %v5000
    %v5002 = vpop.f32.mrb[0].mxu0
    %v5003 = vadd.f32 %v4840, %v5002
    %v5004 = vpop.f32.mrb[0].mxu0
    %5005 = vdwg.mxu0
    %v5006 = vadd.f32 %v3831, %v4913
    %v5007 = vadd.f32 %v3832, %v4919
    %v5008 = vadd.f32 %v3833, %v4925
    %v5009 = vadd.f32 %v3834, %v4931
    %v5010 = vadd.f32 %v3835, %v4937
    %v5011 = vadd.f32 %v3836, %v4943
    %v5012 = vadd.f32 %v3837, %v4949
    %v5013 = vadd.f32 %v3838, %v4955
    %v5014 = vadd.f32 %v3839, %v4961
    %v5015 = vadd.f32 %v3840, %v4967
    %v5016 = vadd.f32 %v3841, %v4973
    %v5017 = vadd.f32 %v3842, %v4979
    %v5018 = vadd.f32 %v3843, %v4985
    %v5019 = vadd.f32 %v3844, %v4991
    %v5020 = vadd.f32 %v3845, %v4997
    %v5021 = vadd.f32 %v3846, %v5003
    %v5022 = vmul.f32 %v5006, 0.5
    %v5023 = vmul.f32 %v5007, 0.5
    %v5024 = vmul.f32 %v5008, 0.5
    %v5025 = vmul.f32 %v5009, 0.5
    %v5026 = vmul.f32 %v5010, 0.5
    %v5027 = vmul.f32 %v5011, 0.5
    %v5028 = vmul.f32 %v5012, 0.5
    %v5029 = vmul.f32 %v5013, 0.5
    %v5030 = vmul.f32 %v5014, 0.5
    %v5031 = vmul.f32 %v5015, 0.5
    %v5032 = vmul.f32 %v5016, 0.5
    %v5033 = vmul.f32 %v5017, 0.5
    %v5034 = vmul.f32 %v5018, 0.5
    %v5035 = vmul.f32 %v5019, 0.5
    %v5036 = vmul.f32 %v5020, 0.5
    %v5037 = vmul.f32 %v5021, 0.5
    %v5038 = vtanh.pop %v5022
    %v5039 = vtanh.pop %v5023
    %v5040 = vtanh.pop %v5024
    %v5041 = vtanh.pop %v5025
    %v5042 = vtanh.pop %v5026
    %v5043 = vtanh.pop %v5027
    %v5044 = vtanh.pop %v5028
    %v5045 = vtanh.pop %v5029
    %v5046 = vtanh.pop %v5030
    %v5047 = vtanh.pop %v5031
    %v5048 = vtanh.pop %v5032
    %v5049 = vtanh.pop %v5033
    %v5050 = vtanh.pop %v5034
    %v5051 = vtanh.pop %v5035
    %v5052 = vtanh.pop %v5036
    %v5053 = vtanh.pop %v5037
    %v5054 = vmul.f32 %v5038, 0.5
    %v5055 = vmul.f32 %v5039, 0.5
    %v5056 = vmul.f32 %v5040, 0.5
    %v5057 = vmul.f32 %v5041, 0.5
    %v5058 = vmul.f32 %v5042, 0.5
    %v5059 = vmul.f32 %v5043, 0.5
    %v5060 = vmul.f32 %v5044, 0.5
    %v5061 = vmul.f32 %v5045, 0.5
    %v5062 = vmul.f32 %v5046, 0.5
    %v5063 = vmul.f32 %v5047, 0.5
    %v5064 = vmul.f32 %v5048, 0.5
    %v5065 = vmul.f32 %v5049, 0.5
    %v5066 = vmul.f32 %v5050, 0.5
    %v5067 = vmul.f32 %v5051, 0.5
    %v5068 = vmul.f32 %v5052, 0.5
    %v5069 = vmul.f32 %v5053, 0.5
    %v5070 = vadd.f32 %v5054, 0.5
    %v5071 = vadd.f32 %v5055, 0.5
    %v5072 = vadd.f32 %v5056, 0.5
    %v5073 = vadd.f32 %v5057, 0.5
    %v5074 = vadd.f32 %v5058, 0.5
    %v5075 = vadd.f32 %v5059, 0.5
    %v5076 = vadd.f32 %v5060, 0.5
    %v5077 = vadd.f32 %v5061, 0.5
    %v5078 = vadd.f32 %v5062, 0.5
    %v5079 = vadd.f32 %v5063, 0.5
    %v5080 = vadd.f32 %v5064, 0.5
    %v5081 = vadd.f32 %v5065, 0.5
    %v5082 = vadd.f32 %v5066, 0.5
    %v5083 = vadd.f32 %v5067, 0.5
    %v5084 = vadd.f32 %v5068, 0.5
    %v5085 = vadd.f32 %v5069, 0.5
    %5102 = vrot.lane.b32.xlu0 %v4913, 96
    %v5103 = vpop.permute.xlu0 %5102
    %5104 = vrot.lane.b32.xlu0 %v4919, 96
    %v5105 = vpop.permute.xlu0 %5104
    %5106 = vrot.lane.b32.xlu0 %v4925, 96
    %v5107 = vpop.permute.xlu0 %5106
    %5108 = vrot.lane.b32.xlu0 %v4931, 96
    %v5109 = vpop.permute.xlu0 %5108
    %5110 = vrot.lane.b32.xlu0 %v4937, 96
    %v5111 = vpop.permute.xlu0 %5110
    %5112 = vrot.lane.b32.xlu0 %v4943, 96
    %v5113 = vpop.permute.xlu0 %5112
    %5114 = vrot.lane.b32.xlu0 %v4949, 96
    %v5115 = vpop.permute.xlu0 %5114
    %5116 = vrot.lane.b32.xlu0 %v4955, 96
    %v5117 = vpop.permute.xlu0 %5116
    %5118 = vrot.lane.b32.xlu0 %v4961, 96
    %v5119 = vpop.permute.xlu0 %5118
    %5120 = vrot.lane.b32.xlu0 %v4967, 96
    %v5121 = vpop.permute.xlu0 %5120
    %5122 = vrot.lane.b32.xlu0 %v4973, 96
    %v5123 = vpop.permute.xlu0 %5122
    %5124 = vrot.lane.b32.xlu0 %v4979, 96
    %v5125 = vpop.permute.xlu0 %5124
    %5126 = vrot.lane.b32.xlu0 %v4985, 96
    %v5127 = vpop.permute.xlu0 %5126
    %5128 = vrot.lane.b32.xlu0 %v4991, 96
    %v5129 = vpop.permute.xlu0 %5128
    %5130 = vrot.lane.b32.xlu0 %v4997, 96
    %v5131 = vpop.permute.xlu0 %5130
    %5132 = vrot.lane.b32.xlu0 %v5003, 96
    %v5133 = vpop.permute.xlu0 %5132
    %v5150 = vmul.f32 %v5070, %v5103
    %v5151 = vmul.f32 %v5071, %v5105
    %v5152 = vmul.f32 %v5072, %v5107
    %v5153 = vmul.f32 %v5073, %v5109
    %v5154 = vmul.f32 %v5074, %v5111
    %v5155 = vmul.f32 %v5075, %v5113
    %v5156 = vmul.f32 %v5076, %v5115
    %v5157 = vmul.f32 %v5077, %v5117
    %v5158 = vmul.f32 %v5078, %v5119
    %v5159 = vmul.f32 %v5079, %v5121
    %v5160 = vmul.f32 %v5080, %v5123
    %v5161 = vmul.f32 %v5081, %v5125
    %v5162 = vmul.f32 %v5082, %v5127
    %v5163 = vmul.f32 %v5083, %v5129
    %v5164 = vmul.f32 %v5084, %v5131
    %v5165 = vmul.f32 %v5085, %v5133
    %5182 = vrot.lane.b32.xlu0 %v5150, 32
    %v5183 = vpop.permute.xlu0 %5182
    %5184 = vrot.lane.b32.xlu0 %v5151, 32
    %v5185 = vpop.permute.xlu0 %5184
    %5186 = vrot.lane.b32.xlu0 %v5152, 32
    %v5187 = vpop.permute.xlu0 %5186
    %5188 = vrot.lane.b32.xlu0 %v5153, 32
    %v5189 = vpop.permute.xlu0 %5188
    %5190 = vrot.lane.b32.xlu0 %v5154, 32
    %v5191 = vpop.permute.xlu0 %5190
    %5192 = vrot.lane.b32.xlu0 %v5155, 32
    %v5193 = vpop.permute.xlu0 %5192
    %5194 = vrot.lane.b32.xlu0 %v5156, 32
    %v5195 = vpop.permute.xlu0 %5194
    %5196 = vrot.lane.b32.xlu0 %v5157, 32
    %v5197 = vpop.permute.xlu0 %5196
    %5198 = vrot.lane.b32.xlu0 %v5158, 32
    %v5199 = vpop.permute.xlu0 %5198
    %5200 = vrot.lane.b32.xlu0 %v5159, 32
    %v5201 = vpop.permute.xlu0 %5200
    %5202 = vrot.lane.b32.xlu0 %v5160, 32
    %v5203 = vpop.permute.xlu0 %5202
    %5204 = vrot.lane.b32.xlu0 %v5161, 32
    %v5205 = vpop.permute.xlu0 %5204
    %5206 = vrot.lane.b32.xlu0 %v5162, 32
    %v5207 = vpop.permute.xlu0 %5206
    %5208 = vrot.lane.b32.xlu0 %v5163, 32
    %v5209 = vpop.permute.xlu0 %5208
    %5210 = vrot.lane.b32.xlu0 %v5164, 32
    %v5211 = vpop.permute.xlu0 %5210
    %5212 = vrot.lane.b32.xlu0 %v5165, 32
    %v5213 = vpop.permute.xlu0 %5212
    %v5230 = vadd.f32 %v3831, %v5183
    %v5231 = vadd.f32 %v3832, %v5185
    %v5232 = vadd.f32 %v3833, %v5187
    %v5233 = vadd.f32 %v3834, %v5189
    %v5234 = vadd.f32 %v3835, %v5191
    %v5235 = vadd.f32 %v3836, %v5193
    %v5236 = vadd.f32 %v3837, %v5195
    %v5237 = vadd.f32 %v3838, %v5197
    %v5238 = vadd.f32 %v3839, %v5199
    %v5239 = vadd.f32 %v3840, %v5201
    %v5240 = vadd.f32 %v3841, %v5203
    %v5241 = vadd.f32 %v3842, %v5205
    %v5242 = vadd.f32 %v3843, %v5207
    %v5243 = vadd.f32 %v3844, %v5209
    %v5244 = vadd.f32 %v3845, %v5211
    %v5245 = vadd.f32 %v3846, %v5213
    %v5246 = vtanh.pop %v5230
    %v5247 = vtanh.pop %v5231
    %v5248 = vtanh.pop %v5232
    %v5249 = vtanh.pop %v5233
    %v5250 = vtanh.pop %v5234
    %v5251 = vtanh.pop %v5235
    %v5252 = vtanh.pop %v5236
    %v5253 = vtanh.pop %v5237
    %v5254 = vtanh.pop %v5238
    %v5255 = vtanh.pop %v5239
    %v5256 = vtanh.pop %v5240
    %v5257 = vtanh.pop %v5241
    %v5258 = vtanh.pop %v5242
    %v5259 = vtanh.pop %v5243
    %v5260 = vtanh.pop %v5244
    %v5261 = vtanh.pop %v5245
    %v5262 = vsub.f32 1.0, %v5070
    %v5263 = vsub.f32 1.0, %v5071
    %v5264 = vsub.f32 1.0, %v5072
    %v5265 = vsub.f32 1.0, %v5073
    %v5266 = vsub.f32 1.0, %v5074
    %v5267 = vsub.f32 1.0, %v5075
    %v5268 = vsub.f32 1.0, %v5076
    %v5269 = vsub.f32 1.0, %v5077
    %v5270 = vsub.f32 1.0, %v5078
    %v5271 = vsub.f32 1.0, %v5079
    %v5272 = vsub.f32 1.0, %v5080
    %v5273 = vsub.f32 1.0, %v5081
    %v5274 = vsub.f32 1.0, %v5082
    %v5275 = vsub.f32 1.0, %v5083
    %v5276 = vsub.f32 1.0, %v5084
    %v5277 = vsub.f32 1.0, %v5085
    %5294 = vrot.lane.b32.xlu0 %v5246, 112
    %v5295 = vpop.permute.xlu0 %5294
    %5296 = vrot.lane.b32.xlu0 %v5247, 112
    %v5297 = vpop.permute.xlu0 %5296
    %5298 = vrot.lane.b32.xlu0 %v5248, 112
    %v5299 = vpop.permute.xlu0 %5298
    %5300 = vrot.lane.b32.xlu0 %v5249, 112
    %v5301 = vpop.permute.xlu0 %5300
    %5302 = vrot.lane.b32.xlu0 %v5250, 112
    %v5303 = vpop.permute.xlu0 %5302
    %5304 = vrot.lane.b32.xlu0 %v5251, 112
    %v5305 = vpop.permute.xlu0 %5304
    %5306 = vrot.lane.b32.xlu0 %v5252, 112
    %v5307 = vpop.permute.xlu0 %5306
    %5308 = vrot.lane.b32.xlu0 %v5253, 112
    %v5309 = vpop.permute.xlu0 %5308
    %5310 = vrot.lane.b32.xlu0 %v5254, 112
    %v5311 = vpop.permute.xlu0 %5310
    %5312 = vrot.lane.b32.xlu0 %v5255, 112
    %v5313 = vpop.permute.xlu0 %5312
    %5314 = vrot.lane.b32.xlu0 %v5256, 112
    %v5315 = vpop.permute.xlu0 %5314
    %5316 = vrot.lane.b32.xlu0 %v5257, 112
    %v5317 = vpop.permute.xlu0 %5316
    %5318 = vrot.lane.b32.xlu0 %v5258, 112
    %v5319 = vpop.permute.xlu0 %5318
    %5320 = vrot.lane.b32.xlu0 %v5259, 112
    %v5321 = vpop.permute.xlu0 %5320
    %5322 = vrot.lane.b32.xlu0 %v5260, 112
    %v5323 = vpop.permute.xlu0 %5322
    %5324 = vrot.lane.b32.xlu0 %v5261, 112
    %v5325 = vpop.permute.xlu0 %5324
    %v5342 = vmul.f32 %v5262, %v5295
    %v5343 = vmul.f32 %v5263, %v5297
    %v5344 = vmul.f32 %v5264, %v5299
    %v5345 = vmul.f32 %v5265, %v5301
    %v5346 = vmul.f32 %v5266, %v5303
    %v5347 = vmul.f32 %v5267, %v5305
    %v5348 = vmul.f32 %v5268, %v5307
    %v5349 = vmul.f32 %v5269, %v5309
    %v5350 = vmul.f32 %v5270, %v5311
    %v5351 = vmul.f32 %v5271, %v5313
    %v5352 = vmul.f32 %v5272, %v5315
    %v5353 = vmul.f32 %v5273, %v5317
    %v5354 = vmul.f32 %v5274, %v5319
    %v5355 = vmul.f32 %v5275, %v5321
    %v5356 = vmul.f32 %v5276, %v5323
    %v5357 = vmul.f32 %v5277, %v5325
    %5358 = vrot.lane.b32.xlu0 %v3813, 16
    %v5359 = vpop.permute.xlu0 %5358
    %5360 = vrot.lane.b32.xlu0 %v3814, 16
    %v5361 = vpop.permute.xlu0 %5360
    %5362 = vrot.lane.b32.xlu0 %v3815, 16
    %v5363 = vpop.permute.xlu0 %5362
    %5364 = vrot.lane.b32.xlu0 %v3816, 16
    %v5365 = vpop.permute.xlu0 %5364
    %5366 = vrot.lane.b32.xlu0 %v3817, 16
    %v5367 = vpop.permute.xlu0 %5366
    %5368 = vrot.lane.b32.xlu0 %v3818, 16
    %v5369 = vpop.permute.xlu0 %5368
    %5370 = vrot.lane.b32.xlu0 %v3819, 16
    %v5371 = vpop.permute.xlu0 %5370
    %5372 = vrot.lane.b32.xlu0 %v3820, 16
    %v5373 = vpop.permute.xlu0 %5372
    %5374 = vrot.lane.b32.xlu0 %v3821, 16
    %v5375 = vpop.permute.xlu0 %5374
    %5376 = vrot.lane.b32.xlu0 %v3822, 16
    %v5377 = vpop.permute.xlu0 %5376
    %5378 = vrot.lane.b32.xlu0 %v3823, 16
    %v5379 = vpop.permute.xlu0 %5378
    %5380 = vrot.lane.b32.xlu0 %v3824, 16
    %v5381 = vpop.permute.xlu0 %5380
    %5382 = vrot.lane.b32.xlu0 %v3825, 16
    %v5383 = vpop.permute.xlu0 %5382
    %5384 = vrot.lane.b32.xlu0 %v3826, 16
    %v5385 = vpop.permute.xlu0 %5384
    %5386 = vrot.lane.b32.xlu0 %v3827, 16
    %v5387 = vpop.permute.xlu0 %5386
    %5388 = vrot.lane.b32.xlu0 %v3828, 16
    %v5389 = vpop.permute.xlu0 %5388
    %v5406 = vmul.f32 %v5070, %v5359
    %v5407 = vmul.f32 %v5071, %v5361
    %v5408 = vmul.f32 %v5072, %v5363
    %v5409 = vmul.f32 %v5073, %v5365
    %v5410 = vmul.f32 %v5074, %v5367
    %v5411 = vmul.f32 %v5075, %v5369
    %v5412 = vmul.f32 %v5076, %v5371
    %v5413 = vmul.f32 %v5077, %v5373
    %v5414 = vmul.f32 %v5078, %v5375
    %v5415 = vmul.f32 %v5079, %v5377
    %v5416 = vmul.f32 %v5080, %v5379
    %v5417 = vmul.f32 %v5081, %v5381
    %v5418 = vmul.f32 %v5082, %v5383
    %v5419 = vmul.f32 %v5083, %v5385
    %v5420 = vmul.f32 %v5084, %v5387
    %v5421 = vmul.f32 %v5085, %v5389
    %v5422 = vadd.f32 %v5342, %v5406
    %v5423 = vadd.f32 %v5343, %v5407
    %v5424 = vadd.f32 %v5344, %v5408
    %v5425 = vadd.f32 %v5345, %v5409
    %v5426 = vadd.f32 %v5346, %v5410
    %v5427 = vadd.f32 %v5347, %v5411
    %v5428 = vadd.f32 %v5348, %v5412
    %v5429 = vadd.f32 %v5349, %v5413
    %v5430 = vadd.f32 %v5350, %v5414
    %v5431 = vadd.f32 %v5351, %v5415
    %v5432 = vadd.f32 %v5352, %v5416
    %v5433 = vadd.f32 %v5353, %v5417
    %v5434 = vadd.f32 %v5354, %v5418
    %v5435 = vadd.f32 %v5355, %v5419
    %v5436 = vadd.f32 %v5356, %v5420
    %v5437 = vadd.f32 %v5357, %v5421
    %s5438 = ssub.s32 %s37, 1
    %s5439 = ssub.s32 %s5438, %s3808
    %v5440 = vstv %s3808
    %v5441 = vstv %s5439
    %v5442 = vsel %vm40, %v5440, %v5441
    %vm5443 = vcmp.lt.s32.totalorder %v5442, %v75
    %vm5444 = vcmp.lt.s32.totalorder %v5442, %v76
    %vm5445 = vcmp.lt.s32.totalorder %v5442, %v77
    %vm5446 = vcmp.lt.s32.totalorder %v5442, %v78
    %vm5447 = vcmp.lt.s32.totalorder %v5442, %v79
    %vm5448 = vcmp.lt.s32.totalorder %v5442, %v80
    %vm5449 = vcmp.lt.s32.totalorder %v5442, %v81
    %vm5450 = vcmp.lt.s32.totalorder %v5442, %v82
    %vm5451 = vcmp.lt.s32.totalorder %v5442, %v83
    %vm5452 = vcmp.lt.s32.totalorder %v5442, %v84
    %vm5453 = vcmp.lt.s32.totalorder %v5442, %v85
    %vm5454 = vcmp.lt.s32.totalorder %v5442, %v86
    %vm5455 = vcmp.lt.s32.totalorder %v5442, %v87
    %vm5456 = vcmp.lt.s32.totalorder %v5442, %v88
    %vm5457 = vcmp.lt.s32.totalorder %v5442, %v89
    %vm5458 = vcmp.lt.s32.totalorder %v5442, %v90
    %5475 = vrot.lane.b32.xlu0 %v5422, 112
    %v5476 = vpop.permute.xlu0 %5475
    %5477 = vrot.lane.b32.xlu0 %v5423, 112
    %v5478 = vpop.permute.xlu0 %5477
    %5479 = vrot.lane.b32.xlu0 %v5424, 112
    %v5480 = vpop.permute.xlu0 %5479
    %5481 = vrot.lane.b32.xlu0 %v5425, 112
    %v5482 = vpop.permute.xlu0 %5481
    %5483 = vrot.lane.b32.xlu0 %v5426, 112
    %v5484 = vpop.permute.xlu0 %5483
    %5485 = vrot.lane.b32.xlu0 %v5427, 112
    %v5486 = vpop.permute.xlu0 %5485
    %5487 = vrot.lane.b32.xlu0 %v5428, 112
    %v5488 = vpop.permute.xlu0 %5487
    %5489 = vrot.lane.b32.xlu0 %v5429, 112
    %v5490 = vpop.permute.xlu0 %5489
    %5491 = vrot.lane.b32.xlu0 %v5430, 112
    %v5492 = vpop.permute.xlu0 %5491
    %5493 = vrot.lane.b32.xlu0 %v5431, 112
    %v5494 = vpop.permute.xlu0 %5493
    %5495 = vrot.lane.b32.xlu0 %v5432, 112
    %v5496 = vpop.permute.xlu0 %5495
    %5497 = vrot.lane.b32.xlu0 %v5433, 112
    %v5498 = vpop.permute.xlu0 %5497
    %5499 = vrot.lane.b32.xlu0 %v5434, 112
    %v5500 = vpop.permute.xlu0 %5499
    %5501 = vrot.lane.b32.xlu0 %v5435, 112
    %v5502 = vpop.permute.xlu0 %5501
    %5503 = vrot.lane.b32.xlu0 %v5436, 112
    %v5504 = vpop.permute.xlu0 %5503
    %5505 = vrot.lane.b32.xlu0 %v5437, 112
    %v5506 = vpop.permute.xlu0 %5505
    %v5523 = vsel %vm5443, %v5476, %v3813
    %v5524 = vsel %vm5444, %v5478, %v3814
    %v5525 = vsel %vm5445, %v5480, %v3815
    %v5526 = vsel %vm5446, %v5482, %v3816
    %v5527 = vsel %vm5447, %v5484, %v3817
    %v5528 = vsel %vm5448, %v5486, %v3818
    %v5529 = vsel %vm5449, %v5488, %v3819
    %v5530 = vsel %vm5450, %v5490, %v3820
    %v5531 = vsel %vm5451, %v5492, %v3821
    %v5532 = vsel %vm5452, %v5494, %v3822
    %v5533 = vsel %vm5453, %v5496, %v3823
    %v5534 = vsel %vm5454, %v5498, %v3824
    %v5535 = vsel %vm5455, %v5500, %v3825
    %v5536 = vsel %vm5456, %v5502, %v3826
    %v5537 = vsel %vm5457, %v5504, %v3827
    %v5538 = vsel %vm5458, %v5506, %v3828
  $region61: #{tpu_custom_call.1} parent=0 // loop_footer
    %s3810 = sadd.s32 %s3808, 1
  $region62: #{tpu_custom_call.1} parent=0 // loop_footer_branch
    %3807 = sbr.rel target = $region58
  $region63: #{tpu_custom_call.1} parent=0 // loop_exit
    _
  %vm5539 = vcmask 130048
  %5540 = vst.msk [vmem:[%s11] sm:$0xff] %vm5539, %v3813
  %5541 = vst.msk [vmem:[%s11 + $0x8] sm:$0xff] %vm5539, %v3814
  %5542 = vst.msk [vmem:[%s11 + $0x10] sm:$0xff] %vm5539, %v3815
  %5543 = vst.msk [vmem:[%s11 + $0x18] sm:$0xff] %vm5539, %v3816
  %5544 = vst.msk [vmem:[%s11 + $0x20] sm:$0xff] %vm5539, %v3817
  %5545 = vst.msk [vmem:[%s11 + $0x28] sm:$0xff] %vm5539, %v3818
  %5546 = vst.msk [vmem:[%s11 + $0x30] sm:$0xff] %vm5539, %v3819
  %5547 = vst.msk [vmem:[%s11 + $0x38] sm:$0xff] %vm5539, %v3820
  %5548 = vst.msk [vmem:[%s11 + $0x40] sm:$0xff] %vm5539, %v3821
  %5549 = vst.msk [vmem:[%s11 + $0x48] sm:$0xff] %vm5539, %v3822
  %5550 = vst.msk [vmem:[%s11 + $0x50] sm:$0xff] %vm5539, %v3823
  %5551 = vst.msk [vmem:[%s11 + $0x58] sm:$0xff] %vm5539, %v3824
  %5552 = vst.msk [vmem:[%s11 + $0x60] sm:$0xff] %vm5539, %v3825
  %5553 = vst.msk [vmem:[%s11 + $0x68] sm:$0xff] %vm5539, %v3826
  %5554 = vst.msk [vmem:[%s11 + $0x70] sm:$0xff] %vm5539, %v3827
  %5555 = vst.msk [vmem:[%s11 + $0x78] sm:$0xff] %vm5539, %v3828
  // Predicated region
  $region64: #{tpu_custom_call.1} parent=0 // pred_check
    _
  $region65: #{tpu_custom_call.1} parent=0 // pred_check_branch
    %5557 = sbr.rel (0) target = $region67
  $region66: #{tpu_custom_call.1} parent=0 // pred_region
    _
  $region67: #{tpu_custom_call.1} parent=0 // pred_fallthru
    _
  // Predicated region
  $region68: #{tpu_custom_call.1} parent=0 // pred_check
    _
  $region69: #{tpu_custom_call.1} parent=0 // pred_check_branch
    %5559 = sbr.rel (0) target = $region71
  $region70: #{tpu_custom_call.1} parent=0 // pred_region
    _
  $region71: #{tpu_custom_call.1} parent=0 // pred_fallthru
    _

</llo_original>
